<compile_context>
chip_gen: v5e
topology: v5e:2x2
jax: 0.10.0
libtpu: 0.0.40
codegen_flags: <defaults>
</compile_context>

<pallas_src>
import functools
import math

import jax
import jax.numpy as jnp
from jax import lax
from jax.experimental import pallas as pl
from jax.experimental.pallas import tpu as pltpu


def _phase_mask_kernel(wp_ref, xr_ref, xi_ref, or_ref, oi_ref, *,
                       pad, phase_dim, tile_rows, whole_dim):
    """One row tile: build the (tile_rows, wd) complex mask once, then apply it
    to all B batch elements of the tile (batch folded into the block).

    wp_ref : (tile_rows, wd)    slice of the zero-padded phase parameter
    xr/xi  : (B, tile_rows, wd) real / imag planes of the input field
    """
    row0 = pl.program_id(0) * tile_rows

    wp = wp_ref[...]
    # sigmoid(w) * 1.999*pi via the tanh form -> one EUP op (review item 4).
    # Transcendentals run once per spatial tile (not per batch element); the
    # padded border of the tile is also evaluated but masked out below — a
    # negligible one-time cost now that the mask is off the batch loop.
    phase = (0.5 * 1.999 * math.pi) * (1.0 + jnp.tanh(0.5 * wp))

    # Zero border of F.pad realized with an iota mask + where on the full tile,
    # so every store stays a full, unmasked lane-dense vst.
    rows = row0 + lax.broadcasted_iota(jnp.int32, (tile_rows, whole_dim), 0)
    cols = lax.broadcasted_iota(jnp.int32, (tile_rows, whole_dim), 1)
    inside = ((rows >= pad) & (rows < pad + phase_dim)
              & (cols >= pad) & (cols < pad + phase_dim))

    mask_r = jnp.where(inside, jnp.cos(phase), 0.0)    # (tile_rows, wd)
    mask_i = jnp.where(inside, jnp.sin(phase), 0.0)

    xr = xr_ref[...]                                   # (B, tile_rows, wd)
    xi = xi_ref[...]
    # Complex multiply, mask broadcast over the batch dim: pure VALU work,
    # exactly one full-block store per output ref.
    or_ref[...] = xr * mask_r - xi * mask_i
    oi_ref[...] = xr * mask_i + xi * mask_r


def _pick_tile_rows(whole_dim, batch, vmem_budget_bytes=8 * 1024 * 1024):
    """Largest row tile whose double-buffered working set (1 param plane +
    2*B input + 2*B output f32 planes) stays within a few MiB — good
    DMA/compute overlap and safe on v7x's 64 MiB VMEM at large whole_dim."""
    tile_rows = whole_dim

    def footprint(tr):
        return 2 * (1 + 4 * batch) * tr * whole_dim * 4   # x2: double buffering

    while footprint(tile_rows) > vmem_budget_bytes and tile_rows % 16 == 0:
        tile_rows //= 2
    return tile_rows


def phase_mask_planar(x_real, x_imag, w_p, *, whole_dim, tile_rows=None):
    """Fast path: planar real/imag f32 planes in and out.

    Keeping the field planar across adjacent ops removes the complex
    split/recombine HBM passes entirely (review item 2).
    """
    B, H, W = x_real.shape
    assert x_imag.shape == x_real.shape
    assert H == whole_dim and W == whole_dim, (H, W, whole_dim)
    # Lane-dense layout: last dim must be a multiple of 128 for unmasked vst.
    # TODO(synk): for whole_dim not a multiple of 128 (e.g. 500), pad the last
    # dim up to the next 128 multiple here and slice the result back.
    assert whole_dim % 128 == 0, whole_dim
    phase_dim = w_p.shape[-1]
    # F.pad parity: (wd - pd)//2 on all four sides only matches when the
    # difference is even; assert instead of silently dropping a pixel.
    assert (whole_dim - phase_dim) % 2 == 0, (whole_dim, phase_dim)
    pad = (whole_dim - phase_dim) // 2

    if tile_rows is None:
        tile_rows = _pick_tile_rows(whole_dim, B)
    assert whole_dim % tile_rows == 0 and tile_rows % 8 == 0, tile_rows
    n_row_tiles = whole_dim // tile_rows

    # Tiny layout glue (64 KiB at wd=128, fuses under jit): zero-pad the small
    # (pd, pd) parameter to the full grid so the kernel mask construction stays
    # a single lane-dense where(); padded values are forced to 0+0j in-kernel.
    w_pad = jnp.pad(w_p.reshape(phase_dim, phase_dim).astype(jnp.float32),
                    ((pad, pad), (pad, pad)))

    kernel = functools.partial(_phase_mask_kernel, pad=pad, phase_dim=phase_dim,
                               tile_rows=tile_rows, whole_dim=whole_dim)

    field_spec = pl.BlockSpec((B, tile_rows, whole_dim), lambda i: (0, i, 0))
    # The parameter tile is 1/(4B) of the field traffic.  NOTE: if it were
    # constant across the grid (tile_rows == whole_dim), pipeline_mode =
    # pl.Buffered(1) would halve its VMEM footprint at zero perf cost.
    param_spec = pl.BlockSpec((tile_rows, whole_dim), lambda i: (i, 0))

    out_r, out_i = pl.pallas_call(
        kernel,
        out_shape=(
            jax.ShapeDtypeStruct((B, whole_dim, whole_dim), jnp.float32),
            jax.ShapeDtypeStruct((B, whole_dim, whole_dim), jnp.float32),
        ),
        grid=(n_row_tiles,),
        in_specs=[param_spec, field_spec, field_spec],
        out_specs=(field_spec, field_spec),
        compiler_params=pltpu.CompilerParams(
            dimension_semantics=("parallel",),       # row tiles are independent
            vmem_limit_bytes=32 * 1024 * 1024),
    )(w_pad, x_real, x_imag)
    return out_r, out_i


def phase_mask_forward(input_field, w_p, *, whole_dim):
    """Interface-parity adapter for complex64 callers.  The split/recombine
    here are extra full-field HBM passes; prefer phase_mask_planar and a
    planar field representation across the optical pipeline."""
    xr = jnp.real(input_field).astype(jnp.float32)
    xi = jnp.imag(input_field).astype(jnp.float32)
    out_r, out_i = phase_mask_planar(xr, xi, w_p, whole_dim=whole_dim)
    return lax.complex(out_r, out_i)


def phase_mask_reference(input_field, w_p, *, whole_dim):
    """Pure-JAX mirror of the PyTorch forward."""
    phase_dim = w_p.shape[-1]
    pad = (whole_dim - phase_dim) // 2
    mask_phase = jax.nn.sigmoid(w_p.astype(jnp.float32)) * 1.999 * math.pi
    mask = lax.complex(jnp.cos(mask_phase), jnp.sin(mask_phase))
    mask = jnp.pad(mask, ((0, 0), (pad, pad), (pad, pad)))   # zero complex border
    return input_field * mask                                # broadcast over batch


if __name__ == "__main__":
    B, whole_dim, phase_dim = 2, 128, 64

    key = jax.random.PRNGKey(0)
    k_w, k_r, k_i = jax.random.split(key, 3)
    # Parameter init mirrors torch.randn(1, phase_dim, phase_dim).
    w_p = jax.random.normal(k_w, (1, phase_dim, phase_dim), dtype=jnp.float32)
    field_r = jax.random.normal(k_r, (B, whole_dim, whole_dim), dtype=jnp.float32)
    field_i = jax.random.normal(k_i, (B, whole_dim, whole_dim), dtype=jnp.float32)

    fwd = jax.jit(functools.partial(phase_mask_planar, whole_dim=whole_dim))
    out_r, out_i = jax.block_until_ready(fwd(field_r, field_i, w_p))

    # Reference check (complex math lives outside the kernel's hot path).
    input_field = lax.complex(field_r, field_i)              # complex64
    ref = phase_mask_reference(input_field, w_p, whole_dim=whole_dim)
    out = lax.complex(out_r, out_i)

    assert out.shape == ref.shape, (out.shape, ref.shape)
    assert out.dtype == ref.dtype, (out.dtype, ref.dtype)
    assert jnp.allclose(out, ref, atol=2e-5, rtol=1e-5), float(
        jnp.max(jnp.abs(out - ref)))

    print("KERNEL_OK")
</pallas_src>

<mosaic_0001>
module attributes {stable_mosaic.version = 11 : i64} {
  func.func @_phase_mask_kernel(%arg0: i32, %arg1: memref<128x128xf32, #tpu.memory_space<vmem>>, %arg2: memref<2x128x128xf32, #tpu.memory_space<vmem>>, %arg3: memref<2x128x128xf32, #tpu.memory_space<vmem>>, %arg4: memref<2x128x128xf32, #tpu.memory_space<vmem>>, %arg5: memref<2x128x128xf32, #tpu.memory_space<vmem>>) attributes {dimension_semantics = [#tpu.dimension_semantics<parallel>], iteration_bounds = array<i64: 1>, scalar_prefetch = 0 : i64, scratch_operands = 0 : i64, tpu.core_type = #tpu.core_type<tc>, window_params = [{transform_indices = @transform_0, window_bounds = array<i64: 128, 128>}, {transform_indices = @transform_1, window_bounds = array<i64: 2, 128, 128>}, {transform_indices = @transform_2, window_bounds = array<i64: 2, 128, 128>}, {transform_indices = @transform_3, window_bounds = array<i64: 2, 128, 128>}, {transform_indices = @transform_4, window_bounds = array<i64: 2, 128, 128>}]} {
    %c128_i32 = arith.constant 128 : i32
    %0 = arith.muli %arg0, %c128_i32 : i32
    %c0 = arith.constant 0 : index
    %c0_0 = arith.constant 0 : index
    %1 = vector.load %arg1[%c0, %c0_0] : memref<128x128xf32, #tpu.memory_space<vmem>>, vector<128x128xf32>
    %cst = arith.constant 5.000000e-01 : f32
    %2 = vector.broadcast %cst : f32 to vector<128x128xf32>
    %3 = arith.mulf %2, %1 : vector<128x128xf32>
    %4 = math.tanh %3 : vector<128x128xf32>
    %cst_1 = arith.constant 1.000000e+00 : f32
    %5 = vector.broadcast %cst_1 : f32 to vector<128x128xf32>
    %6 = arith.addf %5, %4 : vector<128x128xf32>
    %cst_2 = arith.constant 3.1400218 : f32
    %7 = vector.broadcast %cst_2 : f32 to vector<128x128xf32>
    %8 = arith.mulf %7, %6 : vector<128x128xf32>
    %9 = tpu.iota {dimensions = array<i32: 0>} : vector<128x128xi32>
    %10 = vector.broadcast %0 : i32 to vector<128x128xi32>
    %11 = arith.addi %10, %9 : vector<128x128xi32>
    %12 = tpu.iota {dimensions = array<i32: 1>} : vector<128x128xi32>
    %c32_i32 = arith.constant 32 : i32
    %13 = vector.broadcast %c32_i32 : i32 to vector<128x128xi32>
    %14 = arith.cmpi sge, %11, %13 : vector<128x128xi32>
    %c96_i32 = arith.constant 96 : i32
    %15 = vector.broadcast %c96_i32 : i32 to vector<128x128xi32>
    %16 = arith.cmpi slt, %11, %15 : vector<128x128xi32>
    %17 = arith.andi %14, %16 : vector<128x128xi1>
    %c32_i32_3 = arith.constant 32 : i32
    %18 = vector.broadcast %c32_i32_3 : i32 to vector<128x128xi32>
    %19 = arith.cmpi sge, %12, %18 : vector<128x128xi32>
    %20 = arith.andi %17, %19 : vector<128x128xi1>
    %c96_i32_4 = arith.constant 96 : i32
    %21 = vector.broadcast %c96_i32_4 : i32 to vector<128x128xi32>
    %22 = arith.cmpi slt, %12, %21 : vector<128x128xi32>
    %23 = arith.andi %20, %22 : vector<128x128xi1>
    %24 = math.cos %8 : vector<128x128xf32>
    %cst_5 = arith.constant 0.000000e+00 : f32
    %25 = vector.broadcast %cst_5 : f32 to vector<128x128xf32>
    %26 = arith.select %23, %24, %25 : vector<128x128xi1>, vector<128x128xf32>
    %27 = math.sin %8 : vector<128x128xf32>
    %cst_6 = arith.constant 0.000000e+00 : f32
    %28 = vector.broadcast %cst_6 : f32 to vector<128x128xf32>
    %29 = arith.select %23, %27, %28 : vector<128x128xi1>, vector<128x128xf32>
    %c0_7 = arith.constant 0 : index
    %c0_8 = arith.constant 0 : index
    %c0_9 = arith.constant 0 : index
    %30 = vector.load %arg2[%c0_7, %c0_8, %c0_9] : memref<2x128x128xf32, #tpu.memory_space<vmem>>, vector<2x128x128xf32>
    %c0_10 = arith.constant 0 : index
    %c0_11 = arith.constant 0 : index
    %c0_12 = arith.constant 0 : index
    %31 = vector.load %arg3[%c0_10, %c0_11, %c0_12] : memref<2x128x128xf32, #tpu.memory_space<vmem>>, vector<2x128x128xf32>
    %32 = vector.shape_cast %26 : vector<128x128xf32> to vector<1x128x128xf32>
    %33 = vector.broadcast %32 : vector<1x128x128xf32> to vector<2x128x128xf32>
    %34 = arith.mulf %30, %33 : vector<2x128x128xf32>
    %35 = vector.shape_cast %29 : vector<128x128xf32> to vector<1x128x128xf32>
    %36 = vector.broadcast %35 : vector<1x128x128xf32> to vector<2x128x128xf32>
    %37 = arith.mulf %31, %36 : vector<2x128x128xf32>
    %38 = arith.subf %34, %37 : vector<2x128x128xf32>
    %c0_13 = arith.constant 0 : index
    %c0_14 = arith.constant 0 : index
    %c0_15 = arith.constant 0 : index
    %39 = vector.load %arg4[%c0_13, %c0_14, %c0_15] : memref<2x128x128xf32, #tpu.memory_space<vmem>>, vector<2x128x128xf32>
    tpu.vector_store %arg4[%c0_13, %c0_14, %c0_15], %38 {strides = array<i32>} : memref<2x128x128xf32, #tpu.memory_space<vmem>>, vector<2x128x128xf32>,
    %40 = vector.shape_cast %29 : vector<128x128xf32> to vector<1x128x128xf32>
    %41 = vector.broadcast %40 : vector<1x128x128xf32> to vector<2x128x128xf32>
    %42 = arith.mulf %30, %41 : vector<2x128x128xf32>
    %43 = vector.shape_cast %26 : vector<128x128xf32> to vector<1x128x128xf32>
    %44 = vector.broadcast %43 : vector<1x128x128xf32> to vector<2x128x128xf32>
    %45 = arith.mulf %31, %44 : vector<2x128x128xf32>
    %46 = arith.addf %42, %45 : vector<2x128x128xf32>
    %c0_16 = arith.constant 0 : index
    %c0_17 = arith.constant 0 : index
    %c0_18 = arith.constant 0 : index
    %47 = vector.load %arg5[%c0_16, %c0_17, %c0_18] : memref<2x128x128xf32, #tpu.memory_space<vmem>>, vector<2x128x128xf32>
    tpu.vector_store %arg5[%c0_16, %c0_17, %c0_18], %46 {strides = array<i32>} : memref<2x128x128xf32, #tpu.memory_space<vmem>>, vector<2x128x128xf32>,
    return
  }
  func.func @transform_0(%arg0: i32) -> (i32, i32) {
    %c0_i32 = arith.constant 0 : i32
    %c0_i32_0 = arith.constant 0 : i32
    return %arg0, %c0_i32 : i32, i32
  }
  func.func @transform_1(%arg0: i32) -> (i32, i32, i32) {
    %c0_i32 = arith.constant 0 : i32
    %c0_i32_0 = arith.constant 0 : i32
    %c0_i32_1 = arith.constant 0 : i32
    return %c0_i32, %arg0, %c0_i32_0 : i32, i32, i32
  }
  func.func @transform_2(%arg0: i32) -> (i32, i32, i32) {
    %c0_i32 = arith.constant 0 : i32
    %c0_i32_0 = arith.constant 0 : i32
    %c0_i32_1 = arith.constant 0 : i32
    return %c0_i32, %arg0, %c0_i32_0 : i32, i32, i32
  }
  func.func @transform_3(%arg0: i32) -> (i32, i32, i32) {
    %c0_i32 = arith.constant 0 : i32
    %c0_i32_0 = arith.constant 0 : i32
    %c0_i32_1 = arith.constant 0 : i32
    return %c0_i32, %arg0, %c0_i32_0 : i32, i32, i32
  }
  func.func @transform_4(%arg0: i32) -> (i32, i32, i32) {
    %c0_i32 = arith.constant 0 : i32
    %c0_i32_0 = arith.constant 0 : i32
    %c0_i32_1 = arith.constant 0 : i32
    return %c0_i32, %arg0, %c0_i32_0 : i32, i32, i32
  }
}

</mosaic_0001>

<llo_original>
// kernel: phase_mask_planar.1
$region0: #{phase_mask_planar.1}
  #allocation0 [shape = 'u32[]', space=smem, size = 0x4, offset = 0x4, fixed_abs, tag = 'smem constant byte address 0x4 - core index']
  #allocation1 [shape = 'u32[72,128]{1,0:T(1,128)}', space=vmem, size = 0x9000, scoped, tag = 'internal scratch']
  %s0 = inlined_call_operand.vmem [shape: f32[128,128], index: 0, kind: input, shape index: {}]
  %s1 = inlined_call_operand.hbm [shape: f32[2,128,128], index: 1, kind: input, shape index: {}]
  %s2 = inlined_call_operand.hbm [shape: f32[2,128,128], index: 2, kind: input, shape index: {}]
  %s3 = inlined_call_operand.hbm [shape: f32[2,128,128], index: 3, kind: output, shape index: {0}]
  %s4 = inlined_call_operand.hbm [shape: f32[2,128,128], index: 4, kind: output, shape index: {1}]
  %5 = xla_tuple %s3, %s4
  %s6 = sld [smem:[#allocation0]]
  $region38: #{phase_mask_planar.1} parent=0
    _
  %s8 = ssub.s32 1, %s6
  %s9 = scalar_select 0, %s8, %s6
  $region1: #{phase_mask_planar.1} parent=0
    #allocation2 [shape = 'u8[131072]{0}', space=vmem, size = 0x20000, scoped, tag = 'input window, operand 1, single buffered']
    #allocation3 [shape = 's32[1]{0}', space=sflag, size = 0x4, scoped, tag = 'scoped memory for phase_mask_planar.1']
    #allocation4 [shape = 's32[1]{0}', space=sflag, size = 0x4, scoped, tag = 'scoped memory for phase_mask_planar.1']
    #allocation5 [shape = 'u8[131072]{0}', space=vmem, size = 0x20000, scoped, tag = 'input window, operand 2, single buffered']
    #allocation6 [shape = 's32[1]{0}', space=sflag, size = 0x4, scoped, tag = 'scoped memory for phase_mask_planar.1']
    #allocation7 [shape = 'u8[131072]{0}', space=vmem, size = 0x20000, scoped, tag = 'output window, operand 0, single buffered']
    #allocation8 [shape = 'u8[131072]{0}', space=vmem, size = 0x20000, scoped, tag = 'output window, operand 1, single buffered']
    #allocation9 [shape = 's32[1]{0}', space=sflag, size = 0x4, scoped, tag = 'scoped memory for phase_mask_planar.1']
    %10 = vsyncpa [#allocation3], 0
    %11 = vsyncpa [#allocation6], 0
    %12 = vsyncpa [#allocation4], 0
    %13 = vsyncpa [#allocation9], 0
    // Predicated region
    $region2: #{phase_mask_planar.1} parent=1 // pred_check
      _
    $region3: #{phase_mask_planar.1} parent=1 // pred_check_branch
      %15 = sbr.rel (0) target = $region5
    $region4: #{phase_mask_planar.1} parent=1 // pred_region
      _
    $region5: #{phase_mask_planar.1} parent=1 // pred_fallthru
      _
    // Predicated region
    $region6: #{phase_mask_planar.1} parent=1 // pred_check
      _
    $region7: #{phase_mask_planar.1} parent=1 // pred_check_branch
      %17 = sbr.rel (0) target = $region9
    $region8: #{phase_mask_planar.1} parent=1 // pred_region
      %19 = vsyncadd [#allocation3], 0
      %s20 = sshll.u32 %s1, 4
      %s21 = int_to_ptr.hbm [resolvable:$true] %s20
      %s22 = sshll.u32 [#allocation2], 4
      %s23 = int_to_ptr.vmem [resolvable:$true] %s22
      %28 = dma.hbm_to_vmem [thread:$0]  %s21, 4096, %s23, [#allocation3], 128, 128, 8
    $region9: #{phase_mask_planar.1} parent=1 // pred_fallthru
      _
    // Predicated region
    $region10: #{phase_mask_planar.1} parent=1 // pred_check
      _
    $region11: #{phase_mask_planar.1} parent=1 // pred_check_branch
      %30 = sbr.rel (0) target = $region13
    $region12: #{phase_mask_planar.1} parent=1 // pred_region
      %32 = vsyncadd [#allocation6], 0
      %s33 = sshll.u32 %s2, 4
      %s34 = int_to_ptr.hbm [resolvable:$true] %s33
      %s35 = sshll.u32 [#allocation5], 4
      %s36 = int_to_ptr.vmem [resolvable:$true] %s35
      %41 = dma.hbm_to_vmem [thread:$0]  %s34, 4096, %s36, [#allocation6], 128, 128, 8
    $region13: #{phase_mask_planar.1} parent=1 // pred_fallthru
      _
    // Predicated region
    $region14: #{phase_mask_planar.1} parent=1 // pred_check
      _
    $region15: #{phase_mask_planar.1} parent=1 // pred_check_branch
      %43 = sbr.rel (0) target = $region17
    $region16: #{phase_mask_planar.1} parent=1 // pred_region
      %45 = dma.done [#allocation3], 4096
    $region17: #{phase_mask_planar.1} parent=1 // pred_fallthru
      _
    // Predicated region
    $region18: #{phase_mask_planar.1} parent=1 // pred_check
      _
    $region19: #{phase_mask_planar.1} parent=1 // pred_check_branch
      %47 = sbr.rel (0) target = $region21
    $region20: #{phase_mask_planar.1} parent=1 // pred_region
      %49 = dma.done [#allocation6], 4096
    $region21: #{phase_mask_planar.1} parent=1 // pred_fallthru
      _
    %s50 = smul.u32 0, 128
    %v51 = vld [vmem:[%s0] sm:$0xff]
    %v52 = vld [vmem:[%s0 + $0x8] sm:$0xff]
    %v53 = vld [vmem:[%s0 + $0x10] sm:$0xff]
    %v54 = vld [vmem:[%s0 + $0x18] sm:$0xff]
    %v55 = vld [vmem:[%s0 + $0x20] sm:$0xff]
    %v56 = vld [vmem:[%s0 + $0x28] sm:$0xff]
    %v57 = vld [vmem:[%s0 + $0x30] sm:$0xff]
    %v58 = vld [vmem:[%s0 + $0x38] sm:$0xff]
    %v59 = vld [vmem:[%s0 + $0x40] sm:$0xff]
    %v60 = vld [vmem:[%s0 + $0x48] sm:$0xff]
    %v61 = vld [vmem:[%s0 + $0x50] sm:$0xff]
    %v62 = vld [vmem:[%s0 + $0x58] sm:$0xff]
    %v63 = vld [vmem:[%s0 + $0x60] sm:$0xff]
    %v64 = vld [vmem:[%s0 + $0x68] sm:$0xff]
    %v65 = vld [vmem:[%s0 + $0x70] sm:$0xff]
    %v66 = vld [vmem:[%s0 + $0x78] sm:$0xff]
    %v67 = vmul.f32 %v51, 0.5
    %v68 = vmul.f32 %v52, 0.5
    %v69 = vmul.f32 %v53, 0.5
    %v70 = vmul.f32 %v54, 0.5
    %v71 = vmul.f32 %v55, 0.5
    %v72 = vmul.f32 %v56, 0.5
    %v73 = vmul.f32 %v57, 0.5
    %v74 = vmul.f32 %v58, 0.5
    %v75 = vmul.f32 %v59, 0.5
    %v76 = vmul.f32 %v60, 0.5
    %v77 = vmul.f32 %v61, 0.5
    %v78 = vmul.f32 %v62, 0.5
    %v79 = vmul.f32 %v63, 0.5
    %v80 = vmul.f32 %v64, 0.5
    %v81 = vmul.f32 %v65, 0.5
    %v82 = vmul.f32 %v66, 0.5
    %v83 = vtanh.pop %v67
    %v84 = vtanh.pop %v68
    %v85 = vtanh.pop %v69
    %v86 = vtanh.pop %v70
    %v87 = vtanh.pop %v71
    %v88 = vtanh.pop %v72
    %v89 = vtanh.pop %v73
    %v90 = vtanh.pop %v74
    %v91 = vtanh.pop %v75
    %v92 = vtanh.pop %v76
    %v93 = vtanh.pop %v77
    %v94 = vtanh.pop %v78
    %v95 = vtanh.pop %v79
    %v96 = vtanh.pop %v80
    %v97 = vtanh.pop %v81
    %v98 = vtanh.pop %v82
    %v99 = vadd.f32 %v83, 1.0
    %v100 = vadd.f32 %v84, 1.0
    %v101 = vadd.f32 %v85, 1.0
    %v102 = vadd.f32 %v86, 1.0
    %v103 = vadd.f32 %v87, 1.0
    %v104 = vadd.f32 %v88, 1.0
    %v105 = vadd.f32 %v89, 1.0
    %v106 = vadd.f32 %v90, 1.0
    %v107 = vadd.f32 %v91, 1.0
    %v108 = vadd.f32 %v92, 1.0
    %v109 = vadd.f32 %v93, 1.0
    %v110 = vadd.f32 %v94, 1.0
    %v111 = vadd.f32 %v95, 1.0
    %v112 = vadd.f32 %v96, 1.0
    %v113 = vadd.f32 %v97, 1.0
    %v114 = vadd.f32 %v98, 1.0
    %v115 = vmul.f32 %v99, 3.1400218
    %v116 = vmul.f32 %v100, 3.1400218
    %v117 = vmul.f32 %v101, 3.1400218
    %v118 = vmul.f32 %v102, 3.1400218
    %v119 = vmul.f32 %v103, 3.1400218
    %v120 = vmul.f32 %v104, 3.1400218
    %v121 = vmul.f32 %v105, 3.1400218
    %v122 = vmul.f32 %v106, 3.1400218
    %v123 = vmul.f32 %v107, 3.1400218
    %v124 = vmul.f32 %v108, 3.1400218
    %v125 = vmul.f32 %v109, 3.1400218
    %v126 = vmul.f32 %v110, 3.1400218
    %v127 = vmul.f32 %v111, 3.1400218
    %v128 = vmul.f32 %v112, 3.1400218
    %v129 = vmul.f32 %v113, 3.1400218
    %v130 = vmul.f32 %v114, 3.1400218
    %v131 = vlaneseq
    %v132 = vshrl.u32 %v131, 7
    %v133 = vadd.s32 %v132, 8
    %v134 = vadd.s32 %v132, 16
    %v135 = vadd.s32 %v132, 24
    %v136 = vadd.s32 %v132, 32
    %v137 = vadd.s32 %v132, 40
    %v138 = vadd.s32 %v132, 48
    %v139 = vadd.s32 %v132, 56
    %v140 = vadd.s32 %v132, 64
    %v141 = vadd.s32 %v132, 72
    %v142 = vadd.s32 %v132, 80
    %v143 = vadd.s32 %v132, 88
    %v144 = vadd.s32 %v132, 96
    %v145 = vadd.s32 %v132, 104
    %v146 = vadd.s32 %v132, 112
    %v147 = vadd.s32 %v132, 120
    %v148 = vstv %s50
    %v149 = vadd.s32 %v148, %v132
    %v150 = vadd.s32 %v148, %v133
    %v151 = vadd.s32 %v148, %v134
    %v152 = vadd.s32 %v148, %v135
    %v153 = vadd.s32 %v148, %v136
    %v154 = vadd.s32 %v148, %v137
    %v155 = vadd.s32 %v148, %v138
    %v156 = vadd.s32 %v148, %v139
    %v157 = vadd.s32 %v148, %v140
    %v158 = vadd.s32 %v148, %v141
    %v159 = vadd.s32 %v148, %v142
    %v160 = vadd.s32 %v148, %v143
    %v161 = vadd.s32 %v148, %v144
    %v162 = vadd.s32 %v148, %v145
    %v163 = vadd.s32 %v148, %v146
    %v164 = vadd.s32 %v148, %v147
    %v165 = vlaneseq
    %v166 = vand.u32 %v165, 127
    %vm167 = vcmp.ge.s32.totalorder %v149, 32
    %vm168 = vcmp.ge.s32.totalorder %v150, 32
    %vm169 = vcmp.ge.s32.totalorder %v151, 32
    %vm170 = vcmp.ge.s32.totalorder %v152, 32
    %vm171 = vcmp.ge.s32.totalorder %v153, 32
    %vm172 = vcmp.ge.s32.totalorder %v154, 32
    %vm173 = vcmp.ge.s32.totalorder %v155, 32
    %vm174 = vcmp.ge.s32.totalorder %v156, 32
    %vm175 = vcmp.ge.s32.totalorder %v157, 32
    %vm176 = vcmp.ge.s32.totalorder %v158, 32
    %vm177 = vcmp.ge.s32.totalorder %v159, 32
    %vm178 = vcmp.ge.s32.totalorder %v160, 32
    %vm179 = vcmp.ge.s32.totalorder %v161, 32
    %vm180 = vcmp.ge.s32.totalorder %v162, 32
    %vm181 = vcmp.ge.s32.totalorder %v163, 32
    %vm182 = vcmp.ge.s32.totalorder %v164, 32
    %vm183 = vcmp.lt.s32.totalorder %v149, 96
    %vm184 = vcmp.lt.s32.totalorder %v150, 96
    %vm185 = vcmp.lt.s32.totalorder %v151, 96
    %vm186 = vcmp.lt.s32.totalorder %v152, 96
    %vm187 = vcmp.lt.s32.totalorder %v153, 96
    %vm188 = vcmp.lt.s32.totalorder %v154, 96
    %vm189 = vcmp.lt.s32.totalorder %v155, 96
    %vm190 = vcmp.lt.s32.totalorder %v156, 96
    %vm191 = vcmp.lt.s32.totalorder %v157, 96
    %vm192 = vcmp.lt.s32.totalorder %v158, 96
    %vm193 = vcmp.lt.s32.totalorder %v159, 96
    %vm194 = vcmp.lt.s32.totalorder %v160, 96
    %vm195 = vcmp.lt.s32.totalorder %v161, 96
    %vm196 = vcmp.lt.s32.totalorder %v162, 96
    %vm197 = vcmp.lt.s32.totalorder %v163, 96
    %vm198 = vcmp.lt.s32.totalorder %v164, 96
    %vm199 = vmand %vm167, %vm183
    %vm200 = vmand %vm168, %vm184
    %vm201 = vmand %vm169, %vm185
    %vm202 = vmand %vm170, %vm186
    %vm203 = vmand %vm171, %vm187
    %vm204 = vmand %vm172, %vm188
    %vm205 = vmand %vm173, %vm189
    %vm206 = vmand %vm174, %vm190
    %vm207 = vmand %vm175, %vm191
    %vm208 = vmand %vm176, %vm192
    %vm209 = vmand %vm177, %vm193
    %vm210 = vmand %vm178, %vm194
    %vm211 = vmand %vm179, %vm195
    %vm212 = vmand %vm180, %vm196
    %vm213 = vmand %vm181, %vm197
    %vm214 = vmand %vm182, %vm198
    %vm215 = vcmp.ge.s32.totalorder %v166, 32
    %vm216 = vmand %vm199, %vm215
    %vm217 = vmand %vm200, %vm215
    %vm218 = vmand %vm201, %vm215
    %vm219 = vmand %vm202, %vm215
    %vm220 = vmand %vm203, %vm215
    %vm221 = vmand %vm204, %vm215
    %vm222 = vmand %vm205, %vm215
    %vm223 = vmand %vm206, %vm215
    %vm224 = vmand %vm207, %vm215
    %vm225 = vmand %vm208, %vm215
    %vm226 = vmand %vm209, %vm215
    %vm227 = vmand %vm210, %vm215
    %vm228 = vmand %vm211, %vm215
    %vm229 = vmand %vm212, %vm215
    %vm230 = vmand %vm213, %vm215
    %vm231 = vmand %vm214, %vm215
    %vm232 = vcmp.lt.s32.totalorder %v166, 96
    %vm233 = vmand %vm216, %vm232
    %vm234 = vmand %vm217, %vm232
    %vm235 = vmand %vm218, %vm232
    %vm236 = vmand %vm219, %vm232
    %vm237 = vmand %vm220, %vm232
    %vm238 = vmand %vm221, %vm232
    %vm239 = vmand %vm222, %vm232
    %vm240 = vmand %vm223, %vm232
    %vm241 = vmand %vm224, %vm232
    %vm242 = vmand %vm225, %vm232
    %vm243 = vmand %vm226, %vm232
    %vm244 = vmand %vm227, %vm232
    %vm245 = vmand %vm228, %vm232
    %vm246 = vmand %vm229, %vm232
    %vm247 = vmand %vm230, %vm232
    %vm248 = vmand %vm231, %vm232
    %v249 = vand.u32 2147483647, %v115
    %vm250 = vcmp.le.f32.partialorder %v249, 0.7853982
    %vm251 = vcmp.lt.s32.totalorder %v115, 0
    %v252 = vand.u32 %v115, 2139095040
    %v253 = vshrl.u32 %v252, 23
    %v254 = vsub.s32 %v253, 127
    %v255 = vand.u32 2147483647, %v115
    %v256 = vand.u32 %v255, 8388607
    %v257 = vor.u32 %v256, 8388608
    %v258 = vsub.s32 0, %v257
    %v259 = vadd.s32 %v254, 1
    %vm260 = vcmp.gt.s32.totalorder %v259, 0
    %v261 = vsel %vm260, %v259, 0
    %v262 = vshrl.u32 %v261, 5
    %v263 = vand.u32 %v261, 31
    %v264 = vsub.s32 32, %v263
    %v265 = vshrl.u32 683565275, %v264
    %v266 = vshll.u32 683565275, %v263
    %v267 = vshrl.u32 2475754826, %v264
    %v268 = vor.u32 %v266, %v267
    %v269 = vshll.u32 2475754826, %v263
    %v270 = vshrl.u32 2131351028, %v264
    %v271 = vor.u32 %v269, %v270
    %v272 = vshll.u32 2131351028, %v263
    %v273 = vshrl.u32 2102212464, %v264
    %v274 = vor.u32 %v272, %v273
    %v275 = vshll.u32 2102212464, %v263
    %v276 = vshrl.u32 920167782, %v264
    %v277 = vor.u32 %v275, %v276
    %v278 = vshll.u32 920167782, %v263
    %v279 = vshrl.u32 1326507024, %v264
    %v280 = vor.u32 %v278, %v279
    %vm281 = vcmp.lt.s32.totalorder %v262, 1
    %vm282 = vcmp.lt.s32.totalorder %v262, 2
    %vm283 = vcmp.lt.s32.totalorder %v262, 3
    %vm284 = vcmp.lt.s32.totalorder %v262, 4
    %v285 = vsel %vm281, %v265, %v268
    %v286 = vsel %vm284, %v274, 2102212464
    %v287 = vsel %vm283, %v271, %v286
    %v288 = vsel %vm282, %v285, %v287
    %v289 = vsel %vm281, %v268, %v271
    %v290 = vsel %vm284, %v277, 920167782
    %v291 = vsel %vm283, %v274, %v290
    %v292 = vsel %vm282, %v289, %v291
    %v293 = vsel %vm281, %v271, %v274
    %v294 = vsel %vm284, %v280, 1326507024
    %v295 = vsel %vm283, %v277, %v294
    %v296 = vsel %vm282, %v293, %v295
    %v297 = vshll.u32 %v257, 8
    %v298 = vand.u32 %v297, 65535
    %v299 = vshrl.u32 %v297, 16
    %v300 = vand.u32 %v296, 65535
    %v301 = vshrl.u32 %v296, 16
    %v302 = vmul.u32 %v298, %v300
    %v303 = vmul.u32 %v298, %v301
    %v304 = vmul.u32 %v299, %v300
    %v305 = vmul.u32 %v299, %v301
    %v306 = vshll.u32 %v303, 16
    %v307 = vshrl.u32 %v303, 16
    %v308 = vshll.u32 %v304, 16
    %v309 = vshrl.u32 %v304, 16
    %vm310 = vc.u32 %v302, %v306
    %v311 = vsel %vm310, 1, 0
    %v312 = vadd.s32 %v302, %v306
    %v313 = vadd.s32 %v305, %v311
    %vm314 = vc.u32 %v312, %v308
    %v315 = vsel %vm314, 1, 0
    %v316 = vadd.s32 %v312, %v308
    %v317 = vadd.s32 %v313, %v315
    %v318 = vadd.s32 %v317, %v307
    %v319 = vadd.s32 %v318, %v309
    %v320 = vand.u32 %v297, 65535
    %v321 = vshrl.u32 %v297, 16
    %v322 = vand.u32 %v292, 65535
    %v323 = vshrl.u32 %v292, 16
    %v324 = vmul.u32 %v320, %v322
    %v325 = vmul.u32 %v320, %v323
    %v326 = vmul.u32 %v321, %v322
    %v327 = vmul.u32 %v321, %v323
    %v328 = vshll.u32 %v325, 16
    %v329 = vshrl.u32 %v325, 16
    %v330 = vshll.u32 %v326, 16
    %v331 = vshrl.u32 %v326, 16
    %vm332 = vc.u32 %v324, %v328
    %v333 = vsel %vm332, 1, 0
    %v334 = vadd.s32 %v324, %v328
    %v335 = vadd.s32 %v327, %v333
    %vm336 = vc.u32 %v334, %v330
    %v337 = vsel %vm336, 1, 0
    %v338 = vadd.s32 %v334, %v330
    %v339 = vadd.s32 %v335, %v337
    %v340 = vadd.s32 %v339, %v329
    %v341 = vadd.s32 %v340, %v331
    %v342 = vmul.u32 %v297, %v288
    %v343 = vadd.s32 %v319, %v338
    %vm344 = vc.u32 %v319, %v338
    %v345 = vadd.s32 %v341, 1
    %v346 = vsel %vm344, %v345, %v341
    %v347 = vadd.s32 %v342, %v346
    %v348 = vadd.s32 %v347, 536870912
    %v349 = vshrl.u32 %v348, 30
    %v350 = vshll.u32 %v349, 30
    %v351 = vsub.s32 %v347, %v350
    %vm352 = vcmp.lt.s32.totalorder %v351, 0
    %v353 = vsub.s32 0, %v351
    %v354 = vsel %vm352, %v353, %v351
    %v355 = vclz %v354
    %v356 = vsub.s32 %v355, 2
    %vm357 = vcmp.gt.s32.totalorder 0, %v356
    %v358 = vsel %vm357, 0, %v356
    %v359 = vsub.s32 32, %v358
    %v360 = vshll.u32 %v351, %v358
    %v361 = vshrl.u32 %v343, %v359
    %v362 = vor.u32 %v360, %v361
    %v363 = vsub.s32 4294967266, %v358
    %v364 = vadd.s32 %v363, 127
    %v365 = vshll.u32 %v364, 23
    %v366 = vor.u32 4788187, %v365
    %v367 = vand.u32 2147483647, %v366
    %v369 = vcvt.s32.f32 %v362
    %v370 = vmul.f32 %v369, %v367
    %v371 = vxor.u32 %v370, 2147483648
    %v372 = vsel %vm251, %v371, %v370
    %v373 = vsub.s32 4, %v349
    %v374 = vsel %vm251, %v373, %v349
    %v375 = vsel %vm250, %v115, %v372
    %v376 = vsel %vm250, 0, %v374
    %v377 = vmul.f32 %v375, %v375
    %v378 = vmul.f32 %v377, -0.001358992
    %v379 = vadd.f32 %v378, 0.041655596
    %v380 = vmul.f32 %v377, %v379
    %v381 = vadd.f32 %v380, -0.4999988
    %v382 = vmul.f32 %v377, %v381
    %v383 = vadd.f32 1.0, %v382
    %v384 = vmul.f32 %v375, %v375
    %v385 = vmul.f32 %v384, -0.00019511016
    %v386 = vadd.f32 %v385, 0.008332121
    %v387 = vmul.f32 %v384, %v386
    %v388 = vadd.f32 %v387, -0.16666654
    %v389 = vmul.f32 %v384, %v388
    %v390 = vadd.f32 %v389, 1.0
    %v391 = vmul.f32 %v390, %v375
    %vm392 = vweird.f32 %v115
    %v393 = vand.u32 %v376, 3
    %vm394 = vcmp.lt.s32.totalorder %v393, 2
    %vm395 = vcmp.eq.s32.totalorder %v393, 0
    %v396 = vxor.u32 %v391, 2147483648
    %v397 = vsel %vm395, %v383, %v396
    %vm398 = vcmp.eq.s32.totalorder %v393, 2
    %v399 = vxor.u32 %v383, 2147483648
    %v400 = vsel %vm398, %v399, %v391
    %v401 = vsel %vm394, %v397, %v400
    %v402 = vsel %vm392, nan, %v401
    %v403 = vand.u32 2147483647, %v116
    %vm404 = vcmp.le.f32.partialorder %v403, 0.7853982
    %vm405 = vcmp.lt.s32.totalorder %v116, 0
    %v406 = vand.u32 %v116, 2139095040
    %v407 = vshrl.u32 %v406, 23
    %v408 = vsub.s32 %v407, 127
    %v409 = vand.u32 2147483647, %v116
    %v410 = vand.u32 %v409, 8388607
    %v411 = vor.u32 %v410, 8388608
    %v412 = vsub.s32 0, %v411
    %v413 = vadd.s32 %v408, 1
    %vm414 = vcmp.gt.s32.totalorder %v413, 0
    %v415 = vsel %vm414, %v413, 0
    %v416 = vshrl.u32 %v415, 5
    %v417 = vand.u32 %v415, 31
    %v418 = vsub.s32 32, %v417
    %v419 = vshrl.u32 683565275, %v418
    %v420 = vshll.u32 683565275, %v417
    %v421 = vshrl.u32 2475754826, %v418
    %v422 = vor.u32 %v420, %v421
    %v423 = vshll.u32 2475754826, %v417
    %v424 = vshrl.u32 2131351028, %v418
    %v425 = vor.u32 %v423, %v424
    %v426 = vshll.u32 2131351028, %v417
    %v427 = vshrl.u32 2102212464, %v418
    %v428 = vor.u32 %v426, %v427
    %v429 = vshll.u32 2102212464, %v417
    %v430 = vshrl.u32 920167782, %v418
    %v431 = vor.u32 %v429, %v430
    %v432 = vshll.u32 920167782, %v417
    %v433 = vshrl.u32 1326507024, %v418
    %v434 = vor.u32 %v432, %v433
    %vm435 = vcmp.lt.s32.totalorder %v416, 1
    %vm436 = vcmp.lt.s32.totalorder %v416, 2
    %vm437 = vcmp.lt.s32.totalorder %v416, 3
    %vm438 = vcmp.lt.s32.totalorder %v416, 4
    %v439 = vsel %vm435, %v419, %v422
    %v440 = vsel %vm438, %v428, 2102212464
    %v441 = vsel %vm437, %v425, %v440
    %v442 = vsel %vm436, %v439, %v441
    %v443 = vsel %vm435, %v422, %v425
    %v444 = vsel %vm438, %v431, 920167782
    %v445 = vsel %vm437, %v428, %v444
    %v446 = vsel %vm436, %v443, %v445
    %v447 = vsel %vm435, %v425, %v428
    %v448 = vsel %vm438, %v434, 1326507024
    %v449 = vsel %vm437, %v431, %v448
    %v450 = vsel %vm436, %v447, %v449
    %v451 = vshll.u32 %v411, 8
    %v452 = vand.u32 %v451, 65535
    %v453 = vshrl.u32 %v451, 16
    %v454 = vand.u32 %v450, 65535
    %v455 = vshrl.u32 %v450, 16
    %v456 = vmul.u32 %v452, %v454
    %v457 = vmul.u32 %v452, %v455
    %v458 = vmul.u32 %v453, %v454
    %v459 = vmul.u32 %v453, %v455
    %v460 = vshll.u32 %v457, 16
    %v461 = vshrl.u32 %v457, 16
    %v462 = vshll.u32 %v458, 16
    %v463 = vshrl.u32 %v458, 16
    %vm464 = vc.u32 %v456, %v460
    %v465 = vsel %vm464, 1, 0
    %v466 = vadd.s32 %v456, %v460
    %v467 = vadd.s32 %v459, %v465
    %vm468 = vc.u32 %v466, %v462
    %v469 = vsel %vm468, 1, 0
    %v470 = vadd.s32 %v466, %v462
    %v471 = vadd.s32 %v467, %v469
    %v472 = vadd.s32 %v471, %v461
    %v473 = vadd.s32 %v472, %v463
    %v474 = vand.u32 %v451, 65535
    %v475 = vshrl.u32 %v451, 16
    %v476 = vand.u32 %v446, 65535
    %v477 = vshrl.u32 %v446, 16
    %v478 = vmul.u32 %v474, %v476
    %v479 = vmul.u32 %v474, %v477
    %v480 = vmul.u32 %v475, %v476
    %v481 = vmul.u32 %v475, %v477
    %v482 = vshll.u32 %v479, 16
    %v483 = vshrl.u32 %v479, 16
    %v484 = vshll.u32 %v480, 16
    %v485 = vshrl.u32 %v480, 16
    %vm486 = vc.u32 %v478, %v482
    %v487 = vsel %vm486, 1, 0
    %v488 = vadd.s32 %v478, %v482
    %v489 = vadd.s32 %v481, %v487
    %vm490 = vc.u32 %v488, %v484
    %v491 = vsel %vm490, 1, 0
    %v492 = vadd.s32 %v488, %v484
    %v493 = vadd.s32 %v489, %v491
    %v494 = vadd.s32 %v493, %v483
    %v495 = vadd.s32 %v494, %v485
    %v496 = vmul.u32 %v451, %v442
    %v497 = vadd.s32 %v473, %v492
    %vm498 = vc.u32 %v473, %v492
    %v499 = vadd.s32 %v495, 1
    %v500 = vsel %vm498, %v499, %v495
    %v501 = vadd.s32 %v496, %v500
    %v502 = vadd.s32 %v501, 536870912
    %v503 = vshrl.u32 %v502, 30
    %v504 = vshll.u32 %v503, 30
    %v505 = vsub.s32 %v501, %v504
    %vm506 = vcmp.lt.s32.totalorder %v505, 0
    %v507 = vsub.s32 0, %v505
    %v508 = vsel %vm506, %v507, %v505
    %v509 = vclz %v508
    %v510 = vsub.s32 %v509, 2
    %vm511 = vcmp.gt.s32.totalorder 0, %v510
    %v512 = vsel %vm511, 0, %v510
    %v513 = vsub.s32 32, %v512
    %v514 = vshll.u32 %v505, %v512
    %v515 = vshrl.u32 %v497, %v513
    %v516 = vor.u32 %v514, %v515
    %v517 = vsub.s32 4294967266, %v512
    %v518 = vadd.s32 %v517, 127
    %v519 = vshll.u32 %v518, 23
    %v520 = vor.u32 4788187, %v519
    %v521 = vand.u32 2147483647, %v520
    %v523 = vcvt.s32.f32 %v516
    %v524 = vmul.f32 %v523, %v521
    %v525 = vxor.u32 %v524, 2147483648
    %v526 = vsel %vm405, %v525, %v524
    %v527 = vsub.s32 4, %v503
    %v528 = vsel %vm405, %v527, %v503
    %v529 = vsel %vm404, %v116, %v526
    %v530 = vsel %vm404, 0, %v528
    %v531 = vmul.f32 %v529, %v529
    %v532 = vmul.f32 %v531, -0.001358992
    %v533 = vadd.f32 %v532, 0.041655596
    %v534 = vmul.f32 %v531, %v533
    %v535 = vadd.f32 %v534, -0.4999988
    %v536 = vmul.f32 %v531, %v535
    %v537 = vadd.f32 1.0, %v536
    %v538 = vmul.f32 %v529, %v529
    %v539 = vmul.f32 %v538, -0.00019511016
    %v540 = vadd.f32 %v539, 0.008332121
    %v541 = vmul.f32 %v538, %v540
    %v542 = vadd.f32 %v541, -0.16666654
    %v543 = vmul.f32 %v538, %v542
    %v544 = vadd.f32 %v543, 1.0
    %v545 = vmul.f32 %v544, %v529
    %vm546 = vweird.f32 %v116
    %v547 = vand.u32 %v530, 3
    %vm548 = vcmp.lt.s32.totalorder %v547, 2
    %vm549 = vcmp.eq.s32.totalorder %v547, 0
    %v550 = vxor.u32 %v545, 2147483648
    %v551 = vsel %vm549, %v537, %v550
    %vm552 = vcmp.eq.s32.totalorder %v547, 2
    %v553 = vxor.u32 %v537, 2147483648
    %v554 = vsel %vm552, %v553, %v545
    %v555 = vsel %vm548, %v551, %v554
    %v556 = vsel %vm546, nan, %v555
    %v557 = vand.u32 2147483647, %v117
    %vm558 = vcmp.le.f32.partialorder %v557, 0.7853982
    %vm559 = vcmp.lt.s32.totalorder %v117, 0
    %v560 = vand.u32 %v117, 2139095040
    %v561 = vshrl.u32 %v560, 23
    %v562 = vsub.s32 %v561, 127
    %v563 = vand.u32 2147483647, %v117
    %v564 = vand.u32 %v563, 8388607
    %v565 = vor.u32 %v564, 8388608
    %v566 = vsub.s32 0, %v565
    %v567 = vadd.s32 %v562, 1
    %vm568 = vcmp.gt.s32.totalorder %v567, 0
    %v569 = vsel %vm568, %v567, 0
    %v570 = vshrl.u32 %v569, 5
    %v571 = vand.u32 %v569, 31
    %v572 = vsub.s32 32, %v571
    %v573 = vshrl.u32 683565275, %v572
    %v574 = vshll.u32 683565275, %v571
    %v575 = vshrl.u32 2475754826, %v572
    %v576 = vor.u32 %v574, %v575
    %v577 = vshll.u32 2475754826, %v571
    %v578 = vshrl.u32 2131351028, %v572
    %v579 = vor.u32 %v577, %v578
    %v580 = vshll.u32 2131351028, %v571
    %v581 = vshrl.u32 2102212464, %v572
    %v582 = vor.u32 %v580, %v581
    %v583 = vshll.u32 2102212464, %v571
    %v584 = vshrl.u32 920167782, %v572
    %v585 = vor.u32 %v583, %v584
    %v586 = vshll.u32 920167782, %v571
    %v587 = vshrl.u32 1326507024, %v572
    %v588 = vor.u32 %v586, %v587
    %vm589 = vcmp.lt.s32.totalorder %v570, 1
    %vm590 = vcmp.lt.s32.totalorder %v570, 2
    %vm591 = vcmp.lt.s32.totalorder %v570, 3
    %vm592 = vcmp.lt.s32.totalorder %v570, 4
    %v593 = vsel %vm589, %v573, %v576
    %v594 = vsel %vm592, %v582, 2102212464
    %v595 = vsel %vm591, %v579, %v594
    %v596 = vsel %vm590, %v593, %v595
    %v597 = vsel %vm589, %v576, %v579
    %v598 = vsel %vm592, %v585, 920167782
    %v599 = vsel %vm591, %v582, %v598
    %v600 = vsel %vm590, %v597, %v599
    %v601 = vsel %vm589, %v579, %v582
    %v602 = vsel %vm592, %v588, 1326507024
    %v603 = vsel %vm591, %v585, %v602
    %v604 = vsel %vm590, %v601, %v603
    %v605 = vshll.u32 %v565, 8
    %v606 = vand.u32 %v605, 65535
    %v607 = vshrl.u32 %v605, 16
    %v608 = vand.u32 %v604, 65535
    %v609 = vshrl.u32 %v604, 16
    %v610 = vmul.u32 %v606, %v608
    %v611 = vmul.u32 %v606, %v609
    %v612 = vmul.u32 %v607, %v608
    %v613 = vmul.u32 %v607, %v609
    %v614 = vshll.u32 %v611, 16
    %v615 = vshrl.u32 %v611, 16
    %v616 = vshll.u32 %v612, 16
    %v617 = vshrl.u32 %v612, 16
    %vm618 = vc.u32 %v610, %v614
    %v619 = vsel %vm618, 1, 0
    %v620 = vadd.s32 %v610, %v614
    %v621 = vadd.s32 %v613, %v619
    %vm622 = vc.u32 %v620, %v616
    %v623 = vsel %vm622, 1, 0
    %v624 = vadd.s32 %v620, %v616
    %v625 = vadd.s32 %v621, %v623
    %v626 = vadd.s32 %v625, %v615
    %v627 = vadd.s32 %v626, %v617
    %v628 = vand.u32 %v605, 65535
    %v629 = vshrl.u32 %v605, 16
    %v630 = vand.u32 %v600, 65535
    %v631 = vshrl.u32 %v600, 16
    %v632 = vmul.u32 %v628, %v630
    %v633 = vmul.u32 %v628, %v631
    %v634 = vmul.u32 %v629, %v630
    %v635 = vmul.u32 %v629, %v631
    %v636 = vshll.u32 %v633, 16
    %v637 = vshrl.u32 %v633, 16
    %v638 = vshll.u32 %v634, 16
    %v639 = vshrl.u32 %v634, 16
    %vm640 = vc.u32 %v632, %v636
    %v641 = vsel %vm640, 1, 0
    %v642 = vadd.s32 %v632, %v636
    %v643 = vadd.s32 %v635, %v641
    %vm644 = vc.u32 %v642, %v638
    %v645 = vsel %vm644, 1, 0
    %v646 = vadd.s32 %v642, %v638
    %v647 = vadd.s32 %v643, %v645
    %v648 = vadd.s32 %v647, %v637
    %v649 = vadd.s32 %v648, %v639
    %v650 = vmul.u32 %v605, %v596
    %v651 = vadd.s32 %v627, %v646
    %vm652 = vc.u32 %v627, %v646
    %v653 = vadd.s32 %v649, 1
    %v654 = vsel %vm652, %v653, %v649
    %v655 = vadd.s32 %v650, %v654
    %v656 = vadd.s32 %v655, 536870912
    %v657 = vshrl.u32 %v656, 30
    %v658 = vshll.u32 %v657, 30
    %v659 = vsub.s32 %v655, %v658
    %vm660 = vcmp.lt.s32.totalorder %v659, 0
    %v661 = vsub.s32 0, %v659
    %v662 = vsel %vm660, %v661, %v659
    %v663 = vclz %v662
    %v664 = vsub.s32 %v663, 2
    %vm665 = vcmp.gt.s32.totalorder 0, %v664
    %v666 = vsel %vm665, 0, %v664
    %v667 = vsub.s32 32, %v666
    %v668 = vshll.u32 %v659, %v666
    %v669 = vshrl.u32 %v651, %v667
    %v670 = vor.u32 %v668, %v669
    %v671 = vsub.s32 4294967266, %v666
    %v672 = vadd.s32 %v671, 127
    %v673 = vshll.u32 %v672, 23
    %v674 = vor.u32 4788187, %v673
    %v675 = vand.u32 2147483647, %v674
    %v677 = vcvt.s32.f32 %v670
    %v678 = vmul.f32 %v677, %v675
    %v679 = vxor.u32 %v678, 2147483648
    %v680 = vsel %vm559, %v679, %v678
    %v681 = vsub.s32 4, %v657
    %v682 = vsel %vm559, %v681, %v657
    %v683 = vsel %vm558, %v117, %v680
    %v684 = vsel %vm558, 0, %v682
    %v685 = vmul.f32 %v683, %v683
    %v686 = vmul.f32 %v685, -0.001358992
    %v687 = vadd.f32 %v686, 0.041655596
    %v688 = vmul.f32 %v685, %v687
    %v689 = vadd.f32 %v688, -0.4999988
    %v690 = vmul.f32 %v685, %v689
    %v691 = vadd.f32 1.0, %v690
    %v692 = vmul.f32 %v683, %v683
    %v693 = vmul.f32 %v692, -0.00019511016
    %v694 = vadd.f32 %v693, 0.008332121
    %v695 = vmul.f32 %v692, %v694
    %v696 = vadd.f32 %v695, -0.16666654
    %v697 = vmul.f32 %v692, %v696
    %v698 = vadd.f32 %v697, 1.0
    %v699 = vmul.f32 %v698, %v683
    %vm700 = vweird.f32 %v117
    %v701 = vand.u32 %v684, 3
    %vm702 = vcmp.lt.s32.totalorder %v701, 2
    %vm703 = vcmp.eq.s32.totalorder %v701, 0
    %v704 = vxor.u32 %v699, 2147483648
    %v705 = vsel %vm703, %v691, %v704
    %vm706 = vcmp.eq.s32.totalorder %v701, 2
    %v707 = vxor.u32 %v691, 2147483648
    %v708 = vsel %vm706, %v707, %v699
    %v709 = vsel %vm702, %v705, %v708
    %v710 = vsel %vm700, nan, %v709
    %v711 = vand.u32 2147483647, %v118
    %vm712 = vcmp.le.f32.partialorder %v711, 0.7853982
    %vm713 = vcmp.lt.s32.totalorder %v118, 0
    %v714 = vand.u32 %v118, 2139095040
    %v715 = vshrl.u32 %v714, 23
    %v716 = vsub.s32 %v715, 127
    %v717 = vand.u32 2147483647, %v118
    %v718 = vand.u32 %v717, 8388607
    %v719 = vor.u32 %v718, 8388608
    %v720 = vsub.s32 0, %v719
    %v721 = vadd.s32 %v716, 1
    %vm722 = vcmp.gt.s32.totalorder %v721, 0
    %v723 = vsel %vm722, %v721, 0
    %v724 = vshrl.u32 %v723, 5
    %v725 = vand.u32 %v723, 31
    %v726 = vsub.s32 32, %v725
    %v727 = vshrl.u32 683565275, %v726
    %v728 = vshll.u32 683565275, %v725
    %v729 = vshrl.u32 2475754826, %v726
    %v730 = vor.u32 %v728, %v729
    %v731 = vshll.u32 2475754826, %v725
    %v732 = vshrl.u32 2131351028, %v726
    %v733 = vor.u32 %v731, %v732
    %v734 = vshll.u32 2131351028, %v725
    %v735 = vshrl.u32 2102212464, %v726
    %v736 = vor.u32 %v734, %v735
    %v737 = vshll.u32 2102212464, %v725
    %v738 = vshrl.u32 920167782, %v726
    %v739 = vor.u32 %v737, %v738
    %v740 = vshll.u32 920167782, %v725
    %v741 = vshrl.u32 1326507024, %v726
    %v742 = vor.u32 %v740, %v741
    %vm743 = vcmp.lt.s32.totalorder %v724, 1
    %vm744 = vcmp.lt.s32.totalorder %v724, 2
    %vm745 = vcmp.lt.s32.totalorder %v724, 3
    %vm746 = vcmp.lt.s32.totalorder %v724, 4
    %v747 = vsel %vm743, %v727, %v730
    %v748 = vsel %vm746, %v736, 2102212464
    %v749 = vsel %vm745, %v733, %v748
    %v750 = vsel %vm744, %v747, %v749
    %v751 = vsel %vm743, %v730, %v733
    %v752 = vsel %vm746, %v739, 920167782
    %v753 = vsel %vm745, %v736, %v752
    %v754 = vsel %vm744, %v751, %v753
    %v755 = vsel %vm743, %v733, %v736
    %v756 = vsel %vm746, %v742, 1326507024
    %v757 = vsel %vm745, %v739, %v756
    %v758 = vsel %vm744, %v755, %v757
    %v759 = vshll.u32 %v719, 8
    %v760 = vand.u32 %v759, 65535
    %v761 = vshrl.u32 %v759, 16
    %v762 = vand.u32 %v758, 65535
    %v763 = vshrl.u32 %v758, 16
    %v764 = vmul.u32 %v760, %v762
    %v765 = vmul.u32 %v760, %v763
    %v766 = vmul.u32 %v761, %v762
    %v767 = vmul.u32 %v761, %v763
    %v768 = vshll.u32 %v765, 16
    %v769 = vshrl.u32 %v765, 16
    %v770 = vshll.u32 %v766, 16
    %v771 = vshrl.u32 %v766, 16
    %vm772 = vc.u32 %v764, %v768
    %v773 = vsel %vm772, 1, 0
    %v774 = vadd.s32 %v764, %v768
    %v775 = vadd.s32 %v767, %v773
    %vm776 = vc.u32 %v774, %v770
    %v777 = vsel %vm776, 1, 0
    %v778 = vadd.s32 %v774, %v770
    %v779 = vadd.s32 %v775, %v777
    %v780 = vadd.s32 %v779, %v769
    %v781 = vadd.s32 %v780, %v771
    %v782 = vand.u32 %v759, 65535
    %v783 = vshrl.u32 %v759, 16
    %v784 = vand.u32 %v754, 65535
    %v785 = vshrl.u32 %v754, 16
    %v786 = vmul.u32 %v782, %v784
    %v787 = vmul.u32 %v782, %v785
    %v788 = vmul.u32 %v783, %v784
    %v789 = vmul.u32 %v783, %v785
    %v790 = vshll.u32 %v787, 16
    %v791 = vshrl.u32 %v787, 16
    %v792 = vshll.u32 %v788, 16
    %v793 = vshrl.u32 %v788, 16
    %vm794 = vc.u32 %v786, %v790
    %v795 = vsel %vm794, 1, 0
    %v796 = vadd.s32 %v786, %v790
    %v797 = vadd.s32 %v789, %v795
    %vm798 = vc.u32 %v796, %v792
    %v799 = vsel %vm798, 1, 0
    %v800 = vadd.s32 %v796, %v792
    %v801 = vadd.s32 %v797, %v799
    %v802 = vadd.s32 %v801, %v791
    %v803 = vadd.s32 %v802, %v793
    %v804 = vmul.u32 %v759, %v750
    %v805 = vadd.s32 %v781, %v800
    %vm806 = vc.u32 %v781, %v800
    %v807 = vadd.s32 %v803, 1
    %v808 = vsel %vm806, %v807, %v803
    %v809 = vadd.s32 %v804, %v808
    %v810 = vadd.s32 %v809, 536870912
    %v811 = vshrl.u32 %v810, 30
    %v812 = vshll.u32 %v811, 30
    %v813 = vsub.s32 %v809, %v812
    %vm814 = vcmp.lt.s32.totalorder %v813, 0
    %v815 = vsub.s32 0, %v813
    %v816 = vsel %vm814, %v815, %v813
    %v817 = vclz %v816
    %v818 = vsub.s32 %v817, 2
    %vm819 = vcmp.gt.s32.totalorder 0, %v818
    %v820 = vsel %vm819, 0, %v818
    %v821 = vsub.s32 32, %v820
    %v822 = vshll.u32 %v813, %v820
    %v823 = vshrl.u32 %v805, %v821
    %v824 = vor.u32 %v822, %v823
    %v825 = vsub.s32 4294967266, %v820
    %v826 = vadd.s32 %v825, 127
    %v827 = vshll.u32 %v826, 23
    %v828 = vor.u32 4788187, %v827
    %v829 = vand.u32 2147483647, %v828
    %v831 = vcvt.s32.f32 %v824
    %v832 = vmul.f32 %v831, %v829
    %v833 = vxor.u32 %v832, 2147483648
    %v834 = vsel %vm713, %v833, %v832
    %v835 = vsub.s32 4, %v811
    %v836 = vsel %vm713, %v835, %v811
    %v837 = vsel %vm712, %v118, %v834
    %v838 = vsel %vm712, 0, %v836
    %v839 = vmul.f32 %v837, %v837
    %v840 = vmul.f32 %v839, -0.001358992
    %v841 = vadd.f32 %v840, 0.041655596
    %v842 = vmul.f32 %v839, %v841
    %v843 = vadd.f32 %v842, -0.4999988
    %v844 = vmul.f32 %v839, %v843
    %v845 = vadd.f32 1.0, %v844
    %v846 = vmul.f32 %v837, %v837
    %v847 = vmul.f32 %v846, -0.00019511016
    %v848 = vadd.f32 %v847, 0.008332121
    %v849 = vmul.f32 %v846, %v848
    %v850 = vadd.f32 %v849, -0.16666654
    %v851 = vmul.f32 %v846, %v850
    %v852 = vadd.f32 %v851, 1.0
    %v853 = vmul.f32 %v852, %v837
    %vm854 = vweird.f32 %v118
    %v855 = vand.u32 %v838, 3
    %vm856 = vcmp.lt.s32.totalorder %v855, 2
    %vm857 = vcmp.eq.s32.totalorder %v855, 0
    %v858 = vxor.u32 %v853, 2147483648
    %v859 = vsel %vm857, %v845, %v858
    %vm860 = vcmp.eq.s32.totalorder %v855, 2
    %v861 = vxor.u32 %v845, 2147483648
    %v862 = vsel %vm860, %v861, %v853
    %v863 = vsel %vm856, %v859, %v862
    %v864 = vsel %vm854, nan, %v863
    %v865 = vand.u32 2147483647, %v119
    %vm866 = vcmp.le.f32.partialorder %v865, 0.7853982
    %vm867 = vcmp.lt.s32.totalorder %v119, 0
    %v868 = vand.u32 %v119, 2139095040
    %v869 = vshrl.u32 %v868, 23
    %v870 = vsub.s32 %v869, 127
    %v871 = vand.u32 2147483647, %v119
    %v872 = vand.u32 %v871, 8388607
    %v873 = vor.u32 %v872, 8388608
    %v874 = vsub.s32 0, %v873
    %v875 = vadd.s32 %v870, 1
    %vm876 = vcmp.gt.s32.totalorder %v875, 0
    %v877 = vsel %vm876, %v875, 0
    %v878 = vshrl.u32 %v877, 5
    %v879 = vand.u32 %v877, 31
    %v880 = vsub.s32 32, %v879
    %v881 = vshrl.u32 683565275, %v880
    %v882 = vshll.u32 683565275, %v879
    %v883 = vshrl.u32 2475754826, %v880
    %v884 = vor.u32 %v882, %v883
    %v885 = vshll.u32 2475754826, %v879
    %v886 = vshrl.u32 2131351028, %v880
    %v887 = vor.u32 %v885, %v886
    %v888 = vshll.u32 2131351028, %v879
    %v889 = vshrl.u32 2102212464, %v880
    %v890 = vor.u32 %v888, %v889
    %v891 = vshll.u32 2102212464, %v879
    %v892 = vshrl.u32 920167782, %v880
    %v893 = vor.u32 %v891, %v892
    %v894 = vshll.u32 920167782, %v879
    %v895 = vshrl.u32 1326507024, %v880
    %v896 = vor.u32 %v894, %v895
    %vm897 = vcmp.lt.s32.totalorder %v878, 1
    %vm898 = vcmp.lt.s32.totalorder %v878, 2
    %vm899 = vcmp.lt.s32.totalorder %v878, 3
    %vm900 = vcmp.lt.s32.totalorder %v878, 4
    %v901 = vsel %vm897, %v881, %v884
    %v902 = vsel %vm900, %v890, 2102212464
    %v903 = vsel %vm899, %v887, %v902
    %v904 = vsel %vm898, %v901, %v903
    %v905 = vsel %vm897, %v884, %v887
    %v906 = vsel %vm900, %v893, 920167782
    %v907 = vsel %vm899, %v890, %v906
    %v908 = vsel %vm898, %v905, %v907
    %v909 = vsel %vm897, %v887, %v890
    %v910 = vsel %vm900, %v896, 1326507024
    %v911 = vsel %vm899, %v893, %v910
    %v912 = vsel %vm898, %v909, %v911
    %v913 = vshll.u32 %v873, 8
    %v914 = vand.u32 %v913, 65535
    %v915 = vshrl.u32 %v913, 16
    %v916 = vand.u32 %v912, 65535
    %v917 = vshrl.u32 %v912, 16
    %v918 = vmul.u32 %v914, %v916
    %v919 = vmul.u32 %v914, %v917
    %v920 = vmul.u32 %v915, %v916
    %v921 = vmul.u32 %v915, %v917
    %v922 = vshll.u32 %v919, 16
    %v923 = vshrl.u32 %v919, 16
    %v924 = vshll.u32 %v920, 16
    %v925 = vshrl.u32 %v920, 16
    %vm926 = vc.u32 %v918, %v922
    %v927 = vsel %vm926, 1, 0
    %v928 = vadd.s32 %v918, %v922
    %v929 = vadd.s32 %v921, %v927
    %vm930 = vc.u32 %v928, %v924
    %v931 = vsel %vm930, 1, 0
    %v932 = vadd.s32 %v928, %v924
    %v933 = vadd.s32 %v929, %v931
    %v934 = vadd.s32 %v933, %v923
    %v935 = vadd.s32 %v934, %v925
    %v936 = vand.u32 %v913, 65535
    %v937 = vshrl.u32 %v913, 16
    %v938 = vand.u32 %v908, 65535
    %v939 = vshrl.u32 %v908, 16
    %v940 = vmul.u32 %v936, %v938
    %v941 = vmul.u32 %v936, %v939
    %v942 = vmul.u32 %v937, %v938
    %v943 = vmul.u32 %v937, %v939
    %v944 = vshll.u32 %v941, 16
    %v945 = vshrl.u32 %v941, 16
    %v946 = vshll.u32 %v942, 16
    %v947 = vshrl.u32 %v942, 16
    %vm948 = vc.u32 %v940, %v944
    %v949 = vsel %vm948, 1, 0
    %v950 = vadd.s32 %v940, %v944
    %v951 = vadd.s32 %v943, %v949
    %vm952 = vc.u32 %v950, %v946
    %v953 = vsel %vm952, 1, 0
    %v954 = vadd.s32 %v950, %v946
    %v955 = vadd.s32 %v951, %v953
    %v956 = vadd.s32 %v955, %v945
    %v957 = vadd.s32 %v956, %v947
    %v958 = vmul.u32 %v913, %v904
    %v959 = vadd.s32 %v935, %v954
    %vm960 = vc.u32 %v935, %v954
    %v961 = vadd.s32 %v957, 1
    %v962 = vsel %vm960, %v961, %v957
    %v963 = vadd.s32 %v958, %v962
    %v964 = vadd.s32 %v963, 536870912
    %v965 = vshrl.u32 %v964, 30
    %v966 = vshll.u32 %v965, 30
    %v967 = vsub.s32 %v963, %v966
    %vm968 = vcmp.lt.s32.totalorder %v967, 0
    %v969 = vsub.s32 0, %v967
    %v970 = vsel %vm968, %v969, %v967
    %v971 = vclz %v970
    %v972 = vsub.s32 %v971, 2
    %vm973 = vcmp.gt.s32.totalorder 0, %v972
    %v974 = vsel %vm973, 0, %v972
    %v975 = vsub.s32 32, %v974
    %v976 = vshll.u32 %v967, %v974
    %v977 = vshrl.u32 %v959, %v975
    %v978 = vor.u32 %v976, %v977
    %v979 = vsub.s32 4294967266, %v974
    %v980 = vadd.s32 %v979, 127
    %v981 = vshll.u32 %v980, 23
    %v982 = vor.u32 4788187, %v981
    %v983 = vand.u32 2147483647, %v982
    %v985 = vcvt.s32.f32 %v978
    %v986 = vmul.f32 %v985, %v983
    %v987 = vxor.u32 %v986, 2147483648
    %v988 = vsel %vm867, %v987, %v986
    %v989 = vsub.s32 4, %v965
    %v990 = vsel %vm867, %v989, %v965
    %v991 = vsel %vm866, %v119, %v988
    %v992 = vsel %vm866, 0, %v990
    %v993 = vmul.f32 %v991, %v991
    %v994 = vmul.f32 %v993, -0.001358992
    %v995 = vadd.f32 %v994, 0.041655596
    %v996 = vmul.f32 %v993, %v995
    %v997 = vadd.f32 %v996, -0.4999988
    %v998 = vmul.f32 %v993, %v997
    %v999 = vadd.f32 1.0, %v998
    %v1000 = vmul.f32 %v991, %v991
    %v1001 = vmul.f32 %v1000, -0.00019511016
    %v1002 = vadd.f32 %v1001, 0.008332121
    %v1003 = vmul.f32 %v1000, %v1002
    %v1004 = vadd.f32 %v1003, -0.16666654
    %v1005 = vmul.f32 %v1000, %v1004
    %v1006 = vadd.f32 %v1005, 1.0
    %v1007 = vmul.f32 %v1006, %v991
    %vm1008 = vweird.f32 %v119
    %v1009 = vand.u32 %v992, 3
    %vm1010 = vcmp.lt.s32.totalorder %v1009, 2
    %vm1011 = vcmp.eq.s32.totalorder %v1009, 0
    %v1012 = vxor.u32 %v1007, 2147483648
    %v1013 = vsel %vm1011, %v999, %v1012
    %vm1014 = vcmp.eq.s32.totalorder %v1009, 2
    %v1015 = vxor.u32 %v999, 2147483648
    %v1016 = vsel %vm1014, %v1015, %v1007
    %v1017 = vsel %vm1010, %v1013, %v1016
    %v1018 = vsel %vm1008, nan, %v1017
    %v1019 = vand.u32 2147483647, %v120
    %vm1020 = vcmp.le.f32.partialorder %v1019, 0.7853982
    %vm1021 = vcmp.lt.s32.totalorder %v120, 0
    %v1022 = vand.u32 %v120, 2139095040
    %v1023 = vshrl.u32 %v1022, 23
    %v1024 = vsub.s32 %v1023, 127
    %v1025 = vand.u32 2147483647, %v120
    %v1026 = vand.u32 %v1025, 8388607
    %v1027 = vor.u32 %v1026, 8388608
    %v1028 = vsub.s32 0, %v1027
    %v1029 = vadd.s32 %v1024, 1
    %vm1030 = vcmp.gt.s32.totalorder %v1029, 0
    %v1031 = vsel %vm1030, %v1029, 0
    %v1032 = vshrl.u32 %v1031, 5
    %v1033 = vand.u32 %v1031, 31
    %v1034 = vsub.s32 32, %v1033
    %v1035 = vshrl.u32 683565275, %v1034
    %v1036 = vshll.u32 683565275, %v1033
    %v1037 = vshrl.u32 2475754826, %v1034
    %v1038 = vor.u32 %v1036, %v1037
    %v1039 = vshll.u32 2475754826, %v1033
    %v1040 = vshrl.u32 2131351028, %v1034
    %v1041 = vor.u32 %v1039, %v1040
    %v1042 = vshll.u32 2131351028, %v1033
    %v1043 = vshrl.u32 2102212464, %v1034
    %v1044 = vor.u32 %v1042, %v1043
    %v1045 = vshll.u32 2102212464, %v1033
    %v1046 = vshrl.u32 920167782, %v1034
    %v1047 = vor.u32 %v1045, %v1046
    %v1048 = vshll.u32 920167782, %v1033
    %v1049 = vshrl.u32 1326507024, %v1034
    %v1050 = vor.u32 %v1048, %v1049
    %vm1051 = vcmp.lt.s32.totalorder %v1032, 1
    %vm1052 = vcmp.lt.s32.totalorder %v1032, 2
    %vm1053 = vcmp.lt.s32.totalorder %v1032, 3
    %vm1054 = vcmp.lt.s32.totalorder %v1032, 4
    %v1055 = vsel %vm1051, %v1035, %v1038
    %v1056 = vsel %vm1054, %v1044, 2102212464
    %v1057 = vsel %vm1053, %v1041, %v1056
    %v1058 = vsel %vm1052, %v1055, %v1057
    %v1059 = vsel %vm1051, %v1038, %v1041
    %v1060 = vsel %vm1054, %v1047, 920167782
    %v1061 = vsel %vm1053, %v1044, %v1060
    %v1062 = vsel %vm1052, %v1059, %v1061
    %v1063 = vsel %vm1051, %v1041, %v1044
    %v1064 = vsel %vm1054, %v1050, 1326507024
    %v1065 = vsel %vm1053, %v1047, %v1064
    %v1066 = vsel %vm1052, %v1063, %v1065
    %v1067 = vshll.u32 %v1027, 8
    %v1068 = vand.u32 %v1067, 65535
    %v1069 = vshrl.u32 %v1067, 16
    %v1070 = vand.u32 %v1066, 65535
    %v1071 = vshrl.u32 %v1066, 16
    %v1072 = vmul.u32 %v1068, %v1070
    %v1073 = vmul.u32 %v1068, %v1071
    %v1074 = vmul.u32 %v1069, %v1070
    %v1075 = vmul.u32 %v1069, %v1071
    %v1076 = vshll.u32 %v1073, 16
    %v1077 = vshrl.u32 %v1073, 16
    %v1078 = vshll.u32 %v1074, 16
    %v1079 = vshrl.u32 %v1074, 16
    %vm1080 = vc.u32 %v1072, %v1076
    %v1081 = vsel %vm1080, 1, 0
    %v1082 = vadd.s32 %v1072, %v1076
    %v1083 = vadd.s32 %v1075, %v1081
    %vm1084 = vc.u32 %v1082, %v1078
    %v1085 = vsel %vm1084, 1, 0
    %v1086 = vadd.s32 %v1082, %v1078
    %v1087 = vadd.s32 %v1083, %v1085
    %v1088 = vadd.s32 %v1087, %v1077
    %v1089 = vadd.s32 %v1088, %v1079
    %v1090 = vand.u32 %v1067, 65535
    %v1091 = vshrl.u32 %v1067, 16
    %v1092 = vand.u32 %v1062, 65535
    %v1093 = vshrl.u32 %v1062, 16
    %v1094 = vmul.u32 %v1090, %v1092
    %v1095 = vmul.u32 %v1090, %v1093
    %v1096 = vmul.u32 %v1091, %v1092
    %v1097 = vmul.u32 %v1091, %v1093
    %v1098 = vshll.u32 %v1095, 16
    %v1099 = vshrl.u32 %v1095, 16
    %v1100 = vshll.u32 %v1096, 16
    %v1101 = vshrl.u32 %v1096, 16
    %vm1102 = vc.u32 %v1094, %v1098
    %v1103 = vsel %vm1102, 1, 0
    %v1104 = vadd.s32 %v1094, %v1098
    %v1105 = vadd.s32 %v1097, %v1103
    %vm1106 = vc.u32 %v1104, %v1100
    %v1107 = vsel %vm1106, 1, 0
    %v1108 = vadd.s32 %v1104, %v1100
    %v1109 = vadd.s32 %v1105, %v1107
    %v1110 = vadd.s32 %v1109, %v1099
    %v1111 = vadd.s32 %v1110, %v1101
    %v1112 = vmul.u32 %v1067, %v1058
    %v1113 = vadd.s32 %v1089, %v1108
    %vm1114 = vc.u32 %v1089, %v1108
    %v1115 = vadd.s32 %v1111, 1
    %v1116 = vsel %vm1114, %v1115, %v1111
    %v1117 = vadd.s32 %v1112, %v1116
    %v1118 = vadd.s32 %v1117, 536870912
    %v1119 = vshrl.u32 %v1118, 30
    %v1120 = vshll.u32 %v1119, 30
    %v1121 = vsub.s32 %v1117, %v1120
    %vm1122 = vcmp.lt.s32.totalorder %v1121, 0
    %v1123 = vsub.s32 0, %v1121
    %v1124 = vsel %vm1122, %v1123, %v1121
    %v1125 = vclz %v1124
    %v1126 = vsub.s32 %v1125, 2
    %vm1127 = vcmp.gt.s32.totalorder 0, %v1126
    %v1128 = vsel %vm1127, 0, %v1126
    %v1129 = vsub.s32 32, %v1128
    %v1130 = vshll.u32 %v1121, %v1128
    %v1131 = vshrl.u32 %v1113, %v1129
    %v1132 = vor.u32 %v1130, %v1131
    %v1133 = vsub.s32 4294967266, %v1128
    %v1134 = vadd.s32 %v1133, 127
    %v1135 = vshll.u32 %v1134, 23
    %v1136 = vor.u32 4788187, %v1135
    %v1137 = vand.u32 2147483647, %v1136
    %v1139 = vcvt.s32.f32 %v1132
    %v1140 = vmul.f32 %v1139, %v1137
    %v1141 = vxor.u32 %v1140, 2147483648
    %v1142 = vsel %vm1021, %v1141, %v1140
    %v1143 = vsub.s32 4, %v1119
    %v1144 = vsel %vm1021, %v1143, %v1119
    %v1145 = vsel %vm1020, %v120, %v1142
    %v1146 = vsel %vm1020, 0, %v1144
    %v1147 = vmul.f32 %v1145, %v1145
    %v1148 = vmul.f32 %v1147, -0.001358992
    %v1149 = vadd.f32 %v1148, 0.041655596
    %v1150 = vmul.f32 %v1147, %v1149
    %v1151 = vadd.f32 %v1150, -0.4999988
    %v1152 = vmul.f32 %v1147, %v1151
    %v1153 = vadd.f32 1.0, %v1152
    %v1154 = vmul.f32 %v1145, %v1145
    %v1155 = vmul.f32 %v1154, -0.00019511016
    %v1156 = vadd.f32 %v1155, 0.008332121
    %v1157 = vmul.f32 %v1154, %v1156
    %v1158 = vadd.f32 %v1157, -0.16666654
    %v1159 = vmul.f32 %v1154, %v1158
    %v1160 = vadd.f32 %v1159, 1.0
    %v1161 = vmul.f32 %v1160, %v1145
    %vm1162 = vweird.f32 %v120
    %v1163 = vand.u32 %v1146, 3
    %vm1164 = vcmp.lt.s32.totalorder %v1163, 2
    %vm1165 = vcmp.eq.s32.totalorder %v1163, 0
    %v1166 = vxor.u32 %v1161, 2147483648
    %v1167 = vsel %vm1165, %v1153, %v1166
    %vm1168 = vcmp.eq.s32.totalorder %v1163, 2
    %v1169 = vxor.u32 %v1153, 2147483648
    %v1170 = vsel %vm1168, %v1169, %v1161
    %v1171 = vsel %vm1164, %v1167, %v1170
    %v1172 = vsel %vm1162, nan, %v1171
    %v1173 = vand.u32 2147483647, %v121
    %vm1174 = vcmp.le.f32.partialorder %v1173, 0.7853982
    %vm1175 = vcmp.lt.s32.totalorder %v121, 0
    %v1176 = vand.u32 %v121, 2139095040
    %v1177 = vshrl.u32 %v1176, 23
    %v1178 = vsub.s32 %v1177, 127
    %v1179 = vand.u32 2147483647, %v121
    %v1180 = vand.u32 %v1179, 8388607
    %v1181 = vor.u32 %v1180, 8388608
    %v1182 = vsub.s32 0, %v1181
    %v1183 = vadd.s32 %v1178, 1
    %vm1184 = vcmp.gt.s32.totalorder %v1183, 0
    %v1185 = vsel %vm1184, %v1183, 0
    %v1186 = vshrl.u32 %v1185, 5
    %v1187 = vand.u32 %v1185, 31
    %v1188 = vsub.s32 32, %v1187
    %v1189 = vshrl.u32 683565275, %v1188
    %v1190 = vshll.u32 683565275, %v1187
    %v1191 = vshrl.u32 2475754826, %v1188
    %v1192 = vor.u32 %v1190, %v1191
    %v1193 = vshll.u32 2475754826, %v1187
    %v1194 = vshrl.u32 2131351028, %v1188
    %v1195 = vor.u32 %v1193, %v1194
    %v1196 = vshll.u32 2131351028, %v1187
    %v1197 = vshrl.u32 2102212464, %v1188
    %v1198 = vor.u32 %v1196, %v1197
    %v1199 = vshll.u32 2102212464, %v1187
    %v1200 = vshrl.u32 920167782, %v1188
    %v1201 = vor.u32 %v1199, %v1200
    %v1202 = vshll.u32 920167782, %v1187
    %v1203 = vshrl.u32 1326507024, %v1188
    %v1204 = vor.u32 %v1202, %v1203
    %vm1205 = vcmp.lt.s32.totalorder %v1186, 1
    %vm1206 = vcmp.lt.s32.totalorder %v1186, 2
    %vm1207 = vcmp.lt.s32.totalorder %v1186, 3
    %vm1208 = vcmp.lt.s32.totalorder %v1186, 4
    %v1209 = vsel %vm1205, %v1189, %v1192
    %v1210 = vsel %vm1208, %v1198, 2102212464
    %v1211 = vsel %vm1207, %v1195, %v1210
    %v1212 = vsel %vm1206, %v1209, %v1211
    %v1213 = vsel %vm1205, %v1192, %v1195
    %v1214 = vsel %vm1208, %v1201, 920167782
    %v1215 = vsel %vm1207, %v1198, %v1214
    %v1216 = vsel %vm1206, %v1213, %v1215
    %v1217 = vsel %vm1205, %v1195, %v1198
    %v1218 = vsel %vm1208, %v1204, 1326507024
    %v1219 = vsel %vm1207, %v1201, %v1218
    %v1220 = vsel %vm1206, %v1217, %v1219
    %v1221 = vshll.u32 %v1181, 8
    %v1222 = vand.u32 %v1221, 65535
    %v1223 = vshrl.u32 %v1221, 16
    %v1224 = vand.u32 %v1220, 65535
    %v1225 = vshrl.u32 %v1220, 16
    %v1226 = vmul.u32 %v1222, %v1224
    %v1227 = vmul.u32 %v1222, %v1225
    %v1228 = vmul.u32 %v1223, %v1224
    %v1229 = vmul.u32 %v1223, %v1225
    %v1230 = vshll.u32 %v1227, 16
    %v1231 = vshrl.u32 %v1227, 16
    %v1232 = vshll.u32 %v1228, 16
    %v1233 = vshrl.u32 %v1228, 16
    %vm1234 = vc.u32 %v1226, %v1230
    %v1235 = vsel %vm1234, 1, 0
    %v1236 = vadd.s32 %v1226, %v1230
    %v1237 = vadd.s32 %v1229, %v1235
    %vm1238 = vc.u32 %v1236, %v1232
    %v1239 = vsel %vm1238, 1, 0
    %v1240 = vadd.s32 %v1236, %v1232
    %v1241 = vadd.s32 %v1237, %v1239
    %v1242 = vadd.s32 %v1241, %v1231
    %v1243 = vadd.s32 %v1242, %v1233
    %v1244 = vand.u32 %v1221, 65535
    %v1245 = vshrl.u32 %v1221, 16
    %v1246 = vand.u32 %v1216, 65535
    %v1247 = vshrl.u32 %v1216, 16
    %v1248 = vmul.u32 %v1244, %v1246
    %v1249 = vmul.u32 %v1244, %v1247
    %v1250 = vmul.u32 %v1245, %v1246
    %v1251 = vmul.u32 %v1245, %v1247
    %v1252 = vshll.u32 %v1249, 16
    %v1253 = vshrl.u32 %v1249, 16
    %v1254 = vshll.u32 %v1250, 16
    %v1255 = vshrl.u32 %v1250, 16
    %vm1256 = vc.u32 %v1248, %v1252
    %v1257 = vsel %vm1256, 1, 0
    %v1258 = vadd.s32 %v1248, %v1252
    %v1259 = vadd.s32 %v1251, %v1257
    %vm1260 = vc.u32 %v1258, %v1254
    %v1261 = vsel %vm1260, 1, 0
    %v1262 = vadd.s32 %v1258, %v1254
    %v1263 = vadd.s32 %v1259, %v1261
    %v1264 = vadd.s32 %v1263, %v1253
    %v1265 = vadd.s32 %v1264, %v1255
    %v1266 = vmul.u32 %v1221, %v1212
    %v1267 = vadd.s32 %v1243, %v1262
    %vm1268 = vc.u32 %v1243, %v1262
    %v1269 = vadd.s32 %v1265, 1
    %v1270 = vsel %vm1268, %v1269, %v1265
    %v1271 = vadd.s32 %v1266, %v1270
    %v1272 = vadd.s32 %v1271, 536870912
    %v1273 = vshrl.u32 %v1272, 30
    %v1274 = vshll.u32 %v1273, 30
    %v1275 = vsub.s32 %v1271, %v1274
    %vm1276 = vcmp.lt.s32.totalorder %v1275, 0
    %v1277 = vsub.s32 0, %v1275
    %v1278 = vsel %vm1276, %v1277, %v1275
    %v1279 = vclz %v1278
    %v1280 = vsub.s32 %v1279, 2
    %vm1281 = vcmp.gt.s32.totalorder 0, %v1280
    %v1282 = vsel %vm1281, 0, %v1280
    %v1283 = vsub.s32 32, %v1282
    %v1284 = vshll.u32 %v1275, %v1282
    %v1285 = vshrl.u32 %v1267, %v1283
    %v1286 = vor.u32 %v1284, %v1285
    %v1287 = vsub.s32 4294967266, %v1282
    %v1288 = vadd.s32 %v1287, 127
    %v1289 = vshll.u32 %v1288, 23
    %v1290 = vor.u32 4788187, %v1289
    %v1291 = vand.u32 2147483647, %v1290
    %v1293 = vcvt.s32.f32 %v1286
    %v1294 = vmul.f32 %v1293, %v1291
    %v1295 = vxor.u32 %v1294, 2147483648
    %v1296 = vsel %vm1175, %v1295, %v1294
    %v1297 = vsub.s32 4, %v1273
    %v1298 = vsel %vm1175, %v1297, %v1273
    %v1299 = vsel %vm1174, %v121, %v1296
    %v1300 = vsel %vm1174, 0, %v1298
    %v1301 = vmul.f32 %v1299, %v1299
    %v1302 = vmul.f32 %v1301, -0.001358992
    %v1303 = vadd.f32 %v1302, 0.041655596
    %v1304 = vmul.f32 %v1301, %v1303
    %v1305 = vadd.f32 %v1304, -0.4999988
    %v1306 = vmul.f32 %v1301, %v1305
    %v1307 = vadd.f32 1.0, %v1306
    %v1308 = vmul.f32 %v1299, %v1299
    %v1309 = vmul.f32 %v1308, -0.00019511016
    %v1310 = vadd.f32 %v1309, 0.008332121
    %v1311 = vmul.f32 %v1308, %v1310
    %v1312 = vadd.f32 %v1311, -0.16666654
    %v1313 = vmul.f32 %v1308, %v1312
    %v1314 = vadd.f32 %v1313, 1.0
    %v1315 = vmul.f32 %v1314, %v1299
    %vm1316 = vweird.f32 %v121
    %v1317 = vand.u32 %v1300, 3
    %vm1318 = vcmp.lt.s32.totalorder %v1317, 2
    %vm1319 = vcmp.eq.s32.totalorder %v1317, 0
    %v1320 = vxor.u32 %v1315, 2147483648
    %v1321 = vsel %vm1319, %v1307, %v1320
    %vm1322 = vcmp.eq.s32.totalorder %v1317, 2
    %v1323 = vxor.u32 %v1307, 2147483648
    %v1324 = vsel %vm1322, %v1323, %v1315
    %v1325 = vsel %vm1318, %v1321, %v1324
    %v1326 = vsel %vm1316, nan, %v1325
    %v1327 = vand.u32 2147483647, %v122
    %vm1328 = vcmp.le.f32.partialorder %v1327, 0.7853982
    %vm1329 = vcmp.lt.s32.totalorder %v122, 0
    %v1330 = vand.u32 %v122, 2139095040
    %v1331 = vshrl.u32 %v1330, 23
    %v1332 = vsub.s32 %v1331, 127
    %v1333 = vand.u32 2147483647, %v122
    %v1334 = vand.u32 %v1333, 8388607
    %v1335 = vor.u32 %v1334, 8388608
    %v1336 = vsub.s32 0, %v1335
    %v1337 = vadd.s32 %v1332, 1
    %vm1338 = vcmp.gt.s32.totalorder %v1337, 0
    %v1339 = vsel %vm1338, %v1337, 0
    %v1340 = vshrl.u32 %v1339, 5
    %v1341 = vand.u32 %v1339, 31
    %v1342 = vsub.s32 32, %v1341
    %v1343 = vshrl.u32 683565275, %v1342
    %v1344 = vshll.u32 683565275, %v1341
    %v1345 = vshrl.u32 2475754826, %v1342
    %v1346 = vor.u32 %v1344, %v1345
    %v1347 = vshll.u32 2475754826, %v1341
    %v1348 = vshrl.u32 2131351028, %v1342
    %v1349 = vor.u32 %v1347, %v1348
    %v1350 = vshll.u32 2131351028, %v1341
    %v1351 = vshrl.u32 2102212464, %v1342
    %v1352 = vor.u32 %v1350, %v1351
    %v1353 = vshll.u32 2102212464, %v1341
    %v1354 = vshrl.u32 920167782, %v1342
    %v1355 = vor.u32 %v1353, %v1354
    %v1356 = vshll.u32 920167782, %v1341
    %v1357 = vshrl.u32 1326507024, %v1342
    %v1358 = vor.u32 %v1356, %v1357
    %vm1359 = vcmp.lt.s32.totalorder %v1340, 1
    %vm1360 = vcmp.lt.s32.totalorder %v1340, 2
    %vm1361 = vcmp.lt.s32.totalorder %v1340, 3
    %vm1362 = vcmp.lt.s32.totalorder %v1340, 4
    %v1363 = vsel %vm1359, %v1343, %v1346
    %v1364 = vsel %vm1362, %v1352, 2102212464
    %v1365 = vsel %vm1361, %v1349, %v1364
    %v1366 = vsel %vm1360, %v1363, %v1365
    %v1367 = vsel %vm1359, %v1346, %v1349
    %v1368 = vsel %vm1362, %v1355, 920167782
    %v1369 = vsel %vm1361, %v1352, %v1368
    %v1370 = vsel %vm1360, %v1367, %v1369
    %v1371 = vsel %vm1359, %v1349, %v1352
    %v1372 = vsel %vm1362, %v1358, 1326507024
    %v1373 = vsel %vm1361, %v1355, %v1372
    %v1374 = vsel %vm1360, %v1371, %v1373
    %v1375 = vshll.u32 %v1335, 8
    %v1376 = vand.u32 %v1375, 65535
    %v1377 = vshrl.u32 %v1375, 16
    %v1378 = vand.u32 %v1374, 65535
    %v1379 = vshrl.u32 %v1374, 16
    %v1380 = vmul.u32 %v1376, %v1378
    %v1381 = vmul.u32 %v1376, %v1379
    %v1382 = vmul.u32 %v1377, %v1378
    %v1383 = vmul.u32 %v1377, %v1379
    %v1384 = vshll.u32 %v1381, 16
    %v1385 = vshrl.u32 %v1381, 16
    %v1386 = vshll.u32 %v1382, 16
    %v1387 = vshrl.u32 %v1382, 16
    %vm1388 = vc.u32 %v1380, %v1384
    %v1389 = vsel %vm1388, 1, 0
    %v1390 = vadd.s32 %v1380, %v1384
    %v1391 = vadd.s32 %v1383, %v1389
    %vm1392 = vc.u32 %v1390, %v1386
    %v1393 = vsel %vm1392, 1, 0
    %v1394 = vadd.s32 %v1390, %v1386
    %v1395 = vadd.s32 %v1391, %v1393
    %v1396 = vadd.s32 %v1395, %v1385
    %v1397 = vadd.s32 %v1396, %v1387
    %v1398 = vand.u32 %v1375, 65535
    %v1399 = vshrl.u32 %v1375, 16
    %v1400 = vand.u32 %v1370, 65535
    %v1401 = vshrl.u32 %v1370, 16
    %v1402 = vmul.u32 %v1398, %v1400
    %v1403 = vmul.u32 %v1398, %v1401
    %v1404 = vmul.u32 %v1399, %v1400
    %v1405 = vmul.u32 %v1399, %v1401
    %v1406 = vshll.u32 %v1403, 16
    %v1407 = vshrl.u32 %v1403, 16
    %v1408 = vshll.u32 %v1404, 16
    %v1409 = vshrl.u32 %v1404, 16
    %vm1410 = vc.u32 %v1402, %v1406
    %v1411 = vsel %vm1410, 1, 0
    %v1412 = vadd.s32 %v1402, %v1406
    %v1413 = vadd.s32 %v1405, %v1411
    %vm1414 = vc.u32 %v1412, %v1408
    %v1415 = vsel %vm1414, 1, 0
    %v1416 = vadd.s32 %v1412, %v1408
    %v1417 = vadd.s32 %v1413, %v1415
    %v1418 = vadd.s32 %v1417, %v1407
    %v1419 = vadd.s32 %v1418, %v1409
    %v1420 = vmul.u32 %v1375, %v1366
    %v1421 = vadd.s32 %v1397, %v1416
    %vm1422 = vc.u32 %v1397, %v1416
    %v1423 = vadd.s32 %v1419, 1
    %v1424 = vsel %vm1422, %v1423, %v1419
    %v1425 = vadd.s32 %v1420, %v1424
    %v1426 = vadd.s32 %v1425, 536870912
    %v1427 = vshrl.u32 %v1426, 30
    %v1428 = vshll.u32 %v1427, 30
    %v1429 = vsub.s32 %v1425, %v1428
    %vm1430 = vcmp.lt.s32.totalorder %v1429, 0
    %v1431 = vsub.s32 0, %v1429
    %v1432 = vsel %vm1430, %v1431, %v1429
    %v1433 = vclz %v1432
    %v1434 = vsub.s32 %v1433, 2
    %vm1435 = vcmp.gt.s32.totalorder 0, %v1434
    %v1436 = vsel %vm1435, 0, %v1434
    %v1437 = vsub.s32 32, %v1436
    %v1438 = vshll.u32 %v1429, %v1436
    %v1439 = vshrl.u32 %v1421, %v1437
    %v1440 = vor.u32 %v1438, %v1439
    %v1441 = vsub.s32 4294967266, %v1436
    %v1442 = vadd.s32 %v1441, 127
    %v1443 = vshll.u32 %v1442, 23
    %v1444 = vor.u32 4788187, %v1443
    %v1445 = vand.u32 2147483647, %v1444
    %v1447 = vcvt.s32.f32 %v1440
    %v1448 = vmul.f32 %v1447, %v1445
    %v1449 = vxor.u32 %v1448, 2147483648
    %v1450 = vsel %vm1329, %v1449, %v1448
    %v1451 = vsub.s32 4, %v1427
    %v1452 = vsel %vm1329, %v1451, %v1427
    %v1453 = vsel %vm1328, %v122, %v1450
    %v1454 = vsel %vm1328, 0, %v1452
    %v1455 = vmul.f32 %v1453, %v1453
    %v1456 = vmul.f32 %v1455, -0.001358992
    %v1457 = vadd.f32 %v1456, 0.041655596
    %v1458 = vmul.f32 %v1455, %v1457
    %v1459 = vadd.f32 %v1458, -0.4999988
    %v1460 = vmul.f32 %v1455, %v1459
    %v1461 = vadd.f32 1.0, %v1460
    %v1462 = vmul.f32 %v1453, %v1453
    %v1463 = vmul.f32 %v1462, -0.00019511016
    %v1464 = vadd.f32 %v1463, 0.008332121
    %v1465 = vmul.f32 %v1462, %v1464
    %v1466 = vadd.f32 %v1465, -0.16666654
    %v1467 = vmul.f32 %v1462, %v1466
    %v1468 = vadd.f32 %v1467, 1.0
    %v1469 = vmul.f32 %v1468, %v1453
    %vm1470 = vweird.f32 %v122
    %v1471 = vand.u32 %v1454, 3
    %vm1472 = vcmp.lt.s32.totalorder %v1471, 2
    %vm1473 = vcmp.eq.s32.totalorder %v1471, 0
    %v1474 = vxor.u32 %v1469, 2147483648
    %v1475 = vsel %vm1473, %v1461, %v1474
    %vm1476 = vcmp.eq.s32.totalorder %v1471, 2
    %v1477 = vxor.u32 %v1461, 2147483648
    %v1478 = vsel %vm1476, %v1477, %v1469
    %v1479 = vsel %vm1472, %v1475, %v1478
    %v1480 = vsel %vm1470, nan, %v1479
    %v1481 = vand.u32 2147483647, %v123
    %vm1482 = vcmp.le.f32.partialorder %v1481, 0.7853982
    %vm1483 = vcmp.lt.s32.totalorder %v123, 0
    %v1484 = vand.u32 %v123, 2139095040
    %v1485 = vshrl.u32 %v1484, 23
    %v1486 = vsub.s32 %v1485, 127
    %v1487 = vand.u32 2147483647, %v123
    %v1488 = vand.u32 %v1487, 8388607
    %v1489 = vor.u32 %v1488, 8388608
    %v1490 = vsub.s32 0, %v1489
    %v1491 = vadd.s32 %v1486, 1
    %vm1492 = vcmp.gt.s32.totalorder %v1491, 0
    %v1493 = vsel %vm1492, %v1491, 0
    %v1494 = vshrl.u32 %v1493, 5
    %v1495 = vand.u32 %v1493, 31
    %v1496 = vsub.s32 32, %v1495
    %v1497 = vshrl.u32 683565275, %v1496
    %v1498 = vshll.u32 683565275, %v1495
    %v1499 = vshrl.u32 2475754826, %v1496
    %v1500 = vor.u32 %v1498, %v1499
    %v1501 = vshll.u32 2475754826, %v1495
    %v1502 = vshrl.u32 2131351028, %v1496
    %v1503 = vor.u32 %v1501, %v1502
    %v1504 = vshll.u32 2131351028, %v1495
    %v1505 = vshrl.u32 2102212464, %v1496
    %v1506 = vor.u32 %v1504, %v1505
    %v1507 = vshll.u32 2102212464, %v1495
    %v1508 = vshrl.u32 920167782, %v1496
    %v1509 = vor.u32 %v1507, %v1508
    %v1510 = vshll.u32 920167782, %v1495
    %v1511 = vshrl.u32 1326507024, %v1496
    %v1512 = vor.u32 %v1510, %v1511
    %vm1513 = vcmp.lt.s32.totalorder %v1494, 1
    %vm1514 = vcmp.lt.s32.totalorder %v1494, 2
    %vm1515 = vcmp.lt.s32.totalorder %v1494, 3
    %vm1516 = vcmp.lt.s32.totalorder %v1494, 4
    %v1517 = vsel %vm1513, %v1497, %v1500
    %v1518 = vsel %vm1516, %v1506, 2102212464
    %v1519 = vsel %vm1515, %v1503, %v1518
    %v1520 = vsel %vm1514, %v1517, %v1519
    %v1521 = vsel %vm1513, %v1500, %v1503
    %v1522 = vsel %vm1516, %v1509, 920167782
    %v1523 = vsel %vm1515, %v1506, %v1522
    %v1524 = vsel %vm1514, %v1521, %v1523
    %v1525 = vsel %vm1513, %v1503, %v1506
    %v1526 = vsel %vm1516, %v1512, 1326507024
    %v1527 = vsel %vm1515, %v1509, %v1526
    %v1528 = vsel %vm1514, %v1525, %v1527
    %v1529 = vshll.u32 %v1489, 8
    %v1530 = vand.u32 %v1529, 65535
    %v1531 = vshrl.u32 %v1529, 16
    %v1532 = vand.u32 %v1528, 65535
    %v1533 = vshrl.u32 %v1528, 16
    %v1534 = vmul.u32 %v1530, %v1532
    %v1535 = vmul.u32 %v1530, %v1533
    %v1536 = vmul.u32 %v1531, %v1532
    %v1537 = vmul.u32 %v1531, %v1533
    %v1538 = vshll.u32 %v1535, 16
    %v1539 = vshrl.u32 %v1535, 16
    %v1540 = vshll.u32 %v1536, 16
    %v1541 = vshrl.u32 %v1536, 16
    %vm1542 = vc.u32 %v1534, %v1538
    %v1543 = vsel %vm1542, 1, 0
    %v1544 = vadd.s32 %v1534, %v1538
    %v1545 = vadd.s32 %v1537, %v1543
    %vm1546 = vc.u32 %v1544, %v1540
    %v1547 = vsel %vm1546, 1, 0
    %v1548 = vadd.s32 %v1544, %v1540
    %v1549 = vadd.s32 %v1545, %v1547
    %v1550 = vadd.s32 %v1549, %v1539
    %v1551 = vadd.s32 %v1550, %v1541
    %v1552 = vand.u32 %v1529, 65535
    %v1553 = vshrl.u32 %v1529, 16
    %v1554 = vand.u32 %v1524, 65535
    %v1555 = vshrl.u32 %v1524, 16
    %v1556 = vmul.u32 %v1552, %v1554
    %v1557 = vmul.u32 %v1552, %v1555
    %v1558 = vmul.u32 %v1553, %v1554
    %v1559 = vmul.u32 %v1553, %v1555
    %v1560 = vshll.u32 %v1557, 16
    %v1561 = vshrl.u32 %v1557, 16
    %v1562 = vshll.u32 %v1558, 16
    %v1563 = vshrl.u32 %v1558, 16
    %vm1564 = vc.u32 %v1556, %v1560
    %v1565 = vsel %vm1564, 1, 0
    %v1566 = vadd.s32 %v1556, %v1560
    %v1567 = vadd.s32 %v1559, %v1565
    %vm1568 = vc.u32 %v1566, %v1562
    %v1569 = vsel %vm1568, 1, 0
    %v1570 = vadd.s32 %v1566, %v1562
    %v1571 = vadd.s32 %v1567, %v1569
    %v1572 = vadd.s32 %v1571, %v1561
    %v1573 = vadd.s32 %v1572, %v1563
    %v1574 = vmul.u32 %v1529, %v1520
    %v1575 = vadd.s32 %v1551, %v1570
    %vm1576 = vc.u32 %v1551, %v1570
    %v1577 = vadd.s32 %v1573, 1
    %v1578 = vsel %vm1576, %v1577, %v1573
    %v1579 = vadd.s32 %v1574, %v1578
    %v1580 = vadd.s32 %v1579, 536870912
    %v1581 = vshrl.u32 %v1580, 30
    %v1582 = vshll.u32 %v1581, 30
    %v1583 = vsub.s32 %v1579, %v1582
    %vm1584 = vcmp.lt.s32.totalorder %v1583, 0
    %v1585 = vsub.s32 0, %v1583
    %v1586 = vsel %vm1584, %v1585, %v1583
    %v1587 = vclz %v1586
    %v1588 = vsub.s32 %v1587, 2
    %vm1589 = vcmp.gt.s32.totalorder 0, %v1588
    %v1590 = vsel %vm1589, 0, %v1588
    %v1591 = vsub.s32 32, %v1590
    %v1592 = vshll.u32 %v1583, %v1590
    %v1593 = vshrl.u32 %v1575, %v1591
    %v1594 = vor.u32 %v1592, %v1593
    %v1595 = vsub.s32 4294967266, %v1590
    %v1596 = vadd.s32 %v1595, 127
    %v1597 = vshll.u32 %v1596, 23
    %v1598 = vor.u32 4788187, %v1597
    %v1599 = vand.u32 2147483647, %v1598
    %v1601 = vcvt.s32.f32 %v1594
    %v1602 = vmul.f32 %v1601, %v1599
    %v1603 = vxor.u32 %v1602, 2147483648
    %v1604 = vsel %vm1483, %v1603, %v1602
    %v1605 = vsub.s32 4, %v1581
    %v1606 = vsel %vm1483, %v1605, %v1581
    %v1607 = vsel %vm1482, %v123, %v1604
    %v1608 = vsel %vm1482, 0, %v1606
    %v1609 = vmul.f32 %v1607, %v1607
    %v1610 = vmul.f32 %v1609, -0.001358992
    %v1611 = vadd.f32 %v1610, 0.041655596
    %v1612 = vmul.f32 %v1609, %v1611
    %v1613 = vadd.f32 %v1612, -0.4999988
    %v1614 = vmul.f32 %v1609, %v1613
    %v1615 = vadd.f32 1.0, %v1614
    %v1616 = vmul.f32 %v1607, %v1607
    %v1617 = vmul.f32 %v1616, -0.00019511016
    %v1618 = vadd.f32 %v1617, 0.008332121
    %v1619 = vmul.f32 %v1616, %v1618
    %v1620 = vadd.f32 %v1619, -0.16666654
    %v1621 = vmul.f32 %v1616, %v1620
    %v1622 = vadd.f32 %v1621, 1.0
    %v1623 = vmul.f32 %v1622, %v1607
    %vm1624 = vweird.f32 %v123
    %v1625 = vand.u32 %v1608, 3
    %vm1626 = vcmp.lt.s32.totalorder %v1625, 2
    %vm1627 = vcmp.eq.s32.totalorder %v1625, 0
    %v1628 = vxor.u32 %v1623, 2147483648
    %v1629 = vsel %vm1627, %v1615, %v1628
    %vm1630 = vcmp.eq.s32.totalorder %v1625, 2
    %v1631 = vxor.u32 %v1615, 2147483648
    %v1632 = vsel %vm1630, %v1631, %v1623
    %v1633 = vsel %vm1626, %v1629, %v1632
    %v1634 = vsel %vm1624, nan, %v1633
    %v1635 = vand.u32 2147483647, %v124
    %vm1636 = vcmp.le.f32.partialorder %v1635, 0.7853982
    %vm1637 = vcmp.lt.s32.totalorder %v124, 0
    %v1638 = vand.u32 %v124, 2139095040
    %v1639 = vshrl.u32 %v1638, 23
    %v1640 = vsub.s32 %v1639, 127
    %v1641 = vand.u32 2147483647, %v124
    %v1642 = vand.u32 %v1641, 8388607
    %v1643 = vor.u32 %v1642, 8388608
    %v1644 = vsub.s32 0, %v1643
    %v1645 = vadd.s32 %v1640, 1
    %vm1646 = vcmp.gt.s32.totalorder %v1645, 0
    %v1647 = vsel %vm1646, %v1645, 0
    %v1648 = vshrl.u32 %v1647, 5
    %v1649 = vand.u32 %v1647, 31
    %v1650 = vsub.s32 32, %v1649
    %v1651 = vshrl.u32 683565275, %v1650
    %v1652 = vshll.u32 683565275, %v1649
    %v1653 = vshrl.u32 2475754826, %v1650
    %v1654 = vor.u32 %v1652, %v1653
    %v1655 = vshll.u32 2475754826, %v1649
    %v1656 = vshrl.u32 2131351028, %v1650
    %v1657 = vor.u32 %v1655, %v1656
    %v1658 = vshll.u32 2131351028, %v1649
    %v1659 = vshrl.u32 2102212464, %v1650
    %v1660 = vor.u32 %v1658, %v1659
    %v1661 = vshll.u32 2102212464, %v1649
    %v1662 = vshrl.u32 920167782, %v1650
    %v1663 = vor.u32 %v1661, %v1662
    %v1664 = vshll.u32 920167782, %v1649
    %v1665 = vshrl.u32 1326507024, %v1650
    %v1666 = vor.u32 %v1664, %v1665
    %vm1667 = vcmp.lt.s32.totalorder %v1648, 1
    %vm1668 = vcmp.lt.s32.totalorder %v1648, 2
    %vm1669 = vcmp.lt.s32.totalorder %v1648, 3
    %vm1670 = vcmp.lt.s32.totalorder %v1648, 4
    %v1671 = vsel %vm1667, %v1651, %v1654
    %v1672 = vsel %vm1670, %v1660, 2102212464
    %v1673 = vsel %vm1669, %v1657, %v1672
    %v1674 = vsel %vm1668, %v1671, %v1673
    %v1675 = vsel %vm1667, %v1654, %v1657
    %v1676 = vsel %vm1670, %v1663, 920167782
    %v1677 = vsel %vm1669, %v1660, %v1676
    %v1678 = vsel %vm1668, %v1675, %v1677
    %v1679 = vsel %vm1667, %v1657, %v1660
    %v1680 = vsel %vm1670, %v1666, 1326507024
    %v1681 = vsel %vm1669, %v1663, %v1680
    %v1682 = vsel %vm1668, %v1679, %v1681
    %v1683 = vshll.u32 %v1643, 8
    %v1684 = vand.u32 %v1683, 65535
    %v1685 = vshrl.u32 %v1683, 16
    %v1686 = vand.u32 %v1682, 65535
    %v1687 = vshrl.u32 %v1682, 16
    %v1688 = vmul.u32 %v1684, %v1686
    %v1689 = vmul.u32 %v1684, %v1687
    %v1690 = vmul.u32 %v1685, %v1686
    %v1691 = vmul.u32 %v1685, %v1687
    %v1692 = vshll.u32 %v1689, 16
    %v1693 = vshrl.u32 %v1689, 16
    %v1694 = vshll.u32 %v1690, 16
    %v1695 = vshrl.u32 %v1690, 16
    %vm1696 = vc.u32 %v1688, %v1692
    %v1697 = vsel %vm1696, 1, 0
    %v1698 = vadd.s32 %v1688, %v1692
    %v1699 = vadd.s32 %v1691, %v1697
    %vm1700 = vc.u32 %v1698, %v1694
    %v1701 = vsel %vm1700, 1, 0
    %v1702 = vadd.s32 %v1698, %v1694
    %v1703 = vadd.s32 %v1699, %v1701
    %v1704 = vadd.s32 %v1703, %v1693
    %v1705 = vadd.s32 %v1704, %v1695
    %v1706 = vand.u32 %v1683, 65535
    %v1707 = vshrl.u32 %v1683, 16
    %v1708 = vand.u32 %v1678, 65535
    %v1709 = vshrl.u32 %v1678, 16
    %v1710 = vmul.u32 %v1706, %v1708
    %v1711 = vmul.u32 %v1706, %v1709
    %v1712 = vmul.u32 %v1707, %v1708
    %v1713 = vmul.u32 %v1707, %v1709
    %v1714 = vshll.u32 %v1711, 16
    %v1715 = vshrl.u32 %v1711, 16
    %v1716 = vshll.u32 %v1712, 16
    %v1717 = vshrl.u32 %v1712, 16
    %vm1718 = vc.u32 %v1710, %v1714
    %v1719 = vsel %vm1718, 1, 0
    %v1720 = vadd.s32 %v1710, %v1714
    %v1721 = vadd.s32 %v1713, %v1719
    %vm1722 = vc.u32 %v1720, %v1716
    %v1723 = vsel %vm1722, 1, 0
    %v1724 = vadd.s32 %v1720, %v1716
    %v1725 = vadd.s32 %v1721, %v1723
    %v1726 = vadd.s32 %v1725, %v1715
    %v1727 = vadd.s32 %v1726, %v1717
    %v1728 = vmul.u32 %v1683, %v1674
    %v1729 = vadd.s32 %v1705, %v1724
    %vm1730 = vc.u32 %v1705, %v1724
    %v1731 = vadd.s32 %v1727, 1
    %v1732 = vsel %vm1730, %v1731, %v1727
    %v1733 = vadd.s32 %v1728, %v1732
    %v1734 = vadd.s32 %v1733, 536870912
    %v1735 = vshrl.u32 %v1734, 30
    %v1736 = vshll.u32 %v1735, 30
    %v1737 = vsub.s32 %v1733, %v1736
    %vm1738 = vcmp.lt.s32.totalorder %v1737, 0
    %v1739 = vsub.s32 0, %v1737
    %v1740 = vsel %vm1738, %v1739, %v1737
    %v1741 = vclz %v1740
    %v1742 = vsub.s32 %v1741, 2
    %vm1743 = vcmp.gt.s32.totalorder 0, %v1742
    %v1744 = vsel %vm1743, 0, %v1742
    %v1745 = vsub.s32 32, %v1744
    %v1746 = vshll.u32 %v1737, %v1744
    %v1747 = vshrl.u32 %v1729, %v1745
    %v1748 = vor.u32 %v1746, %v1747
    %v1749 = vsub.s32 4294967266, %v1744
    %v1750 = vadd.s32 %v1749, 127
    %v1751 = vshll.u32 %v1750, 23
    %v1752 = vor.u32 4788187, %v1751
    %v1753 = vand.u32 2147483647, %v1752
    %v1755 = vcvt.s32.f32 %v1748
    %v1756 = vmul.f32 %v1755, %v1753
    %v1757 = vxor.u32 %v1756, 2147483648
    %v1758 = vsel %vm1637, %v1757, %v1756
    %v1759 = vsub.s32 4, %v1735
    %v1760 = vsel %vm1637, %v1759, %v1735
    %v1761 = vsel %vm1636, %v124, %v1758
    %v1762 = vsel %vm1636, 0, %v1760
    %v1763 = vmul.f32 %v1761, %v1761
    %v1764 = vmul.f32 %v1763, -0.001358992
    %v1765 = vadd.f32 %v1764, 0.041655596
    %v1766 = vmul.f32 %v1763, %v1765
    %v1767 = vadd.f32 %v1766, -0.4999988
    %v1768 = vmul.f32 %v1763, %v1767
    %v1769 = vadd.f32 1.0, %v1768
    %v1770 = vmul.f32 %v1761, %v1761
    %v1771 = vmul.f32 %v1770, -0.00019511016
    %v1772 = vadd.f32 %v1771, 0.008332121
    %v1773 = vmul.f32 %v1770, %v1772
    %v1774 = vadd.f32 %v1773, -0.16666654
    %v1775 = vmul.f32 %v1770, %v1774
    %v1776 = vadd.f32 %v1775, 1.0
    %v1777 = vmul.f32 %v1776, %v1761
    %vm1778 = vweird.f32 %v124
    %v1779 = vand.u32 %v1762, 3
    %vm1780 = vcmp.lt.s32.totalorder %v1779, 2
    %vm1781 = vcmp.eq.s32.totalorder %v1779, 0
    %v1782 = vxor.u32 %v1777, 2147483648
    %v1783 = vsel %vm1781, %v1769, %v1782
    %vm1784 = vcmp.eq.s32.totalorder %v1779, 2
    %v1785 = vxor.u32 %v1769, 2147483648
    %v1786 = vsel %vm1784, %v1785, %v1777
    %v1787 = vsel %vm1780, %v1783, %v1786
    %v1788 = vsel %vm1778, nan, %v1787
    %v1789 = vand.u32 2147483647, %v125
    %vm1790 = vcmp.le.f32.partialorder %v1789, 0.7853982
    %vm1791 = vcmp.lt.s32.totalorder %v125, 0
    %v1792 = vand.u32 %v125, 2139095040
    %v1793 = vshrl.u32 %v1792, 23
    %v1794 = vsub.s32 %v1793, 127
    %v1795 = vand.u32 2147483647, %v125
    %v1796 = vand.u32 %v1795, 8388607
    %v1797 = vor.u32 %v1796, 8388608
    %v1798 = vsub.s32 0, %v1797
    %v1799 = vadd.s32 %v1794, 1
    %vm1800 = vcmp.gt.s32.totalorder %v1799, 0
    %v1801 = vsel %vm1800, %v1799, 0
    %v1802 = vshrl.u32 %v1801, 5
    %v1803 = vand.u32 %v1801, 31
    %v1804 = vsub.s32 32, %v1803
    %v1805 = vshrl.u32 683565275, %v1804
    %v1806 = vshll.u32 683565275, %v1803
    %v1807 = vshrl.u32 2475754826, %v1804
    %v1808 = vor.u32 %v1806, %v1807
    %v1809 = vshll.u32 2475754826, %v1803
    %v1810 = vshrl.u32 2131351028, %v1804
    %v1811 = vor.u32 %v1809, %v1810
    %v1812 = vshll.u32 2131351028, %v1803
    %v1813 = vshrl.u32 2102212464, %v1804
    %v1814 = vor.u32 %v1812, %v1813
    %v1815 = vshll.u32 2102212464, %v1803
    %v1816 = vshrl.u32 920167782, %v1804
    %v1817 = vor.u32 %v1815, %v1816
    %v1818 = vshll.u32 920167782, %v1803
    %v1819 = vshrl.u32 1326507024, %v1804
    %v1820 = vor.u32 %v1818, %v1819
    %vm1821 = vcmp.lt.s32.totalorder %v1802, 1
    %vm1822 = vcmp.lt.s32.totalorder %v1802, 2
    %vm1823 = vcmp.lt.s32.totalorder %v1802, 3
    %vm1824 = vcmp.lt.s32.totalorder %v1802, 4
    %v1825 = vsel %vm1821, %v1805, %v1808
    %v1826 = vsel %vm1824, %v1814, 2102212464
    %v1827 = vsel %vm1823, %v1811, %v1826
    %v1828 = vsel %vm1822, %v1825, %v1827
    %v1829 = vsel %vm1821, %v1808, %v1811
    %v1830 = vsel %vm1824, %v1817, 920167782
    %v1831 = vsel %vm1823, %v1814, %v1830
    %v1832 = vsel %vm1822, %v1829, %v1831
    %v1833 = vsel %vm1821, %v1811, %v1814
    %v1834 = vsel %vm1824, %v1820, 1326507024
    %v1835 = vsel %vm1823, %v1817, %v1834
    %v1836 = vsel %vm1822, %v1833, %v1835
    %v1837 = vshll.u32 %v1797, 8
    %v1838 = vand.u32 %v1837, 65535
    %v1839 = vshrl.u32 %v1837, 16
    %v1840 = vand.u32 %v1836, 65535
    %v1841 = vshrl.u32 %v1836, 16
    %v1842 = vmul.u32 %v1838, %v1840
    %v1843 = vmul.u32 %v1838, %v1841
    %v1844 = vmul.u32 %v1839, %v1840
    %v1845 = vmul.u32 %v1839, %v1841
    %v1846 = vshll.u32 %v1843, 16
    %v1847 = vshrl.u32 %v1843, 16
    %v1848 = vshll.u32 %v1844, 16
    %v1849 = vshrl.u32 %v1844, 16
    %vm1850 = vc.u32 %v1842, %v1846
    %v1851 = vsel %vm1850, 1, 0
    %v1852 = vadd.s32 %v1842, %v1846
    %v1853 = vadd.s32 %v1845, %v1851
    %vm1854 = vc.u32 %v1852, %v1848
    %v1855 = vsel %vm1854, 1, 0
    %v1856 = vadd.s32 %v1852, %v1848
    %v1857 = vadd.s32 %v1853, %v1855
    %v1858 = vadd.s32 %v1857, %v1847
    %v1859 = vadd.s32 %v1858, %v1849
    %v1860 = vand.u32 %v1837, 65535
    %v1861 = vshrl.u32 %v1837, 16
    %v1862 = vand.u32 %v1832, 65535
    %v1863 = vshrl.u32 %v1832, 16
    %v1864 = vmul.u32 %v1860, %v1862
    %v1865 = vmul.u32 %v1860, %v1863
    %v1866 = vmul.u32 %v1861, %v1862
    %v1867 = vmul.u32 %v1861, %v1863
    %v1868 = vshll.u32 %v1865, 16
    %v1869 = vshrl.u32 %v1865, 16
    %v1870 = vshll.u32 %v1866, 16
    %v1871 = vshrl.u32 %v1866, 16
    %vm1872 = vc.u32 %v1864, %v1868
    %v1873 = vsel %vm1872, 1, 0
    %v1874 = vadd.s32 %v1864, %v1868
    %v1875 = vadd.s32 %v1867, %v1873
    %vm1876 = vc.u32 %v1874, %v1870
    %v1877 = vsel %vm1876, 1, 0
    %v1878 = vadd.s32 %v1874, %v1870
    %v1879 = vadd.s32 %v1875, %v1877
    %v1880 = vadd.s32 %v1879, %v1869
    %v1881 = vadd.s32 %v1880, %v1871
    %v1882 = vmul.u32 %v1837, %v1828
    %v1883 = vadd.s32 %v1859, %v1878
    %vm1884 = vc.u32 %v1859, %v1878
    %v1885 = vadd.s32 %v1881, 1
    %v1886 = vsel %vm1884, %v1885, %v1881
    %v1887 = vadd.s32 %v1882, %v1886
    %v1888 = vadd.s32 %v1887, 536870912
    %v1889 = vshrl.u32 %v1888, 30
    %v1890 = vshll.u32 %v1889, 30
    %v1891 = vsub.s32 %v1887, %v1890
    %vm1892 = vcmp.lt.s32.totalorder %v1891, 0
    %v1893 = vsub.s32 0, %v1891
    %v1894 = vsel %vm1892, %v1893, %v1891
    %v1895 = vclz %v1894
    %v1896 = vsub.s32 %v1895, 2
    %vm1897 = vcmp.gt.s32.totalorder 0, %v1896
    %v1898 = vsel %vm1897, 0, %v1896
    %v1899 = vsub.s32 32, %v1898
    %v1900 = vshll.u32 %v1891, %v1898
    %v1901 = vshrl.u32 %v1883, %v1899
    %v1902 = vor.u32 %v1900, %v1901
    %v1903 = vsub.s32 4294967266, %v1898
    %v1904 = vadd.s32 %v1903, 127
    %v1905 = vshll.u32 %v1904, 23
    %v1906 = vor.u32 4788187, %v1905
    %v1907 = vand.u32 2147483647, %v1906
    %v1909 = vcvt.s32.f32 %v1902
    %v1910 = vmul.f32 %v1909, %v1907
    %v1911 = vxor.u32 %v1910, 2147483648
    %v1912 = vsel %vm1791, %v1911, %v1910
    %v1913 = vsub.s32 4, %v1889
    %v1914 = vsel %vm1791, %v1913, %v1889
    %v1915 = vsel %vm1790, %v125, %v1912
    %v1916 = vsel %vm1790, 0, %v1914
    %v1917 = vmul.f32 %v1915, %v1915
    %v1918 = vmul.f32 %v1917, -0.001358992
    %v1919 = vadd.f32 %v1918, 0.041655596
    %v1920 = vmul.f32 %v1917, %v1919
    %v1921 = vadd.f32 %v1920, -0.4999988
    %v1922 = vmul.f32 %v1917, %v1921
    %v1923 = vadd.f32 1.0, %v1922
    %v1924 = vmul.f32 %v1915, %v1915
    %v1925 = vmul.f32 %v1924, -0.00019511016
    %v1926 = vadd.f32 %v1925, 0.008332121
    %v1927 = vmul.f32 %v1924, %v1926
    %v1928 = vadd.f32 %v1927, -0.16666654
    %v1929 = vmul.f32 %v1924, %v1928
    %v1930 = vadd.f32 %v1929, 1.0
    %v1931 = vmul.f32 %v1930, %v1915
    %vm1932 = vweird.f32 %v125
    %v1933 = vand.u32 %v1916, 3
    %vm1934 = vcmp.lt.s32.totalorder %v1933, 2
    %vm1935 = vcmp.eq.s32.totalorder %v1933, 0
    %v1936 = vxor.u32 %v1931, 2147483648
    %v1937 = vsel %vm1935, %v1923, %v1936
    %vm1938 = vcmp.eq.s32.totalorder %v1933, 2
    %v1939 = vxor.u32 %v1923, 2147483648
    %v1940 = vsel %vm1938, %v1939, %v1931
    %v1941 = vsel %vm1934, %v1937, %v1940
    %v1942 = vsel %vm1932, nan, %v1941
    %v1943 = vand.u32 2147483647, %v126
    %vm1944 = vcmp.le.f32.partialorder %v1943, 0.7853982
    %vm1945 = vcmp.lt.s32.totalorder %v126, 0
    %v1946 = vand.u32 %v126, 2139095040
    %v1947 = vshrl.u32 %v1946, 23
    %v1948 = vsub.s32 %v1947, 127
    %v1949 = vand.u32 2147483647, %v126
    %v1950 = vand.u32 %v1949, 8388607
    %v1951 = vor.u32 %v1950, 8388608
    %v1952 = vsub.s32 0, %v1951
    %v1953 = vadd.s32 %v1948, 1
    %vm1954 = vcmp.gt.s32.totalorder %v1953, 0
    %v1955 = vsel %vm1954, %v1953, 0
    %v1956 = vshrl.u32 %v1955, 5
    %v1957 = vand.u32 %v1955, 31
    %v1958 = vsub.s32 32, %v1957
    %v1959 = vshrl.u32 683565275, %v1958
    %v1960 = vshll.u32 683565275, %v1957
    %v1961 = vshrl.u32 2475754826, %v1958
    %v1962 = vor.u32 %v1960, %v1961
    %v1963 = vshll.u32 2475754826, %v1957
    %v1964 = vshrl.u32 2131351028, %v1958
    %v1965 = vor.u32 %v1963, %v1964
    %v1966 = vshll.u32 2131351028, %v1957
    %v1967 = vshrl.u32 2102212464, %v1958
    %v1968 = vor.u32 %v1966, %v1967
    %v1969 = vshll.u32 2102212464, %v1957
    %v1970 = vshrl.u32 920167782, %v1958
    %v1971 = vor.u32 %v1969, %v1970
    %v1972 = vshll.u32 920167782, %v1957
    %v1973 = vshrl.u32 1326507024, %v1958
    %v1974 = vor.u32 %v1972, %v1973
    %vm1975 = vcmp.lt.s32.totalorder %v1956, 1
    %vm1976 = vcmp.lt.s32.totalorder %v1956, 2
    %vm1977 = vcmp.lt.s32.totalorder %v1956, 3
    %vm1978 = vcmp.lt.s32.totalorder %v1956, 4
    %v1979 = vsel %vm1975, %v1959, %v1962
    %v1980 = vsel %vm1978, %v1968, 2102212464
    %v1981 = vsel %vm1977, %v1965, %v1980
    %v1982 = vsel %vm1976, %v1979, %v1981
    %v1983 = vsel %vm1975, %v1962, %v1965
    %v1984 = vsel %vm1978, %v1971, 920167782
    %v1985 = vsel %vm1977, %v1968, %v1984
    %v1986 = vsel %vm1976, %v1983, %v1985
    %v1987 = vsel %vm1975, %v1965, %v1968
    %v1988 = vsel %vm1978, %v1974, 1326507024
    %v1989 = vsel %vm1977, %v1971, %v1988
    %v1990 = vsel %vm1976, %v1987, %v1989
    %v1991 = vshll.u32 %v1951, 8
    %v1992 = vand.u32 %v1991, 65535
    %v1993 = vshrl.u32 %v1991, 16
    %v1994 = vand.u32 %v1990, 65535
    %v1995 = vshrl.u32 %v1990, 16
    %v1996 = vmul.u32 %v1992, %v1994
    %v1997 = vmul.u32 %v1992, %v1995
    %v1998 = vmul.u32 %v1993, %v1994
    %v1999 = vmul.u32 %v1993, %v1995
    %v2000 = vshll.u32 %v1997, 16
    %v2001 = vshrl.u32 %v1997, 16
    %v2002 = vshll.u32 %v1998, 16
    %v2003 = vshrl.u32 %v1998, 16
    %vm2004 = vc.u32 %v1996, %v2000
    %v2005 = vsel %vm2004, 1, 0
    %v2006 = vadd.s32 %v1996, %v2000
    %v2007 = vadd.s32 %v1999, %v2005
    %vm2008 = vc.u32 %v2006, %v2002
    %v2009 = vsel %vm2008, 1, 0
    %v2010 = vadd.s32 %v2006, %v2002
    %v2011 = vadd.s32 %v2007, %v2009
    %v2012 = vadd.s32 %v2011, %v2001
    %v2013 = vadd.s32 %v2012, %v2003
    %v2014 = vand.u32 %v1991, 65535
    %v2015 = vshrl.u32 %v1991, 16
    %v2016 = vand.u32 %v1986, 65535
    %v2017 = vshrl.u32 %v1986, 16
    %v2018 = vmul.u32 %v2014, %v2016
    %v2019 = vmul.u32 %v2014, %v2017
    %v2020 = vmul.u32 %v2015, %v2016
    %v2021 = vmul.u32 %v2015, %v2017
    %v2022 = vshll.u32 %v2019, 16
    %v2023 = vshrl.u32 %v2019, 16
    %v2024 = vshll.u32 %v2020, 16
    %v2025 = vshrl.u32 %v2020, 16
    %vm2026 = vc.u32 %v2018, %v2022
    %v2027 = vsel %vm2026, 1, 0
    %v2028 = vadd.s32 %v2018, %v2022
    %v2029 = vadd.s32 %v2021, %v2027
    %vm2030 = vc.u32 %v2028, %v2024
    %v2031 = vsel %vm2030, 1, 0
    %v2032 = vadd.s32 %v2028, %v2024
    %v2033 = vadd.s32 %v2029, %v2031
    %v2034 = vadd.s32 %v2033, %v2023
    %v2035 = vadd.s32 %v2034, %v2025
    %v2036 = vmul.u32 %v1991, %v1982
    %v2037 = vadd.s32 %v2013, %v2032
    %vm2038 = vc.u32 %v2013, %v2032
    %v2039 = vadd.s32 %v2035, 1
    %v2040 = vsel %vm2038, %v2039, %v2035
    %v2041 = vadd.s32 %v2036, %v2040
    %v2042 = vadd.s32 %v2041, 536870912
    %v2043 = vshrl.u32 %v2042, 30
    %v2044 = vshll.u32 %v2043, 30
    %v2045 = vsub.s32 %v2041, %v2044
    %vm2046 = vcmp.lt.s32.totalorder %v2045, 0
    %v2047 = vsub.s32 0, %v2045
    %v2048 = vsel %vm2046, %v2047, %v2045
    %v2049 = vclz %v2048
    %v2050 = vsub.s32 %v2049, 2
    %vm2051 = vcmp.gt.s32.totalorder 0, %v2050
    %v2052 = vsel %vm2051, 0, %v2050
    %v2053 = vsub.s32 32, %v2052
    %v2054 = vshll.u32 %v2045, %v2052
    %v2055 = vshrl.u32 %v2037, %v2053
    %v2056 = vor.u32 %v2054, %v2055
    %v2057 = vsub.s32 4294967266, %v2052
    %v2058 = vadd.s32 %v2057, 127
    %v2059 = vshll.u32 %v2058, 23
    %v2060 = vor.u32 4788187, %v2059
    %v2061 = vand.u32 2147483647, %v2060
    %v2063 = vcvt.s32.f32 %v2056
    %v2064 = vmul.f32 %v2063, %v2061
    %v2065 = vxor.u32 %v2064, 2147483648
    %v2066 = vsel %vm1945, %v2065, %v2064
    %v2067 = vsub.s32 4, %v2043
    %v2068 = vsel %vm1945, %v2067, %v2043
    %v2069 = vsel %vm1944, %v126, %v2066
    %v2070 = vsel %vm1944, 0, %v2068
    %v2071 = vmul.f32 %v2069, %v2069
    %v2072 = vmul.f32 %v2071, -0.001358992
    %v2073 = vadd.f32 %v2072, 0.041655596
    %v2074 = vmul.f32 %v2071, %v2073
    %v2075 = vadd.f32 %v2074, -0.4999988
    %v2076 = vmul.f32 %v2071, %v2075
    %v2077 = vadd.f32 1.0, %v2076
    %v2078 = vmul.f32 %v2069, %v2069
    %v2079 = vmul.f32 %v2078, -0.00019511016
    %v2080 = vadd.f32 %v2079, 0.008332121
    %v2081 = vmul.f32 %v2078, %v2080
    %v2082 = vadd.f32 %v2081, -0.16666654
    %v2083 = vmul.f32 %v2078, %v2082
    %v2084 = vadd.f32 %v2083, 1.0
    %v2085 = vmul.f32 %v2084, %v2069
    %vm2086 = vweird.f32 %v126
    %v2087 = vand.u32 %v2070, 3
    %vm2088 = vcmp.lt.s32.totalorder %v2087, 2
    %vm2089 = vcmp.eq.s32.totalorder %v2087, 0
    %v2090 = vxor.u32 %v2085, 2147483648
    %v2091 = vsel %vm2089, %v2077, %v2090
    %vm2092 = vcmp.eq.s32.totalorder %v2087, 2
    %v2093 = vxor.u32 %v2077, 2147483648
    %v2094 = vsel %vm2092, %v2093, %v2085
    %v2095 = vsel %vm2088, %v2091, %v2094
    %v2096 = vsel %vm2086, nan, %v2095
    %v2097 = vand.u32 2147483647, %v127
    %vm2098 = vcmp.le.f32.partialorder %v2097, 0.7853982
    %vm2099 = vcmp.lt.s32.totalorder %v127, 0
    %v2100 = vand.u32 %v127, 2139095040
    %v2101 = vshrl.u32 %v2100, 23
    %v2102 = vsub.s32 %v2101, 127
    %v2103 = vand.u32 2147483647, %v127
    %v2104 = vand.u32 %v2103, 8388607
    %v2105 = vor.u32 %v2104, 8388608
    %v2106 = vsub.s32 0, %v2105
    %v2107 = vadd.s32 %v2102, 1
    %vm2108 = vcmp.gt.s32.totalorder %v2107, 0
    %v2109 = vsel %vm2108, %v2107, 0
    %v2110 = vshrl.u32 %v2109, 5
    %v2111 = vand.u32 %v2109, 31
    %v2112 = vsub.s32 32, %v2111
    %v2113 = vshrl.u32 683565275, %v2112
    %v2114 = vshll.u32 683565275, %v2111
    %v2115 = vshrl.u32 2475754826, %v2112
    %v2116 = vor.u32 %v2114, %v2115
    %v2117 = vshll.u32 2475754826, %v2111
    %v2118 = vshrl.u32 2131351028, %v2112
    %v2119 = vor.u32 %v2117, %v2118
    %v2120 = vshll.u32 2131351028, %v2111
    %v2121 = vshrl.u32 2102212464, %v2112
    %v2122 = vor.u32 %v2120, %v2121
    %v2123 = vshll.u32 2102212464, %v2111
    %v2124 = vshrl.u32 920167782, %v2112
    %v2125 = vor.u32 %v2123, %v2124
    %v2126 = vshll.u32 920167782, %v2111
    %v2127 = vshrl.u32 1326507024, %v2112
    %v2128 = vor.u32 %v2126, %v2127
    %vm2129 = vcmp.lt.s32.totalorder %v2110, 1
    %vm2130 = vcmp.lt.s32.totalorder %v2110, 2
    %vm2131 = vcmp.lt.s32.totalorder %v2110, 3
    %vm2132 = vcmp.lt.s32.totalorder %v2110, 4
    %v2133 = vsel %vm2129, %v2113, %v2116
    %v2134 = vsel %vm2132, %v2122, 2102212464
    %v2135 = vsel %vm2131, %v2119, %v2134
    %v2136 = vsel %vm2130, %v2133, %v2135
    %v2137 = vsel %vm2129, %v2116, %v2119
    %v2138 = vsel %vm2132, %v2125, 920167782
    %v2139 = vsel %vm2131, %v2122, %v2138
    %v2140 = vsel %vm2130, %v2137, %v2139
    %v2141 = vsel %vm2129, %v2119, %v2122
    %v2142 = vsel %vm2132, %v2128, 1326507024
    %v2143 = vsel %vm2131, %v2125, %v2142
    %v2144 = vsel %vm2130, %v2141, %v2143
    %v2145 = vshll.u32 %v2105, 8
    %v2146 = vand.u32 %v2145, 65535
    %v2147 = vshrl.u32 %v2145, 16
    %v2148 = vand.u32 %v2144, 65535
    %v2149 = vshrl.u32 %v2144, 16
    %v2150 = vmul.u32 %v2146, %v2148
    %v2151 = vmul.u32 %v2146, %v2149
    %v2152 = vmul.u32 %v2147, %v2148
    %v2153 = vmul.u32 %v2147, %v2149
    %v2154 = vshll.u32 %v2151, 16
    %v2155 = vshrl.u32 %v2151, 16
    %v2156 = vshll.u32 %v2152, 16
    %v2157 = vshrl.u32 %v2152, 16
    %vm2158 = vc.u32 %v2150, %v2154
    %v2159 = vsel %vm2158, 1, 0
    %v2160 = vadd.s32 %v2150, %v2154
    %v2161 = vadd.s32 %v2153, %v2159
    %vm2162 = vc.u32 %v2160, %v2156
    %v2163 = vsel %vm2162, 1, 0
    %v2164 = vadd.s32 %v2160, %v2156
    %v2165 = vadd.s32 %v2161, %v2163
    %v2166 = vadd.s32 %v2165, %v2155
    %v2167 = vadd.s32 %v2166, %v2157
    %v2168 = vand.u32 %v2145, 65535
    %v2169 = vshrl.u32 %v2145, 16
    %v2170 = vand.u32 %v2140, 65535
    %v2171 = vshrl.u32 %v2140, 16
    %v2172 = vmul.u32 %v2168, %v2170
    %v2173 = vmul.u32 %v2168, %v2171
    %v2174 = vmul.u32 %v2169, %v2170
    %v2175 = vmul.u32 %v2169, %v2171
    %v2176 = vshll.u32 %v2173, 16
    %v2177 = vshrl.u32 %v2173, 16
    %v2178 = vshll.u32 %v2174, 16
    %v2179 = vshrl.u32 %v2174, 16
    %vm2180 = vc.u32 %v2172, %v2176
    %v2181 = vsel %vm2180, 1, 0
    %v2182 = vadd.s32 %v2172, %v2176
    %v2183 = vadd.s32 %v2175, %v2181
    %vm2184 = vc.u32 %v2182, %v2178
    %v2185 = vsel %vm2184, 1, 0
    %v2186 = vadd.s32 %v2182, %v2178
    %v2187 = vadd.s32 %v2183, %v2185
    %v2188 = vadd.s32 %v2187, %v2177
    %v2189 = vadd.s32 %v2188, %v2179
    %v2190 = vmul.u32 %v2145, %v2136
    %v2191 = vadd.s32 %v2167, %v2186
    %vm2192 = vc.u32 %v2167, %v2186
    %v2193 = vadd.s32 %v2189, 1
    %v2194 = vsel %vm2192, %v2193, %v2189
    %v2195 = vadd.s32 %v2190, %v2194
    %v2196 = vadd.s32 %v2195, 536870912
    %v2197 = vshrl.u32 %v2196, 30
    %v2198 = vshll.u32 %v2197, 30
    %v2199 = vsub.s32 %v2195, %v2198
    %vm2200 = vcmp.lt.s32.totalorder %v2199, 0
    %v2201 = vsub.s32 0, %v2199
    %v2202 = vsel %vm2200, %v2201, %v2199
    %v2203 = vclz %v2202
    %v2204 = vsub.s32 %v2203, 2
    %vm2205 = vcmp.gt.s32.totalorder 0, %v2204
    %v2206 = vsel %vm2205, 0, %v2204
    %v2207 = vsub.s32 32, %v2206
    %v2208 = vshll.u32 %v2199, %v2206
    %v2209 = vshrl.u32 %v2191, %v2207
    %v2210 = vor.u32 %v2208, %v2209
    %v2211 = vsub.s32 4294967266, %v2206
    %v2212 = vadd.s32 %v2211, 127
    %v2213 = vshll.u32 %v2212, 23
    %v2214 = vor.u32 4788187, %v2213
    %v2215 = vand.u32 2147483647, %v2214
    %v2217 = vcvt.s32.f32 %v2210
    %v2218 = vmul.f32 %v2217, %v2215
    %v2219 = vxor.u32 %v2218, 2147483648
    %v2220 = vsel %vm2099, %v2219, %v2218
    %v2221 = vsub.s32 4, %v2197
    %v2222 = vsel %vm2099, %v2221, %v2197
    %v2223 = vsel %vm2098, %v127, %v2220
    %v2224 = vsel %vm2098, 0, %v2222
    %v2225 = vmul.f32 %v2223, %v2223
    %v2226 = vmul.f32 %v2225, -0.001358992
    %v2227 = vadd.f32 %v2226, 0.041655596
    %v2228 = vmul.f32 %v2225, %v2227
    %v2229 = vadd.f32 %v2228, -0.4999988
    %v2230 = vmul.f32 %v2225, %v2229
    %v2231 = vadd.f32 1.0, %v2230
    %v2232 = vmul.f32 %v2223, %v2223
    %v2233 = vmul.f32 %v2232, -0.00019511016
    %v2234 = vadd.f32 %v2233, 0.008332121
    %v2235 = vmul.f32 %v2232, %v2234
    %v2236 = vadd.f32 %v2235, -0.16666654
    %v2237 = vmul.f32 %v2232, %v2236
    %v2238 = vadd.f32 %v2237, 1.0
    %v2239 = vmul.f32 %v2238, %v2223
    %vm2240 = vweird.f32 %v127
    %v2241 = vand.u32 %v2224, 3
    %vm2242 = vcmp.lt.s32.totalorder %v2241, 2
    %vm2243 = vcmp.eq.s32.totalorder %v2241, 0
    %v2244 = vxor.u32 %v2239, 2147483648
    %v2245 = vsel %vm2243, %v2231, %v2244
    %vm2246 = vcmp.eq.s32.totalorder %v2241, 2
    %v2247 = vxor.u32 %v2231, 2147483648
    %v2248 = vsel %vm2246, %v2247, %v2239
    %v2249 = vsel %vm2242, %v2245, %v2248
    %v2250 = vsel %vm2240, nan, %v2249
    %v2251 = vand.u32 2147483647, %v128
    %vm2252 = vcmp.le.f32.partialorder %v2251, 0.7853982
    %vm2253 = vcmp.lt.s32.totalorder %v128, 0
    %v2254 = vand.u32 %v128, 2139095040
    %v2255 = vshrl.u32 %v2254, 23
    %v2256 = vsub.s32 %v2255, 127
    %v2257 = vand.u32 2147483647, %v128
    %v2258 = vand.u32 %v2257, 8388607
    %v2259 = vor.u32 %v2258, 8388608
    %v2260 = vsub.s32 0, %v2259
    %v2261 = vadd.s32 %v2256, 1
    %vm2262 = vcmp.gt.s32.totalorder %v2261, 0
    %v2263 = vsel %vm2262, %v2261, 0
    %v2264 = vshrl.u32 %v2263, 5
    %v2265 = vand.u32 %v2263, 31
    %v2266 = vsub.s32 32, %v2265
    %v2267 = vshrl.u32 683565275, %v2266
    %v2268 = vshll.u32 683565275, %v2265
    %v2269 = vshrl.u32 2475754826, %v2266
    %v2270 = vor.u32 %v2268, %v2269
    %v2271 = vshll.u32 2475754826, %v2265
    %v2272 = vshrl.u32 2131351028, %v2266
    %v2273 = vor.u32 %v2271, %v2272
    %v2274 = vshll.u32 2131351028, %v2265
    %v2275 = vshrl.u32 2102212464, %v2266
    %v2276 = vor.u32 %v2274, %v2275
    %v2277 = vshll.u32 2102212464, %v2265
    %v2278 = vshrl.u32 920167782, %v2266
    %v2279 = vor.u32 %v2277, %v2278
    %v2280 = vshll.u32 920167782, %v2265
    %v2281 = vshrl.u32 1326507024, %v2266
    %v2282 = vor.u32 %v2280, %v2281
    %vm2283 = vcmp.lt.s32.totalorder %v2264, 1
    %vm2284 = vcmp.lt.s32.totalorder %v2264, 2
    %vm2285 = vcmp.lt.s32.totalorder %v2264, 3
    %vm2286 = vcmp.lt.s32.totalorder %v2264, 4
    %v2287 = vsel %vm2283, %v2267, %v2270
    %v2288 = vsel %vm2286, %v2276, 2102212464
    %v2289 = vsel %vm2285, %v2273, %v2288
    %v2290 = vsel %vm2284, %v2287, %v2289
    %v2291 = vsel %vm2283, %v2270, %v2273
    %v2292 = vsel %vm2286, %v2279, 920167782
    %v2293 = vsel %vm2285, %v2276, %v2292
    %v2294 = vsel %vm2284, %v2291, %v2293
    %v2295 = vsel %vm2283, %v2273, %v2276
    %v2296 = vsel %vm2286, %v2282, 1326507024
    %v2297 = vsel %vm2285, %v2279, %v2296
    %v2298 = vsel %vm2284, %v2295, %v2297
    %v2299 = vshll.u32 %v2259, 8
    %v2300 = vand.u32 %v2299, 65535
    %v2301 = vshrl.u32 %v2299, 16
    %v2302 = vand.u32 %v2298, 65535
    %v2303 = vshrl.u32 %v2298, 16
    %v2304 = vmul.u32 %v2300, %v2302
    %v2305 = vmul.u32 %v2300, %v2303
    %v2306 = vmul.u32 %v2301, %v2302
    %v2307 = vmul.u32 %v2301, %v2303
    %v2308 = vshll.u32 %v2305, 16
    %v2309 = vshrl.u32 %v2305, 16
    %v2310 = vshll.u32 %v2306, 16
    %v2311 = vshrl.u32 %v2306, 16
    %vm2312 = vc.u32 %v2304, %v2308
    %v2313 = vsel %vm2312, 1, 0
    %v2314 = vadd.s32 %v2304, %v2308
    %v2315 = vadd.s32 %v2307, %v2313
    %vm2316 = vc.u32 %v2314, %v2310
    %v2317 = vsel %vm2316, 1, 0
    %v2318 = vadd.s32 %v2314, %v2310
    %v2319 = vadd.s32 %v2315, %v2317
    %v2320 = vadd.s32 %v2319, %v2309
    %v2321 = vadd.s32 %v2320, %v2311
    %v2322 = vand.u32 %v2299, 65535
    %v2323 = vshrl.u32 %v2299, 16
    %v2324 = vand.u32 %v2294, 65535
    %v2325 = vshrl.u32 %v2294, 16
    %v2326 = vmul.u32 %v2322, %v2324
    %v2327 = vmul.u32 %v2322, %v2325
    %v2328 = vmul.u32 %v2323, %v2324
    %v2329 = vmul.u32 %v2323, %v2325
    %v2330 = vshll.u32 %v2327, 16
    %v2331 = vshrl.u32 %v2327, 16
    %v2332 = vshll.u32 %v2328, 16
    %v2333 = vshrl.u32 %v2328, 16
    %vm2334 = vc.u32 %v2326, %v2330
    %v2335 = vsel %vm2334, 1, 0
    %v2336 = vadd.s32 %v2326, %v2330
    %v2337 = vadd.s32 %v2329, %v2335
    %vm2338 = vc.u32 %v2336, %v2332
    %v2339 = vsel %vm2338, 1, 0
    %v2340 = vadd.s32 %v2336, %v2332
    %v2341 = vadd.s32 %v2337, %v2339
    %v2342 = vadd.s32 %v2341, %v2331
    %v2343 = vadd.s32 %v2342, %v2333
    %v2344 = vmul.u32 %v2299, %v2290
    %v2345 = vadd.s32 %v2321, %v2340
    %vm2346 = vc.u32 %v2321, %v2340
    %v2347 = vadd.s32 %v2343, 1
    %v2348 = vsel %vm2346, %v2347, %v2343
    %v2349 = vadd.s32 %v2344, %v2348
    %v2350 = vadd.s32 %v2349, 536870912
    %v2351 = vshrl.u32 %v2350, 30
    %v2352 = vshll.u32 %v2351, 30
    %v2353 = vsub.s32 %v2349, %v2352
    %vm2354 = vcmp.lt.s32.totalorder %v2353, 0
    %v2355 = vsub.s32 0, %v2353
    %v2356 = vsel %vm2354, %v2355, %v2353
    %v2357 = vclz %v2356
    %v2358 = vsub.s32 %v2357, 2
    %vm2359 = vcmp.gt.s32.totalorder 0, %v2358
    %v2360 = vsel %vm2359, 0, %v2358
    %v2361 = vsub.s32 32, %v2360
    %v2362 = vshll.u32 %v2353, %v2360
    %v2363 = vshrl.u32 %v2345, %v2361
    %v2364 = vor.u32 %v2362, %v2363
    %v2365 = vsub.s32 4294967266, %v2360
    %v2366 = vadd.s32 %v2365, 127
    %v2367 = vshll.u32 %v2366, 23
    %v2368 = vor.u32 4788187, %v2367
    %v2369 = vand.u32 2147483647, %v2368
    %v2371 = vcvt.s32.f32 %v2364
    %v2372 = vmul.f32 %v2371, %v2369
    %v2373 = vxor.u32 %v2372, 2147483648
    %v2374 = vsel %vm2253, %v2373, %v2372
    %v2375 = vsub.s32 4, %v2351
    %v2376 = vsel %vm2253, %v2375, %v2351
    %v2377 = vsel %vm2252, %v128, %v2374
    %v2378 = vsel %vm2252, 0, %v2376
    %v2379 = vmul.f32 %v2377, %v2377
    %v2380 = vmul.f32 %v2379, -0.001358992
    %v2381 = vadd.f32 %v2380, 0.041655596
    %v2382 = vmul.f32 %v2379, %v2381
    %v2383 = vadd.f32 %v2382, -0.4999988
    %v2384 = vmul.f32 %v2379, %v2383
    %v2385 = vadd.f32 1.0, %v2384
    %v2386 = vmul.f32 %v2377, %v2377
    %v2387 = vmul.f32 %v2386, -0.00019511016
    %v2388 = vadd.f32 %v2387, 0.008332121
    %v2389 = vmul.f32 %v2386, %v2388
    %v2390 = vadd.f32 %v2389, -0.16666654
    %v2391 = vmul.f32 %v2386, %v2390
    %v2392 = vadd.f32 %v2391, 1.0
    %v2393 = vmul.f32 %v2392, %v2377
    %vm2394 = vweird.f32 %v128
    %v2395 = vand.u32 %v2378, 3
    %vm2396 = vcmp.lt.s32.totalorder %v2395, 2
    %vm2397 = vcmp.eq.s32.totalorder %v2395, 0
    %v2398 = vxor.u32 %v2393, 2147483648
    %v2399 = vsel %vm2397, %v2385, %v2398
    %vm2400 = vcmp.eq.s32.totalorder %v2395, 2
    %v2401 = vxor.u32 %v2385, 2147483648
    %v2402 = vsel %vm2400, %v2401, %v2393
    %v2403 = vsel %vm2396, %v2399, %v2402
    %v2404 = vsel %vm2394, nan, %v2403
    %v2405 = vand.u32 2147483647, %v129
    %vm2406 = vcmp.le.f32.partialorder %v2405, 0.7853982
    %vm2407 = vcmp.lt.s32.totalorder %v129, 0
    %v2408 = vand.u32 %v129, 2139095040
    %v2409 = vshrl.u32 %v2408, 23
    %v2410 = vsub.s32 %v2409, 127
    %v2411 = vand.u32 2147483647, %v129
    %v2412 = vand.u32 %v2411, 8388607
    %v2413 = vor.u32 %v2412, 8388608
    %v2414 = vsub.s32 0, %v2413
    %v2415 = vadd.s32 %v2410, 1
    %vm2416 = vcmp.gt.s32.totalorder %v2415, 0
    %v2417 = vsel %vm2416, %v2415, 0
    %v2418 = vshrl.u32 %v2417, 5
    %v2419 = vand.u32 %v2417, 31
    %v2420 = vsub.s32 32, %v2419
    %v2421 = vshrl.u32 683565275, %v2420
    %v2422 = vshll.u32 683565275, %v2419
    %v2423 = vshrl.u32 2475754826, %v2420
    %v2424 = vor.u32 %v2422, %v2423
    %v2425 = vshll.u32 2475754826, %v2419
    %v2426 = vshrl.u32 2131351028, %v2420
    %v2427 = vor.u32 %v2425, %v2426
    %v2428 = vshll.u32 2131351028, %v2419
    %v2429 = vshrl.u32 2102212464, %v2420
    %v2430 = vor.u32 %v2428, %v2429
    %v2431 = vshll.u32 2102212464, %v2419
    %v2432 = vshrl.u32 920167782, %v2420
    %v2433 = vor.u32 %v2431, %v2432
    %v2434 = vshll.u32 920167782, %v2419
    %v2435 = vshrl.u32 1326507024, %v2420
    %v2436 = vor.u32 %v2434, %v2435
    %vm2437 = vcmp.lt.s32.totalorder %v2418, 1
    %vm2438 = vcmp.lt.s32.totalorder %v2418, 2
    %vm2439 = vcmp.lt.s32.totalorder %v2418, 3
    %vm2440 = vcmp.lt.s32.totalorder %v2418, 4
    %v2441 = vsel %vm2437, %v2421, %v2424
    %v2442 = vsel %vm2440, %v2430, 2102212464
    %v2443 = vsel %vm2439, %v2427, %v2442
    %v2444 = vsel %vm2438, %v2441, %v2443
    %v2445 = vsel %vm2437, %v2424, %v2427
    %v2446 = vsel %vm2440, %v2433, 920167782
    %v2447 = vsel %vm2439, %v2430, %v2446
    %v2448 = vsel %vm2438, %v2445, %v2447
    %v2449 = vsel %vm2437, %v2427, %v2430
    %v2450 = vsel %vm2440, %v2436, 1326507024
    %v2451 = vsel %vm2439, %v2433, %v2450
    %v2452 = vsel %vm2438, %v2449, %v2451
    %v2453 = vshll.u32 %v2413, 8
    %v2454 = vand.u32 %v2453, 65535
    %v2455 = vshrl.u32 %v2453, 16
    %v2456 = vand.u32 %v2452, 65535
    %v2457 = vshrl.u32 %v2452, 16
    %v2458 = vmul.u32 %v2454, %v2456
    %v2459 = vmul.u32 %v2454, %v2457
    %v2460 = vmul.u32 %v2455, %v2456
    %v2461 = vmul.u32 %v2455, %v2457
    %v2462 = vshll.u32 %v2459, 16
    %v2463 = vshrl.u32 %v2459, 16
    %v2464 = vshll.u32 %v2460, 16
    %v2465 = vshrl.u32 %v2460, 16
    %vm2466 = vc.u32 %v2458, %v2462
    %v2467 = vsel %vm2466, 1, 0
    %v2468 = vadd.s32 %v2458, %v2462
    %v2469 = vadd.s32 %v2461, %v2467
    %vm2470 = vc.u32 %v2468, %v2464
    %v2471 = vsel %vm2470, 1, 0
    %v2472 = vadd.s32 %v2468, %v2464
    %v2473 = vadd.s32 %v2469, %v2471
    %v2474 = vadd.s32 %v2473, %v2463
    %v2475 = vadd.s32 %v2474, %v2465
    %v2476 = vand.u32 %v2453, 65535
    %v2477 = vshrl.u32 %v2453, 16
    %v2478 = vand.u32 %v2448, 65535
    %v2479 = vshrl.u32 %v2448, 16
    %v2480 = vmul.u32 %v2476, %v2478
    %v2481 = vmul.u32 %v2476, %v2479
    %v2482 = vmul.u32 %v2477, %v2478
    %v2483 = vmul.u32 %v2477, %v2479
    %v2484 = vshll.u32 %v2481, 16
    %v2485 = vshrl.u32 %v2481, 16
    %v2486 = vshll.u32 %v2482, 16
    %v2487 = vshrl.u32 %v2482, 16
    %vm2488 = vc.u32 %v2480, %v2484
    %v2489 = vsel %vm2488, 1, 0
    %v2490 = vadd.s32 %v2480, %v2484
    %v2491 = vadd.s32 %v2483, %v2489
    %vm2492 = vc.u32 %v2490, %v2486
    %v2493 = vsel %vm2492, 1, 0
    %v2494 = vadd.s32 %v2490, %v2486
    %v2495 = vadd.s32 %v2491, %v2493
    %v2496 = vadd.s32 %v2495, %v2485
    %v2497 = vadd.s32 %v2496, %v2487
    %v2498 = vmul.u32 %v2453, %v2444
    %v2499 = vadd.s32 %v2475, %v2494
    %vm2500 = vc.u32 %v2475, %v2494
    %v2501 = vadd.s32 %v2497, 1
    %v2502 = vsel %vm2500, %v2501, %v2497
    %v2503 = vadd.s32 %v2498, %v2502
    %v2504 = vadd.s32 %v2503, 536870912
    %v2505 = vshrl.u32 %v2504, 30
    %v2506 = vshll.u32 %v2505, 30
    %v2507 = vsub.s32 %v2503, %v2506
    %vm2508 = vcmp.lt.s32.totalorder %v2507, 0
    %v2509 = vsub.s32 0, %v2507
    %v2510 = vsel %vm2508, %v2509, %v2507
    %v2511 = vclz %v2510
    %v2512 = vsub.s32 %v2511, 2
    %vm2513 = vcmp.gt.s32.totalorder 0, %v2512
    %v2514 = vsel %vm2513, 0, %v2512
    %v2515 = vsub.s32 32, %v2514
    %v2516 = vshll.u32 %v2507, %v2514
    %v2517 = vshrl.u32 %v2499, %v2515
    %v2518 = vor.u32 %v2516, %v2517
    %v2519 = vsub.s32 4294967266, %v2514
    %v2520 = vadd.s32 %v2519, 127
    %v2521 = vshll.u32 %v2520, 23
    %v2522 = vor.u32 4788187, %v2521
    %v2523 = vand.u32 2147483647, %v2522
    %v2525 = vcvt.s32.f32 %v2518
    %v2526 = vmul.f32 %v2525, %v2523
    %v2527 = vxor.u32 %v2526, 2147483648
    %v2528 = vsel %vm2407, %v2527, %v2526
    %v2529 = vsub.s32 4, %v2505
    %v2530 = vsel %vm2407, %v2529, %v2505
    %v2531 = vsel %vm2406, %v129, %v2528
    %v2532 = vsel %vm2406, 0, %v2530
    %v2533 = vmul.f32 %v2531, %v2531
    %v2534 = vmul.f32 %v2533, -0.001358992
    %v2535 = vadd.f32 %v2534, 0.041655596
    %v2536 = vmul.f32 %v2533, %v2535
    %v2537 = vadd.f32 %v2536, -0.4999988
    %v2538 = vmul.f32 %v2533, %v2537
    %v2539 = vadd.f32 1.0, %v2538
    %v2540 = vmul.f32 %v2531, %v2531
    %v2541 = vmul.f32 %v2540, -0.00019511016
    %v2542 = vadd.f32 %v2541, 0.008332121
    %v2543 = vmul.f32 %v2540, %v2542
    %v2544 = vadd.f32 %v2543, -0.16666654
    %v2545 = vmul.f32 %v2540, %v2544
    %v2546 = vadd.f32 %v2545, 1.0
    %v2547 = vmul.f32 %v2546, %v2531
    %vm2548 = vweird.f32 %v129
    %v2549 = vand.u32 %v2532, 3
    %vm2550 = vcmp.lt.s32.totalorder %v2549, 2
    %vm2551 = vcmp.eq.s32.totalorder %v2549, 0
    %v2552 = vxor.u32 %v2547, 2147483648
    %v2553 = vsel %vm2551, %v2539, %v2552
    %vm2554 = vcmp.eq.s32.totalorder %v2549, 2
    %v2555 = vxor.u32 %v2539, 2147483648
    %v2556 = vsel %vm2554, %v2555, %v2547
    %v2557 = vsel %vm2550, %v2553, %v2556
    %v2558 = vsel %vm2548, nan, %v2557
    %v2559 = vand.u32 2147483647, %v130
    %vm2560 = vcmp.le.f32.partialorder %v2559, 0.7853982
    %vm2561 = vcmp.lt.s32.totalorder %v130, 0
    %v2562 = vand.u32 %v130, 2139095040
    %v2563 = vshrl.u32 %v2562, 23
    %v2564 = vsub.s32 %v2563, 127
    %v2565 = vand.u32 2147483647, %v130
    %v2566 = vand.u32 %v2565, 8388607
    %v2567 = vor.u32 %v2566, 8388608
    %v2568 = vsub.s32 0, %v2567
    %v2569 = vadd.s32 %v2564, 1
    %vm2570 = vcmp.gt.s32.totalorder %v2569, 0
    %v2571 = vsel %vm2570, %v2569, 0
    %v2572 = vshrl.u32 %v2571, 5
    %v2573 = vand.u32 %v2571, 31
    %v2574 = vsub.s32 32, %v2573
    %v2575 = vshrl.u32 683565275, %v2574
    %v2576 = vshll.u32 683565275, %v2573
    %v2577 = vshrl.u32 2475754826, %v2574
    %v2578 = vor.u32 %v2576, %v2577
    %v2579 = vshll.u32 2475754826, %v2573
    %v2580 = vshrl.u32 2131351028, %v2574
    %v2581 = vor.u32 %v2579, %v2580
    %v2582 = vshll.u32 2131351028, %v2573
    %v2583 = vshrl.u32 2102212464, %v2574
    %v2584 = vor.u32 %v2582, %v2583
    %v2585 = vshll.u32 2102212464, %v2573
    %v2586 = vshrl.u32 920167782, %v2574
    %v2587 = vor.u32 %v2585, %v2586
    %v2588 = vshll.u32 920167782, %v2573
    %v2589 = vshrl.u32 1326507024, %v2574
    %v2590 = vor.u32 %v2588, %v2589
    %vm2591 = vcmp.lt.s32.totalorder %v2572, 1
    %vm2592 = vcmp.lt.s32.totalorder %v2572, 2
    %vm2593 = vcmp.lt.s32.totalorder %v2572, 3
    %vm2594 = vcmp.lt.s32.totalorder %v2572, 4
    %v2595 = vsel %vm2591, %v2575, %v2578
    %v2596 = vsel %vm2594, %v2584, 2102212464
    %v2597 = vsel %vm2593, %v2581, %v2596
    %v2598 = vsel %vm2592, %v2595, %v2597
    %v2599 = vsel %vm2591, %v2578, %v2581
    %v2600 = vsel %vm2594, %v2587, 920167782
    %v2601 = vsel %vm2593, %v2584, %v2600
    %v2602 = vsel %vm2592, %v2599, %v2601
    %v2603 = vsel %vm2591, %v2581, %v2584
    %v2604 = vsel %vm2594, %v2590, 1326507024
    %v2605 = vsel %vm2593, %v2587, %v2604
    %v2606 = vsel %vm2592, %v2603, %v2605
    %v2607 = vshll.u32 %v2567, 8
    %v2608 = vand.u32 %v2607, 65535
    %v2609 = vshrl.u32 %v2607, 16
    %v2610 = vand.u32 %v2606, 65535
    %v2611 = vshrl.u32 %v2606, 16
    %v2612 = vmul.u32 %v2608, %v2610
    %v2613 = vmul.u32 %v2608, %v2611
    %v2614 = vmul.u32 %v2609, %v2610
    %v2615 = vmul.u32 %v2609, %v2611
    %v2616 = vshll.u32 %v2613, 16
    %v2617 = vshrl.u32 %v2613, 16
    %v2618 = vshll.u32 %v2614, 16
    %v2619 = vshrl.u32 %v2614, 16
    %vm2620 = vc.u32 %v2612, %v2616
    %v2621 = vsel %vm2620, 1, 0
    %v2622 = vadd.s32 %v2612, %v2616
    %v2623 = vadd.s32 %v2615, %v2621
    %vm2624 = vc.u32 %v2622, %v2618
    %v2625 = vsel %vm2624, 1, 0
    %v2626 = vadd.s32 %v2622, %v2618
    %v2627 = vadd.s32 %v2623, %v2625
    %v2628 = vadd.s32 %v2627, %v2617
    %v2629 = vadd.s32 %v2628, %v2619
    %v2630 = vand.u32 %v2607, 65535
    %v2631 = vshrl.u32 %v2607, 16
    %v2632 = vand.u32 %v2602, 65535
    %v2633 = vshrl.u32 %v2602, 16
    %v2634 = vmul.u32 %v2630, %v2632
    %v2635 = vmul.u32 %v2630, %v2633
    %v2636 = vmul.u32 %v2631, %v2632
    %v2637 = vmul.u32 %v2631, %v2633
    %v2638 = vshll.u32 %v2635, 16
    %v2639 = vshrl.u32 %v2635, 16
    %v2640 = vshll.u32 %v2636, 16
    %v2641 = vshrl.u32 %v2636, 16
    %vm2642 = vc.u32 %v2634, %v2638
    %v2643 = vsel %vm2642, 1, 0
    %v2644 = vadd.s32 %v2634, %v2638
    %v2645 = vadd.s32 %v2637, %v2643
    %vm2646 = vc.u32 %v2644, %v2640
    %v2647 = vsel %vm2646, 1, 0
    %v2648 = vadd.s32 %v2644, %v2640
    %v2649 = vadd.s32 %v2645, %v2647
    %v2650 = vadd.s32 %v2649, %v2639
    %v2651 = vadd.s32 %v2650, %v2641
    %v2652 = vmul.u32 %v2607, %v2598
    %v2653 = vadd.s32 %v2629, %v2648
    %vm2654 = vc.u32 %v2629, %v2648
    %v2655 = vadd.s32 %v2651, 1
    %v2656 = vsel %vm2654, %v2655, %v2651
    %v2657 = vadd.s32 %v2652, %v2656
    %v2658 = vadd.s32 %v2657, 536870912
    %v2659 = vshrl.u32 %v2658, 30
    %v2660 = vshll.u32 %v2659, 30
    %v2661 = vsub.s32 %v2657, %v2660
    %vm2662 = vcmp.lt.s32.totalorder %v2661, 0
    %v2663 = vsub.s32 0, %v2661
    %v2664 = vsel %vm2662, %v2663, %v2661
    %v2665 = vclz %v2664
    %v2666 = vsub.s32 %v2665, 2
    %vm2667 = vcmp.gt.s32.totalorder 0, %v2666
    %v2668 = vsel %vm2667, 0, %v2666
    %v2669 = vsub.s32 32, %v2668
    %v2670 = vshll.u32 %v2661, %v2668
    %v2671 = vshrl.u32 %v2653, %v2669
    %v2672 = vor.u32 %v2670, %v2671
    %v2673 = vsub.s32 4294967266, %v2668
    %v2674 = vadd.s32 %v2673, 127
    %v2675 = vshll.u32 %v2674, 23
    %v2676 = vor.u32 4788187, %v2675
    %v2677 = vand.u32 2147483647, %v2676
    %v2679 = vcvt.s32.f32 %v2672
    %v2680 = vmul.f32 %v2679, %v2677
    %v2681 = vxor.u32 %v2680, 2147483648
    %v2682 = vsel %vm2561, %v2681, %v2680
    %v2683 = vsub.s32 4, %v2659
    %v2684 = vsel %vm2561, %v2683, %v2659
    %v2685 = vsel %vm2560, %v130, %v2682
    %v2686 = vsel %vm2560, 0, %v2684
    %v2687 = vmul.f32 %v2685, %v2685
    %v2688 = vmul.f32 %v2687, -0.001358992
    %v2689 = vadd.f32 %v2688, 0.041655596
    %v2690 = vmul.f32 %v2687, %v2689
    %v2691 = vadd.f32 %v2690, -0.4999988
    %v2692 = vmul.f32 %v2687, %v2691
    %v2693 = vadd.f32 1.0, %v2692
    %v2694 = vmul.f32 %v2685, %v2685
    %v2695 = vmul.f32 %v2694, -0.00019511016
    %v2696 = vadd.f32 %v2695, 0.008332121
    %v2697 = vmul.f32 %v2694, %v2696
    %v2698 = vadd.f32 %v2697, -0.16666654
    %v2699 = vmul.f32 %v2694, %v2698
    %v2700 = vadd.f32 %v2699, 1.0
    %v2701 = vmul.f32 %v2700, %v2685
    %vm2702 = vweird.f32 %v130
    %v2703 = vand.u32 %v2686, 3
    %vm2704 = vcmp.lt.s32.totalorder %v2703, 2
    %vm2705 = vcmp.eq.s32.totalorder %v2703, 0
    %v2706 = vxor.u32 %v2701, 2147483648
    %v2707 = vsel %vm2705, %v2693, %v2706
    %vm2708 = vcmp.eq.s32.totalorder %v2703, 2
    %v2709 = vxor.u32 %v2693, 2147483648
    %v2710 = vsel %vm2708, %v2709, %v2701
    %v2711 = vsel %vm2704, %v2707, %v2710
    %v2712 = vsel %vm2702, nan, %v2711
    %v2713 = vsel %vm233, %v402, 0.0
    %v2714 = vsel %vm234, %v556, 0.0
    %v2715 = vsel %vm235, %v710, 0.0
    %v2716 = vsel %vm236, %v864, 0.0
    %v2717 = vsel %vm237, %v1018, 0.0
    %v2718 = vsel %vm238, %v1172, 0.0
    %v2719 = vsel %vm239, %v1326, 0.0
    %v2720 = vsel %vm240, %v1480, 0.0
    %v2721 = vsel %vm241, %v1634, 0.0
    %v2722 = vsel %vm242, %v1788, 0.0
    %v2723 = vsel %vm243, %v1942, 0.0
    %v2724 = vsel %vm244, %v2096, 0.0
    %v2725 = vsel %vm245, %v2250, 0.0
    %v2726 = vsel %vm246, %v2404, 0.0
    %v2727 = vsel %vm247, %v2558, 0.0
    %v2728 = vsel %vm248, %v2712, 0.0
    %v2729 = vand.u32 2147483647, %v115
    %vm2730 = vcmp.le.f32.partialorder %v2729, 0.7853982
    %vm2731 = vcmp.lt.s32.totalorder %v115, 0
    %v2732 = vand.u32 %v115, 2139095040
    %v2733 = vshrl.u32 %v2732, 23
    %v2734 = vsub.s32 %v2733, 127
    %v2735 = vand.u32 2147483647, %v115
    %v2736 = vand.u32 %v2735, 8388607
    %v2737 = vor.u32 %v2736, 8388608
    %v2738 = vsub.s32 0, %v2737
    %v2739 = vadd.s32 %v2734, 1
    %vm2740 = vcmp.gt.s32.totalorder %v2739, 0
    %v2741 = vsel %vm2740, %v2739, 0
    %v2742 = vshrl.u32 %v2741, 5
    %v2743 = vand.u32 %v2741, 31
    %v2744 = vsub.s32 32, %v2743
    %v2745 = vshrl.u32 683565275, %v2744
    %v2746 = vshll.u32 683565275, %v2743
    %v2747 = vshrl.u32 2475754826, %v2744
    %v2748 = vor.u32 %v2746, %v2747
    %v2749 = vshll.u32 2475754826, %v2743
    %v2750 = vshrl.u32 2131351028, %v2744
    %v2751 = vor.u32 %v2749, %v2750
    %v2752 = vshll.u32 2131351028, %v2743
    %v2753 = vshrl.u32 2102212464, %v2744
    %v2754 = vor.u32 %v2752, %v2753
    %v2755 = vshll.u32 2102212464, %v2743
    %v2756 = vshrl.u32 920167782, %v2744
    %v2757 = vor.u32 %v2755, %v2756
    %v2758 = vshll.u32 920167782, %v2743
    %v2759 = vshrl.u32 1326507024, %v2744
    %v2760 = vor.u32 %v2758, %v2759
    %vm2761 = vcmp.lt.s32.totalorder %v2742, 1
    %vm2762 = vcmp.lt.s32.totalorder %v2742, 2
    %vm2763 = vcmp.lt.s32.totalorder %v2742, 3
    %vm2764 = vcmp.lt.s32.totalorder %v2742, 4
    %v2765 = vsel %vm2761, %v2745, %v2748
    %v2766 = vsel %vm2764, %v2754, 2102212464
    %v2767 = vsel %vm2763, %v2751, %v2766
    %v2768 = vsel %vm2762, %v2765, %v2767
    %v2769 = vsel %vm2761, %v2748, %v2751
    %v2770 = vsel %vm2764, %v2757, 920167782
    %v2771 = vsel %vm2763, %v2754, %v2770
    %v2772 = vsel %vm2762, %v2769, %v2771
    %v2773 = vsel %vm2761, %v2751, %v2754
    %v2774 = vsel %vm2764, %v2760, 1326507024
    %v2775 = vsel %vm2763, %v2757, %v2774
    %v2776 = vsel %vm2762, %v2773, %v2775
    %v2777 = vshll.u32 %v2737, 8
    %v2778 = vand.u32 %v2777, 65535
    %v2779 = vshrl.u32 %v2777, 16
    %v2780 = vand.u32 %v2776, 65535
    %v2781 = vshrl.u32 %v2776, 16
    %v2782 = vmul.u32 %v2778, %v2780
    %v2783 = vmul.u32 %v2778, %v2781
    %v2784 = vmul.u32 %v2779, %v2780
    %v2785 = vmul.u32 %v2779, %v2781
    %v2786 = vshll.u32 %v2783, 16
    %v2787 = vshrl.u32 %v2783, 16
    %v2788 = vshll.u32 %v2784, 16
    %v2789 = vshrl.u32 %v2784, 16
    %vm2790 = vc.u32 %v2782, %v2786
    %v2791 = vsel %vm2790, 1, 0
    %v2792 = vadd.s32 %v2782, %v2786
    %v2793 = vadd.s32 %v2785, %v2791
    %vm2794 = vc.u32 %v2792, %v2788
    %v2795 = vsel %vm2794, 1, 0
    %v2796 = vadd.s32 %v2792, %v2788
    %v2797 = vadd.s32 %v2793, %v2795
    %v2798 = vadd.s32 %v2797, %v2787
    %v2799 = vadd.s32 %v2798, %v2789
    %v2800 = vand.u32 %v2777, 65535
    %v2801 = vshrl.u32 %v2777, 16
    %v2802 = vand.u32 %v2772, 65535
    %v2803 = vshrl.u32 %v2772, 16
    %v2804 = vmul.u32 %v2800, %v2802
    %v2805 = vmul.u32 %v2800, %v2803
    %v2806 = vmul.u32 %v2801, %v2802
    %v2807 = vmul.u32 %v2801, %v2803
    %v2808 = vshll.u32 %v2805, 16
    %v2809 = vshrl.u32 %v2805, 16
    %v2810 = vshll.u32 %v2806, 16
    %v2811 = vshrl.u32 %v2806, 16
    %vm2812 = vc.u32 %v2804, %v2808
    %v2813 = vsel %vm2812, 1, 0
    %v2814 = vadd.s32 %v2804, %v2808
    %v2815 = vadd.s32 %v2807, %v2813
    %vm2816 = vc.u32 %v2814, %v2810
    %v2817 = vsel %vm2816, 1, 0
    %v2818 = vadd.s32 %v2814, %v2810
    %v2819 = vadd.s32 %v2815, %v2817
    %v2820 = vadd.s32 %v2819, %v2809
    %v2821 = vadd.s32 %v2820, %v2811
    %v2822 = vmul.u32 %v2777, %v2768
    %v2823 = vadd.s32 %v2799, %v2818
    %vm2824 = vc.u32 %v2799, %v2818
    %v2825 = vadd.s32 %v2821, 1
    %v2826 = vsel %vm2824, %v2825, %v2821
    %v2827 = vadd.s32 %v2822, %v2826
    %v2828 = vadd.s32 %v2827, 536870912
    %v2829 = vshrl.u32 %v2828, 30
    %v2830 = vshll.u32 %v2829, 30
    %v2831 = vsub.s32 %v2827, %v2830
    %vm2832 = vcmp.lt.s32.totalorder %v2831, 0
    %v2833 = vsub.s32 0, %v2831
    %v2834 = vsel %vm2832, %v2833, %v2831
    %v2835 = vclz %v2834
    %v2836 = vsub.s32 %v2835, 2
    %vm2837 = vcmp.gt.s32.totalorder 0, %v2836
    %v2838 = vsel %vm2837, 0, %v2836
    %v2839 = vsub.s32 32, %v2838
    %v2840 = vshll.u32 %v2831, %v2838
    %v2841 = vshrl.u32 %v2823, %v2839
    %v2842 = vor.u32 %v2840, %v2841
    %v2843 = vsub.s32 4294967266, %v2838
    %v2844 = vadd.s32 %v2843, 127
    %v2845 = vshll.u32 %v2844, 23
    %v2846 = vor.u32 4788187, %v2845
    %v2847 = vand.u32 2147483647, %v2846
    %v2849 = vcvt.s32.f32 %v2842
    %v2850 = vmul.f32 %v2849, %v2847
    %v2851 = vxor.u32 %v2850, 2147483648
    %v2852 = vsel %vm2731, %v2851, %v2850
    %v2853 = vsub.s32 4, %v2829
    %v2854 = vsel %vm2731, %v2853, %v2829
    %v2855 = vsel %vm2730, %v115, %v2852
    %v2856 = vsel %vm2730, 0, %v2854
    %v2857 = vmul.f32 %v2855, %v2855
    %v2858 = vmul.f32 %v2857, -0.001358992
    %v2859 = vadd.f32 %v2858, 0.041655596
    %v2860 = vmul.f32 %v2857, %v2859
    %v2861 = vadd.f32 %v2860, -0.4999988
    %v2862 = vmul.f32 %v2857, %v2861
    %v2863 = vadd.f32 1.0, %v2862
    %v2864 = vmul.f32 %v2855, %v2855
    %v2865 = vmul.f32 %v2864, -0.00019511016
    %v2866 = vadd.f32 %v2865, 0.008332121
    %v2867 = vmul.f32 %v2864, %v2866
    %v2868 = vadd.f32 %v2867, -0.16666654
    %v2869 = vmul.f32 %v2864, %v2868
    %v2870 = vadd.f32 %v2869, 1.0
    %v2871 = vmul.f32 %v2870, %v2855
    %vm2872 = vweird.f32 %v115
    %v2873 = vadd.s32 %v2856, 3
    %v2874 = vand.u32 %v2873, 3
    %vm2875 = vcmp.lt.s32.totalorder %v2874, 2
    %vm2876 = vcmp.eq.s32.totalorder %v2874, 0
    %v2877 = vxor.u32 %v2871, 2147483648
    %v2878 = vsel %vm2876, %v2863, %v2877
    %vm2879 = vcmp.eq.s32.totalorder %v2874, 2
    %v2880 = vxor.u32 %v2863, 2147483648
    %v2881 = vsel %vm2879, %v2880, %v2871
    %v2882 = vsel %vm2875, %v2878, %v2881
    %v2883 = vsel %vm2872, nan, %v2882
    %v2884 = vand.u32 2147483647, %v116
    %vm2885 = vcmp.le.f32.partialorder %v2884, 0.7853982
    %vm2886 = vcmp.lt.s32.totalorder %v116, 0
    %v2887 = vand.u32 %v116, 2139095040
    %v2888 = vshrl.u32 %v2887, 23
    %v2889 = vsub.s32 %v2888, 127
    %v2890 = vand.u32 2147483647, %v116
    %v2891 = vand.u32 %v2890, 8388607
    %v2892 = vor.u32 %v2891, 8388608
    %v2893 = vsub.s32 0, %v2892
    %v2894 = vadd.s32 %v2889, 1
    %vm2895 = vcmp.gt.s32.totalorder %v2894, 0
    %v2896 = vsel %vm2895, %v2894, 0
    %v2897 = vshrl.u32 %v2896, 5
    %v2898 = vand.u32 %v2896, 31
    %v2899 = vsub.s32 32, %v2898
    %v2900 = vshrl.u32 683565275, %v2899
    %v2901 = vshll.u32 683565275, %v2898
    %v2902 = vshrl.u32 2475754826, %v2899
    %v2903 = vor.u32 %v2901, %v2902
    %v2904 = vshll.u32 2475754826, %v2898
    %v2905 = vshrl.u32 2131351028, %v2899
    %v2906 = vor.u32 %v2904, %v2905
    %v2907 = vshll.u32 2131351028, %v2898
    %v2908 = vshrl.u32 2102212464, %v2899
    %v2909 = vor.u32 %v2907, %v2908
    %v2910 = vshll.u32 2102212464, %v2898
    %v2911 = vshrl.u32 920167782, %v2899
    %v2912 = vor.u32 %v2910, %v2911
    %v2913 = vshll.u32 920167782, %v2898
    %v2914 = vshrl.u32 1326507024, %v2899
    %v2915 = vor.u32 %v2913, %v2914
    %vm2916 = vcmp.lt.s32.totalorder %v2897, 1
    %vm2917 = vcmp.lt.s32.totalorder %v2897, 2
    %vm2918 = vcmp.lt.s32.totalorder %v2897, 3
    %vm2919 = vcmp.lt.s32.totalorder %v2897, 4
    %v2920 = vsel %vm2916, %v2900, %v2903
    %v2921 = vsel %vm2919, %v2909, 2102212464
    %v2922 = vsel %vm2918, %v2906, %v2921
    %v2923 = vsel %vm2917, %v2920, %v2922
    %v2924 = vsel %vm2916, %v2903, %v2906
    %v2925 = vsel %vm2919, %v2912, 920167782
    %v2926 = vsel %vm2918, %v2909, %v2925
    %v2927 = vsel %vm2917, %v2924, %v2926
    %v2928 = vsel %vm2916, %v2906, %v2909
    %v2929 = vsel %vm2919, %v2915, 1326507024
    %v2930 = vsel %vm2918, %v2912, %v2929
    %v2931 = vsel %vm2917, %v2928, %v2930
    %v2932 = vshll.u32 %v2892, 8
    %v2933 = vand.u32 %v2932, 65535
    %v2934 = vshrl.u32 %v2932, 16
    %v2935 = vand.u32 %v2931, 65535
    %v2936 = vshrl.u32 %v2931, 16
    %v2937 = vmul.u32 %v2933, %v2935
    %v2938 = vmul.u32 %v2933, %v2936
    %v2939 = vmul.u32 %v2934, %v2935
    %v2940 = vmul.u32 %v2934, %v2936
    %v2941 = vshll.u32 %v2938, 16
    %v2942 = vshrl.u32 %v2938, 16
    %v2943 = vshll.u32 %v2939, 16
    %v2944 = vshrl.u32 %v2939, 16
    %vm2945 = vc.u32 %v2937, %v2941
    %v2946 = vsel %vm2945, 1, 0
    %v2947 = vadd.s32 %v2937, %v2941
    %v2948 = vadd.s32 %v2940, %v2946
    %vm2949 = vc.u32 %v2947, %v2943
    %v2950 = vsel %vm2949, 1, 0
    %v2951 = vadd.s32 %v2947, %v2943
    %v2952 = vadd.s32 %v2948, %v2950
    %v2953 = vadd.s32 %v2952, %v2942
    %v2954 = vadd.s32 %v2953, %v2944
    %v2955 = vand.u32 %v2932, 65535
    %v2956 = vshrl.u32 %v2932, 16
    %v2957 = vand.u32 %v2927, 65535
    %v2958 = vshrl.u32 %v2927, 16
    %v2959 = vmul.u32 %v2955, %v2957
    %v2960 = vmul.u32 %v2955, %v2958
    %v2961 = vmul.u32 %v2956, %v2957
    %v2962 = vmul.u32 %v2956, %v2958
    %v2963 = vshll.u32 %v2960, 16
    %v2964 = vshrl.u32 %v2960, 16
    %v2965 = vshll.u32 %v2961, 16
    %v2966 = vshrl.u32 %v2961, 16
    %vm2967 = vc.u32 %v2959, %v2963
    %v2968 = vsel %vm2967, 1, 0
    %v2969 = vadd.s32 %v2959, %v2963
    %v2970 = vadd.s32 %v2962, %v2968
    %vm2971 = vc.u32 %v2969, %v2965
    %v2972 = vsel %vm2971, 1, 0
    %v2973 = vadd.s32 %v2969, %v2965
    %v2974 = vadd.s32 %v2970, %v2972
    %v2975 = vadd.s32 %v2974, %v2964
    %v2976 = vadd.s32 %v2975, %v2966
    %v2977 = vmul.u32 %v2932, %v2923
    %v2978 = vadd.s32 %v2954, %v2973
    %vm2979 = vc.u32 %v2954, %v2973
    %v2980 = vadd.s32 %v2976, 1
    %v2981 = vsel %vm2979, %v2980, %v2976
    %v2982 = vadd.s32 %v2977, %v2981
    %v2983 = vadd.s32 %v2982, 536870912
    %v2984 = vshrl.u32 %v2983, 30
    %v2985 = vshll.u32 %v2984, 30
    %v2986 = vsub.s32 %v2982, %v2985
    %vm2987 = vcmp.lt.s32.totalorder %v2986, 0
    %v2988 = vsub.s32 0, %v2986
    %v2989 = vsel %vm2987, %v2988, %v2986
    %v2990 = vclz %v2989
    %v2991 = vsub.s32 %v2990, 2
    %vm2992 = vcmp.gt.s32.totalorder 0, %v2991
    %v2993 = vsel %vm2992, 0, %v2991
    %v2994 = vsub.s32 32, %v2993
    %v2995 = vshll.u32 %v2986, %v2993
    %v2996 = vshrl.u32 %v2978, %v2994
    %v2997 = vor.u32 %v2995, %v2996
    %v2998 = vsub.s32 4294967266, %v2993
    %v2999 = vadd.s32 %v2998, 127
    %v3000 = vshll.u32 %v2999, 23
    %v3001 = vor.u32 4788187, %v3000
    %v3002 = vand.u32 2147483647, %v3001
    %v3004 = vcvt.s32.f32 %v2997
    %v3005 = vmul.f32 %v3004, %v3002
    %v3006 = vxor.u32 %v3005, 2147483648
    %v3007 = vsel %vm2886, %v3006, %v3005
    %v3008 = vsub.s32 4, %v2984
    %v3009 = vsel %vm2886, %v3008, %v2984
    %v3010 = vsel %vm2885, %v116, %v3007
    %v3011 = vsel %vm2885, 0, %v3009
    %v3012 = vmul.f32 %v3010, %v3010
    %v3013 = vmul.f32 %v3012, -0.001358992
    %v3014 = vadd.f32 %v3013, 0.041655596
    %v3015 = vmul.f32 %v3012, %v3014
    %v3016 = vadd.f32 %v3015, -0.4999988
    %v3017 = vmul.f32 %v3012, %v3016
    %v3018 = vadd.f32 1.0, %v3017
    %v3019 = vmul.f32 %v3010, %v3010
    %v3020 = vmul.f32 %v3019, -0.00019511016
    %v3021 = vadd.f32 %v3020, 0.008332121
    %v3022 = vmul.f32 %v3019, %v3021
    %v3023 = vadd.f32 %v3022, -0.16666654
    %v3024 = vmul.f32 %v3019, %v3023
    %v3025 = vadd.f32 %v3024, 1.0
    %v3026 = vmul.f32 %v3025, %v3010
    %vm3027 = vweird.f32 %v116
    %v3028 = vadd.s32 %v3011, 3
    %v3029 = vand.u32 %v3028, 3
    %vm3030 = vcmp.lt.s32.totalorder %v3029, 2
    %vm3031 = vcmp.eq.s32.totalorder %v3029, 0
    %v3032 = vxor.u32 %v3026, 2147483648
    %v3033 = vsel %vm3031, %v3018, %v3032
    %vm3034 = vcmp.eq.s32.totalorder %v3029, 2
    %v3035 = vxor.u32 %v3018, 2147483648
    %v3036 = vsel %vm3034, %v3035, %v3026
    %v3037 = vsel %vm3030, %v3033, %v3036
    %v3038 = vsel %vm3027, nan, %v3037
    %v3039 = vand.u32 2147483647, %v117
    %vm3040 = vcmp.le.f32.partialorder %v3039, 0.7853982
    %vm3041 = vcmp.lt.s32.totalorder %v117, 0
    %v3042 = vand.u32 %v117, 2139095040
    %v3043 = vshrl.u32 %v3042, 23
    %v3044 = vsub.s32 %v3043, 127
    %v3045 = vand.u32 2147483647, %v117
    %v3046 = vand.u32 %v3045, 8388607
    %v3047 = vor.u32 %v3046, 8388608
    %v3048 = vsub.s32 0, %v3047
    %v3049 = vadd.s32 %v3044, 1
    %vm3050 = vcmp.gt.s32.totalorder %v3049, 0
    %v3051 = vsel %vm3050, %v3049, 0
    %v3052 = vshrl.u32 %v3051, 5
    %v3053 = vand.u32 %v3051, 31
    %v3054 = vsub.s32 32, %v3053
    %v3055 = vshrl.u32 683565275, %v3054
    %v3056 = vshll.u32 683565275, %v3053
    %v3057 = vshrl.u32 2475754826, %v3054
    %v3058 = vor.u32 %v3056, %v3057
    %v3059 = vshll.u32 2475754826, %v3053
    %v3060 = vshrl.u32 2131351028, %v3054
    %v3061 = vor.u32 %v3059, %v3060
    %v3062 = vshll.u32 2131351028, %v3053
    %v3063 = vshrl.u32 2102212464, %v3054
    %v3064 = vor.u32 %v3062, %v3063
    %v3065 = vshll.u32 2102212464, %v3053
    %v3066 = vshrl.u32 920167782, %v3054
    %v3067 = vor.u32 %v3065, %v3066
    %v3068 = vshll.u32 920167782, %v3053
    %v3069 = vshrl.u32 1326507024, %v3054
    %v3070 = vor.u32 %v3068, %v3069
    %vm3071 = vcmp.lt.s32.totalorder %v3052, 1
    %vm3072 = vcmp.lt.s32.totalorder %v3052, 2
    %vm3073 = vcmp.lt.s32.totalorder %v3052, 3
    %vm3074 = vcmp.lt.s32.totalorder %v3052, 4
    %v3075 = vsel %vm3071, %v3055, %v3058
    %v3076 = vsel %vm3074, %v3064, 2102212464
    %v3077 = vsel %vm3073, %v3061, %v3076
    %v3078 = vsel %vm3072, %v3075, %v3077
    %v3079 = vsel %vm3071, %v3058, %v3061
    %v3080 = vsel %vm3074, %v3067, 920167782
    %v3081 = vsel %vm3073, %v3064, %v3080
    %v3082 = vsel %vm3072, %v3079, %v3081
    %v3083 = vsel %vm3071, %v3061, %v3064
    %v3084 = vsel %vm3074, %v3070, 1326507024
    %v3085 = vsel %vm3073, %v3067, %v3084
    %v3086 = vsel %vm3072, %v3083, %v3085
    %v3087 = vshll.u32 %v3047, 8
    %v3088 = vand.u32 %v3087, 65535
    %v3089 = vshrl.u32 %v3087, 16
    %v3090 = vand.u32 %v3086, 65535
    %v3091 = vshrl.u32 %v3086, 16
    %v3092 = vmul.u32 %v3088, %v3090
    %v3093 = vmul.u32 %v3088, %v3091
    %v3094 = vmul.u32 %v3089, %v3090
    %v3095 = vmul.u32 %v3089, %v3091
    %v3096 = vshll.u32 %v3093, 16
    %v3097 = vshrl.u32 %v3093, 16
    %v3098 = vshll.u32 %v3094, 16
    %v3099 = vshrl.u32 %v3094, 16
    %vm3100 = vc.u32 %v3092, %v3096
    %v3101 = vsel %vm3100, 1, 0
    %v3102 = vadd.s32 %v3092, %v3096
    %v3103 = vadd.s32 %v3095, %v3101
    %vm3104 = vc.u32 %v3102, %v3098
    %v3105 = vsel %vm3104, 1, 0
    %v3106 = vadd.s32 %v3102, %v3098
    %v3107 = vadd.s32 %v3103, %v3105
    %v3108 = vadd.s32 %v3107, %v3097
    %v3109 = vadd.s32 %v3108, %v3099
    %v3110 = vand.u32 %v3087, 65535
    %v3111 = vshrl.u32 %v3087, 16
    %v3112 = vand.u32 %v3082, 65535
    %v3113 = vshrl.u32 %v3082, 16
    %v3114 = vmul.u32 %v3110, %v3112
    %v3115 = vmul.u32 %v3110, %v3113
    %v3116 = vmul.u32 %v3111, %v3112
    %v3117 = vmul.u32 %v3111, %v3113
    %v3118 = vshll.u32 %v3115, 16
    %v3119 = vshrl.u32 %v3115, 16
    %v3120 = vshll.u32 %v3116, 16
    %v3121 = vshrl.u32 %v3116, 16
    %vm3122 = vc.u32 %v3114, %v3118
    %v3123 = vsel %vm3122, 1, 0
    %v3124 = vadd.s32 %v3114, %v3118
    %v3125 = vadd.s32 %v3117, %v3123
    %vm3126 = vc.u32 %v3124, %v3120
    %v3127 = vsel %vm3126, 1, 0
    %v3128 = vadd.s32 %v3124, %v3120
    %v3129 = vadd.s32 %v3125, %v3127
    %v3130 = vadd.s32 %v3129, %v3119
    %v3131 = vadd.s32 %v3130, %v3121
    %v3132 = vmul.u32 %v3087, %v3078
    %v3133 = vadd.s32 %v3109, %v3128
    %vm3134 = vc.u32 %v3109, %v3128
    %v3135 = vadd.s32 %v3131, 1
    %v3136 = vsel %vm3134, %v3135, %v3131
    %v3137 = vadd.s32 %v3132, %v3136
    %v3138 = vadd.s32 %v3137, 536870912
    %v3139 = vshrl.u32 %v3138, 30
    %v3140 = vshll.u32 %v3139, 30
    %v3141 = vsub.s32 %v3137, %v3140
    %vm3142 = vcmp.lt.s32.totalorder %v3141, 0
    %v3143 = vsub.s32 0, %v3141
    %v3144 = vsel %vm3142, %v3143, %v3141
    %v3145 = vclz %v3144
    %v3146 = vsub.s32 %v3145, 2
    %vm3147 = vcmp.gt.s32.totalorder 0, %v3146
    %v3148 = vsel %vm3147, 0, %v3146
    %v3149 = vsub.s32 32, %v3148
    %v3150 = vshll.u32 %v3141, %v3148
    %v3151 = vshrl.u32 %v3133, %v3149
    %v3152 = vor.u32 %v3150, %v3151
    %v3153 = vsub.s32 4294967266, %v3148
    %v3154 = vadd.s32 %v3153, 127
    %v3155 = vshll.u32 %v3154, 23
    %v3156 = vor.u32 4788187, %v3155
    %v3157 = vand.u32 2147483647, %v3156
    %v3159 = vcvt.s32.f32 %v3152
    %v3160 = vmul.f32 %v3159, %v3157
    %v3161 = vxor.u32 %v3160, 2147483648
    %v3162 = vsel %vm3041, %v3161, %v3160
    %v3163 = vsub.s32 4, %v3139
    %v3164 = vsel %vm3041, %v3163, %v3139
    %v3165 = vsel %vm3040, %v117, %v3162
    %v3166 = vsel %vm3040, 0, %v3164
    %v3167 = vmul.f32 %v3165, %v3165
    %v3168 = vmul.f32 %v3167, -0.001358992
    %v3169 = vadd.f32 %v3168, 0.041655596
    %v3170 = vmul.f32 %v3167, %v3169
    %v3171 = vadd.f32 %v3170, -0.4999988
    %v3172 = vmul.f32 %v3167, %v3171
    %v3173 = vadd.f32 1.0, %v3172
    %v3174 = vmul.f32 %v3165, %v3165
    %v3175 = vmul.f32 %v3174, -0.00019511016
    %v3176 = vadd.f32 %v3175, 0.008332121
    %v3177 = vmul.f32 %v3174, %v3176
    %v3178 = vadd.f32 %v3177, -0.16666654
    %v3179 = vmul.f32 %v3174, %v3178
    %v3180 = vadd.f32 %v3179, 1.0
    %v3181 = vmul.f32 %v3180, %v3165
    %vm3182 = vweird.f32 %v117
    %v3183 = vadd.s32 %v3166, 3
    %v3184 = vand.u32 %v3183, 3
    %vm3185 = vcmp.lt.s32.totalorder %v3184, 2
    %vm3186 = vcmp.eq.s32.totalorder %v3184, 0
    %v3187 = vxor.u32 %v3181, 2147483648
    %v3188 = vsel %vm3186, %v3173, %v3187
    %vm3189 = vcmp.eq.s32.totalorder %v3184, 2
    %v3190 = vxor.u32 %v3173, 2147483648
    %v3191 = vsel %vm3189, %v3190, %v3181
    %v3192 = vsel %vm3185, %v3188, %v3191
    %v3193 = vsel %vm3182, nan, %v3192
    %v3194 = vand.u32 2147483647, %v118
    %vm3195 = vcmp.le.f32.partialorder %v3194, 0.7853982
    %vm3196 = vcmp.lt.s32.totalorder %v118, 0
    %v3197 = vand.u32 %v118, 2139095040
    %v3198 = vshrl.u32 %v3197, 23
    %v3199 = vsub.s32 %v3198, 127
    %v3200 = vand.u32 2147483647, %v118
    %v3201 = vand.u32 %v3200, 8388607
    %v3202 = vor.u32 %v3201, 8388608
    %v3203 = vsub.s32 0, %v3202
    %v3204 = vadd.s32 %v3199, 1
    %vm3205 = vcmp.gt.s32.totalorder %v3204, 0
    %v3206 = vsel %vm3205, %v3204, 0
    %v3207 = vshrl.u32 %v3206, 5
    %v3208 = vand.u32 %v3206, 31
    %v3209 = vsub.s32 32, %v3208
    %v3210 = vshrl.u32 683565275, %v3209
    %v3211 = vshll.u32 683565275, %v3208
    %v3212 = vshrl.u32 2475754826, %v3209
    %v3213 = vor.u32 %v3211, %v3212
    %v3214 = vshll.u32 2475754826, %v3208
    %v3215 = vshrl.u32 2131351028, %v3209
    %v3216 = vor.u32 %v3214, %v3215
    %v3217 = vshll.u32 2131351028, %v3208
    %v3218 = vshrl.u32 2102212464, %v3209
    %v3219 = vor.u32 %v3217, %v3218
    %v3220 = vshll.u32 2102212464, %v3208
    %v3221 = vshrl.u32 920167782, %v3209
    %v3222 = vor.u32 %v3220, %v3221
    %v3223 = vshll.u32 920167782, %v3208
    %v3224 = vshrl.u32 1326507024, %v3209
    %v3225 = vor.u32 %v3223, %v3224
    %vm3226 = vcmp.lt.s32.totalorder %v3207, 1
    %vm3227 = vcmp.lt.s32.totalorder %v3207, 2
    %vm3228 = vcmp.lt.s32.totalorder %v3207, 3
    %vm3229 = vcmp.lt.s32.totalorder %v3207, 4
    %v3230 = vsel %vm3226, %v3210, %v3213
    %v3231 = vsel %vm3229, %v3219, 2102212464
    %v3232 = vsel %vm3228, %v3216, %v3231
    %v3233 = vsel %vm3227, %v3230, %v3232
    %v3234 = vsel %vm3226, %v3213, %v3216
    %v3235 = vsel %vm3229, %v3222, 920167782
    %v3236 = vsel %vm3228, %v3219, %v3235
    %v3237 = vsel %vm3227, %v3234, %v3236
    %v3238 = vsel %vm3226, %v3216, %v3219
    %v3239 = vsel %vm3229, %v3225, 1326507024
    %v3240 = vsel %vm3228, %v3222, %v3239
    %v3241 = vsel %vm3227, %v3238, %v3240
    %v3242 = vshll.u32 %v3202, 8
    %v3243 = vand.u32 %v3242, 65535
    %v3244 = vshrl.u32 %v3242, 16
    %v3245 = vand.u32 %v3241, 65535
    %v3246 = vshrl.u32 %v3241, 16
    %v3247 = vmul.u32 %v3243, %v3245
    %v3248 = vmul.u32 %v3243, %v3246
    %v3249 = vmul.u32 %v3244, %v3245
    %v3250 = vmul.u32 %v3244, %v3246
    %v3251 = vshll.u32 %v3248, 16
    %v3252 = vshrl.u32 %v3248, 16
    %v3253 = vshll.u32 %v3249, 16
    %v3254 = vshrl.u32 %v3249, 16
    %vm3255 = vc.u32 %v3247, %v3251
    %v3256 = vsel %vm3255, 1, 0
    %v3257 = vadd.s32 %v3247, %v3251
    %v3258 = vadd.s32 %v3250, %v3256
    %vm3259 = vc.u32 %v3257, %v3253
    %v3260 = vsel %vm3259, 1, 0
    %v3261 = vadd.s32 %v3257, %v3253
    %v3262 = vadd.s32 %v3258, %v3260
    %v3263 = vadd.s32 %v3262, %v3252
    %v3264 = vadd.s32 %v3263, %v3254
    %v3265 = vand.u32 %v3242, 65535
    %v3266 = vshrl.u32 %v3242, 16
    %v3267 = vand.u32 %v3237, 65535
    %v3268 = vshrl.u32 %v3237, 16
    %v3269 = vmul.u32 %v3265, %v3267
    %v3270 = vmul.u32 %v3265, %v3268
    %v3271 = vmul.u32 %v3266, %v3267
    %v3272 = vmul.u32 %v3266, %v3268
    %v3273 = vshll.u32 %v3270, 16
    %v3274 = vshrl.u32 %v3270, 16
    %v3275 = vshll.u32 %v3271, 16
    %v3276 = vshrl.u32 %v3271, 16
    %vm3277 = vc.u32 %v3269, %v3273
    %v3278 = vsel %vm3277, 1, 0
    %v3279 = vadd.s32 %v3269, %v3273
    %v3280 = vadd.s32 %v3272, %v3278
    %vm3281 = vc.u32 %v3279, %v3275
    %v3282 = vsel %vm3281, 1, 0
    %v3283 = vadd.s32 %v3279, %v3275
    %v3284 = vadd.s32 %v3280, %v3282
    %v3285 = vadd.s32 %v3284, %v3274
    %v3286 = vadd.s32 %v3285, %v3276
    %v3287 = vmul.u32 %v3242, %v3233
    %v3288 = vadd.s32 %v3264, %v3283
    %vm3289 = vc.u32 %v3264, %v3283
    %v3290 = vadd.s32 %v3286, 1
    %v3291 = vsel %vm3289, %v3290, %v3286
    %v3292 = vadd.s32 %v3287, %v3291
    %v3293 = vadd.s32 %v3292, 536870912
    %v3294 = vshrl.u32 %v3293, 30
    %v3295 = vshll.u32 %v3294, 30
    %v3296 = vsub.s32 %v3292, %v3295
    %vm3297 = vcmp.lt.s32.totalorder %v3296, 0
    %v3298 = vsub.s32 0, %v3296
    %v3299 = vsel %vm3297, %v3298, %v3296
    %v3300 = vclz %v3299
    %v3301 = vsub.s32 %v3300, 2
    %vm3302 = vcmp.gt.s32.totalorder 0, %v3301
    %v3303 = vsel %vm3302, 0, %v3301
    %v3304 = vsub.s32 32, %v3303
    %v3305 = vshll.u32 %v3296, %v3303
    %v3306 = vshrl.u32 %v3288, %v3304
    %v3307 = vor.u32 %v3305, %v3306
    %v3308 = vsub.s32 4294967266, %v3303
    %v3309 = vadd.s32 %v3308, 127
    %v3310 = vshll.u32 %v3309, 23
    %v3311 = vor.u32 4788187, %v3310
    %v3312 = vand.u32 2147483647, %v3311
    %v3314 = vcvt.s32.f32 %v3307
    %v3315 = vmul.f32 %v3314, %v3312
    %v3316 = vxor.u32 %v3315, 2147483648
    %v3317 = vsel %vm3196, %v3316, %v3315
    %v3318 = vsub.s32 4, %v3294
    %v3319 = vsel %vm3196, %v3318, %v3294
    %v3320 = vsel %vm3195, %v118, %v3317
    %v3321 = vsel %vm3195, 0, %v3319
    %v3322 = vmul.f32 %v3320, %v3320
    %v3323 = vmul.f32 %v3322, -0.001358992
    %v3324 = vadd.f32 %v3323, 0.041655596
    %v3325 = vmul.f32 %v3322, %v3324
    %v3326 = vadd.f32 %v3325, -0.4999988
    %v3327 = vmul.f32 %v3322, %v3326
    %v3328 = vadd.f32 1.0, %v3327
    %v3329 = vmul.f32 %v3320, %v3320
    %v3330 = vmul.f32 %v3329, -0.00019511016
    %v3331 = vadd.f32 %v3330, 0.008332121
    %v3332 = vmul.f32 %v3329, %v3331
    %v3333 = vadd.f32 %v3332, -0.16666654
    %v3334 = vmul.f32 %v3329, %v3333
    %v3335 = vadd.f32 %v3334, 1.0
    %v3336 = vmul.f32 %v3335, %v3320
    %vm3337 = vweird.f32 %v118
    %v3338 = vadd.s32 %v3321, 3
    %v3339 = vand.u32 %v3338, 3
    %vm3340 = vcmp.lt.s32.totalorder %v3339, 2
    %vm3341 = vcmp.eq.s32.totalorder %v3339, 0
    %v3342 = vxor.u32 %v3336, 2147483648
    %v3343 = vsel %vm3341, %v3328, %v3342
    %vm3344 = vcmp.eq.s32.totalorder %v3339, 2
    %v3345 = vxor.u32 %v3328, 2147483648
    %v3346 = vsel %vm3344, %v3345, %v3336
    %v3347 = vsel %vm3340, %v3343, %v3346
    %v3348 = vsel %vm3337, nan, %v3347
    %v3349 = vand.u32 2147483647, %v119
    %vm3350 = vcmp.le.f32.partialorder %v3349, 0.7853982
    %vm3351 = vcmp.lt.s32.totalorder %v119, 0
    %v3352 = vand.u32 %v119, 2139095040
    %v3353 = vshrl.u32 %v3352, 23
    %v3354 = vsub.s32 %v3353, 127
    %v3355 = vand.u32 2147483647, %v119
    %v3356 = vand.u32 %v3355, 8388607
    %v3357 = vor.u32 %v3356, 8388608
    %v3358 = vsub.s32 0, %v3357
    %v3359 = vadd.s32 %v3354, 1
    %vm3360 = vcmp.gt.s32.totalorder %v3359, 0
    %v3361 = vsel %vm3360, %v3359, 0
    %v3362 = vshrl.u32 %v3361, 5
    %v3363 = vand.u32 %v3361, 31
    %v3364 = vsub.s32 32, %v3363
    %v3365 = vshrl.u32 683565275, %v3364
    %v3366 = vshll.u32 683565275, %v3363
    %v3367 = vshrl.u32 2475754826, %v3364
    %v3368 = vor.u32 %v3366, %v3367
    %v3369 = vshll.u32 2475754826, %v3363
    %v3370 = vshrl.u32 2131351028, %v3364
    %v3371 = vor.u32 %v3369, %v3370
    %v3372 = vshll.u32 2131351028, %v3363
    %v3373 = vshrl.u32 2102212464, %v3364
    %v3374 = vor.u32 %v3372, %v3373
    %v3375 = vshll.u32 2102212464, %v3363
    %v3376 = vshrl.u32 920167782, %v3364
    %v3377 = vor.u32 %v3375, %v3376
    %v3378 = vshll.u32 920167782, %v3363
    %v3379 = vshrl.u32 1326507024, %v3364
    %v3380 = vor.u32 %v3378, %v3379
    %vm3381 = vcmp.lt.s32.totalorder %v3362, 1
    %vm3382 = vcmp.lt.s32.totalorder %v3362, 2
    %vm3383 = vcmp.lt.s32.totalorder %v3362, 3
    %vm3384 = vcmp.lt.s32.totalorder %v3362, 4
    %v3385 = vsel %vm3381, %v3365, %v3368
    %v3386 = vsel %vm3384, %v3374, 2102212464
    %v3387 = vsel %vm3383, %v3371, %v3386
    %v3388 = vsel %vm3382, %v3385, %v3387
    %v3389 = vsel %vm3381, %v3368, %v3371
    %v3390 = vsel %vm3384, %v3377, 920167782
    %v3391 = vsel %vm3383, %v3374, %v3390
    %v3392 = vsel %vm3382, %v3389, %v3391
    %v3393 = vsel %vm3381, %v3371, %v3374
    %v3394 = vsel %vm3384, %v3380, 1326507024
    %v3395 = vsel %vm3383, %v3377, %v3394
    %v3396 = vsel %vm3382, %v3393, %v3395
    %v3397 = vshll.u32 %v3357, 8
    %v3398 = vand.u32 %v3397, 65535
    %v3399 = vshrl.u32 %v3397, 16
    %v3400 = vand.u32 %v3396, 65535
    %v3401 = vshrl.u32 %v3396, 16
    %v3402 = vmul.u32 %v3398, %v3400
    %v3403 = vmul.u32 %v3398, %v3401
    %v3404 = vmul.u32 %v3399, %v3400
    %v3405 = vmul.u32 %v3399, %v3401
    %v3406 = vshll.u32 %v3403, 16
    %v3407 = vshrl.u32 %v3403, 16
    %v3408 = vshll.u32 %v3404, 16
    %v3409 = vshrl.u32 %v3404, 16
    %vm3410 = vc.u32 %v3402, %v3406
    %v3411 = vsel %vm3410, 1, 0
    %v3412 = vadd.s32 %v3402, %v3406
    %v3413 = vadd.s32 %v3405, %v3411
    %vm3414 = vc.u32 %v3412, %v3408
    %v3415 = vsel %vm3414, 1, 0
    %v3416 = vadd.s32 %v3412, %v3408
    %v3417 = vadd.s32 %v3413, %v3415
    %v3418 = vadd.s32 %v3417, %v3407
    %v3419 = vadd.s32 %v3418, %v3409
    %v3420 = vand.u32 %v3397, 65535
    %v3421 = vshrl.u32 %v3397, 16
    %v3422 = vand.u32 %v3392, 65535
    %v3423 = vshrl.u32 %v3392, 16
    %v3424 = vmul.u32 %v3420, %v3422
    %v3425 = vmul.u32 %v3420, %v3423
    %v3426 = vmul.u32 %v3421, %v3422
    %v3427 = vmul.u32 %v3421, %v3423
    %v3428 = vshll.u32 %v3425, 16
    %v3429 = vshrl.u32 %v3425, 16
    %v3430 = vshll.u32 %v3426, 16
    %v3431 = vshrl.u32 %v3426, 16
    %vm3432 = vc.u32 %v3424, %v3428
    %v3433 = vsel %vm3432, 1, 0
    %v3434 = vadd.s32 %v3424, %v3428
    %v3435 = vadd.s32 %v3427, %v3433
    %vm3436 = vc.u32 %v3434, %v3430
    %v3437 = vsel %vm3436, 1, 0
    %v3438 = vadd.s32 %v3434, %v3430
    %v3439 = vadd.s32 %v3435, %v3437
    %v3440 = vadd.s32 %v3439, %v3429
    %v3441 = vadd.s32 %v3440, %v3431
    %v3442 = vmul.u32 %v3397, %v3388
    %v3443 = vadd.s32 %v3419, %v3438
    %vm3444 = vc.u32 %v3419, %v3438
    %v3445 = vadd.s32 %v3441, 1
    %v3446 = vsel %vm3444, %v3445, %v3441
    %v3447 = vadd.s32 %v3442, %v3446
    %v3448 = vadd.s32 %v3447, 536870912
    %v3449 = vshrl.u32 %v3448, 30
    %v3450 = vshll.u32 %v3449, 30
    %v3451 = vsub.s32 %v3447, %v3450
    %vm3452 = vcmp.lt.s32.totalorder %v3451, 0
    %v3453 = vsub.s32 0, %v3451
    %v3454 = vsel %vm3452, %v3453, %v3451
    %v3455 = vclz %v3454
    %v3456 = vsub.s32 %v3455, 2
    %vm3457 = vcmp.gt.s32.totalorder 0, %v3456
    %v3458 = vsel %vm3457, 0, %v3456
    %v3459 = vsub.s32 32, %v3458
    %v3460 = vshll.u32 %v3451, %v3458
    %v3461 = vshrl.u32 %v3443, %v3459
    %v3462 = vor.u32 %v3460, %v3461
    %v3463 = vsub.s32 4294967266, %v3458
    %v3464 = vadd.s32 %v3463, 127
    %v3465 = vshll.u32 %v3464, 23
    %v3466 = vor.u32 4788187, %v3465
    %v3467 = vand.u32 2147483647, %v3466
    %v3469 = vcvt.s32.f32 %v3462
    %v3470 = vmul.f32 %v3469, %v3467
    %v3471 = vxor.u32 %v3470, 2147483648
    %v3472 = vsel %vm3351, %v3471, %v3470
    %v3473 = vsub.s32 4, %v3449
    %v3474 = vsel %vm3351, %v3473, %v3449
    %v3475 = vsel %vm3350, %v119, %v3472
    %v3476 = vsel %vm3350, 0, %v3474
    %v3477 = vmul.f32 %v3475, %v3475
    %v3478 = vmul.f32 %v3477, -0.001358992
    %v3479 = vadd.f32 %v3478, 0.041655596
    %v3480 = vmul.f32 %v3477, %v3479
    %v3481 = vadd.f32 %v3480, -0.4999988
    %v3482 = vmul.f32 %v3477, %v3481
    %v3483 = vadd.f32 1.0, %v3482
    %v3484 = vmul.f32 %v3475, %v3475
    %v3485 = vmul.f32 %v3484, -0.00019511016
    %v3486 = vadd.f32 %v3485, 0.008332121
    %v3487 = vmul.f32 %v3484, %v3486
    %v3488 = vadd.f32 %v3487, -0.16666654
    %v3489 = vmul.f32 %v3484, %v3488
    %v3490 = vadd.f32 %v3489, 1.0
    %v3491 = vmul.f32 %v3490, %v3475
    %vm3492 = vweird.f32 %v119
    %v3493 = vadd.s32 %v3476, 3
    %v3494 = vand.u32 %v3493, 3
    %vm3495 = vcmp.lt.s32.totalorder %v3494, 2
    %vm3496 = vcmp.eq.s32.totalorder %v3494, 0
    %v3497 = vxor.u32 %v3491, 2147483648
    %v3498 = vsel %vm3496, %v3483, %v3497
    %vm3499 = vcmp.eq.s32.totalorder %v3494, 2
    %v3500 = vxor.u32 %v3483, 2147483648
    %v3501 = vsel %vm3499, %v3500, %v3491
    %v3502 = vsel %vm3495, %v3498, %v3501
    %v3503 = vsel %vm3492, nan, %v3502
    %v3504 = vand.u32 2147483647, %v120
    %vm3505 = vcmp.le.f32.partialorder %v3504, 0.7853982
    %vm3506 = vcmp.lt.s32.totalorder %v120, 0
    %v3507 = vand.u32 %v120, 2139095040
    %v3508 = vshrl.u32 %v3507, 23
    %v3509 = vsub.s32 %v3508, 127
    %v3510 = vand.u32 2147483647, %v120
    %v3511 = vand.u32 %v3510, 8388607
    %v3512 = vor.u32 %v3511, 8388608
    %v3513 = vsub.s32 0, %v3512
    %v3514 = vadd.s32 %v3509, 1
    %vm3515 = vcmp.gt.s32.totalorder %v3514, 0
    %v3516 = vsel %vm3515, %v3514, 0
    %v3517 = vshrl.u32 %v3516, 5
    %v3518 = vand.u32 %v3516, 31
    %v3519 = vsub.s32 32, %v3518
    %v3520 = vshrl.u32 683565275, %v3519
    %v3521 = vshll.u32 683565275, %v3518
    %v3522 = vshrl.u32 2475754826, %v3519
    %v3523 = vor.u32 %v3521, %v3522
    %v3524 = vshll.u32 2475754826, %v3518
    %v3525 = vshrl.u32 2131351028, %v3519
    %v3526 = vor.u32 %v3524, %v3525
    %v3527 = vshll.u32 2131351028, %v3518
    %v3528 = vshrl.u32 2102212464, %v3519
    %v3529 = vor.u32 %v3527, %v3528
    %v3530 = vshll.u32 2102212464, %v3518
    %v3531 = vshrl.u32 920167782, %v3519
    %v3532 = vor.u32 %v3530, %v3531
    %v3533 = vshll.u32 920167782, %v3518
    %v3534 = vshrl.u32 1326507024, %v3519
    %v3535 = vor.u32 %v3533, %v3534
    %vm3536 = vcmp.lt.s32.totalorder %v3517, 1
    %vm3537 = vcmp.lt.s32.totalorder %v3517, 2
    %vm3538 = vcmp.lt.s32.totalorder %v3517, 3
    %vm3539 = vcmp.lt.s32.totalorder %v3517, 4
    %v3540 = vsel %vm3536, %v3520, %v3523
    %v3541 = vsel %vm3539, %v3529, 2102212464
    %v3542 = vsel %vm3538, %v3526, %v3541
    %v3543 = vsel %vm3537, %v3540, %v3542
    %v3544 = vsel %vm3536, %v3523, %v3526
    %v3545 = vsel %vm3539, %v3532, 920167782
    %v3546 = vsel %vm3538, %v3529, %v3545
    %v3547 = vsel %vm3537, %v3544, %v3546
    %v3548 = vsel %vm3536, %v3526, %v3529
    %v3549 = vsel %vm3539, %v3535, 1326507024
    %v3550 = vsel %vm3538, %v3532, %v3549
    %v3551 = vsel %vm3537, %v3548, %v3550
    %v3552 = vshll.u32 %v3512, 8
    %v3553 = vand.u32 %v3552, 65535
    %v3554 = vshrl.u32 %v3552, 16
    %v3555 = vand.u32 %v3551, 65535
    %v3556 = vshrl.u32 %v3551, 16
    %v3557 = vmul.u32 %v3553, %v3555
    %v3558 = vmul.u32 %v3553, %v3556
    %v3559 = vmul.u32 %v3554, %v3555
    %v3560 = vmul.u32 %v3554, %v3556
    %v3561 = vshll.u32 %v3558, 16
    %v3562 = vshrl.u32 %v3558, 16
    %v3563 = vshll.u32 %v3559, 16
    %v3564 = vshrl.u32 %v3559, 16
    %vm3565 = vc.u32 %v3557, %v3561
    %v3566 = vsel %vm3565, 1, 0
    %v3567 = vadd.s32 %v3557, %v3561
    %v3568 = vadd.s32 %v3560, %v3566
    %vm3569 = vc.u32 %v3567, %v3563
    %v3570 = vsel %vm3569, 1, 0
    %v3571 = vadd.s32 %v3567, %v3563
    %v3572 = vadd.s32 %v3568, %v3570
    %v3573 = vadd.s32 %v3572, %v3562
    %v3574 = vadd.s32 %v3573, %v3564
    %v3575 = vand.u32 %v3552, 65535
    %v3576 = vshrl.u32 %v3552, 16
    %v3577 = vand.u32 %v3547, 65535
    %v3578 = vshrl.u32 %v3547, 16
    %v3579 = vmul.u32 %v3575, %v3577
    %v3580 = vmul.u32 %v3575, %v3578
    %v3581 = vmul.u32 %v3576, %v3577
    %v3582 = vmul.u32 %v3576, %v3578
    %v3583 = vshll.u32 %v3580, 16
    %v3584 = vshrl.u32 %v3580, 16
    %v3585 = vshll.u32 %v3581, 16
    %v3586 = vshrl.u32 %v3581, 16
    %vm3587 = vc.u32 %v3579, %v3583
    %v3588 = vsel %vm3587, 1, 0
    %v3589 = vadd.s32 %v3579, %v3583
    %v3590 = vadd.s32 %v3582, %v3588
    %vm3591 = vc.u32 %v3589, %v3585
    %v3592 = vsel %vm3591, 1, 0
    %v3593 = vadd.s32 %v3589, %v3585
    %v3594 = vadd.s32 %v3590, %v3592
    %v3595 = vadd.s32 %v3594, %v3584
    %v3596 = vadd.s32 %v3595, %v3586
    %v3597 = vmul.u32 %v3552, %v3543
    %v3598 = vadd.s32 %v3574, %v3593
    %vm3599 = vc.u32 %v3574, %v3593
    %v3600 = vadd.s32 %v3596, 1
    %v3601 = vsel %vm3599, %v3600, %v3596
    %v3602 = vadd.s32 %v3597, %v3601
    %v3603 = vadd.s32 %v3602, 536870912
    %v3604 = vshrl.u32 %v3603, 30
    %v3605 = vshll.u32 %v3604, 30
    %v3606 = vsub.s32 %v3602, %v3605
    %vm3607 = vcmp.lt.s32.totalorder %v3606, 0
    %v3608 = vsub.s32 0, %v3606
    %v3609 = vsel %vm3607, %v3608, %v3606
    %v3610 = vclz %v3609
    %v3611 = vsub.s32 %v3610, 2
    %vm3612 = vcmp.gt.s32.totalorder 0, %v3611
    %v3613 = vsel %vm3612, 0, %v3611
    %v3614 = vsub.s32 32, %v3613
    %v3615 = vshll.u32 %v3606, %v3613
    %v3616 = vshrl.u32 %v3598, %v3614
    %v3617 = vor.u32 %v3615, %v3616
    %v3618 = vsub.s32 4294967266, %v3613
    %v3619 = vadd.s32 %v3618, 127
    %v3620 = vshll.u32 %v3619, 23
    %v3621 = vor.u32 4788187, %v3620
    %v3622 = vand.u32 2147483647, %v3621
    %v3624 = vcvt.s32.f32 %v3617
    %v3625 = vmul.f32 %v3624, %v3622
    %v3626 = vxor.u32 %v3625, 2147483648
    %v3627 = vsel %vm3506, %v3626, %v3625
    %v3628 = vsub.s32 4, %v3604
    %v3629 = vsel %vm3506, %v3628, %v3604
    %v3630 = vsel %vm3505, %v120, %v3627
    %v3631 = vsel %vm3505, 0, %v3629
    %v3632 = vmul.f32 %v3630, %v3630
    %v3633 = vmul.f32 %v3632, -0.001358992
    %v3634 = vadd.f32 %v3633, 0.041655596
    %v3635 = vmul.f32 %v3632, %v3634
    %v3636 = vadd.f32 %v3635, -0.4999988
    %v3637 = vmul.f32 %v3632, %v3636
    %v3638 = vadd.f32 1.0, %v3637
    %v3639 = vmul.f32 %v3630, %v3630
    %v3640 = vmul.f32 %v3639, -0.00019511016
    %v3641 = vadd.f32 %v3640, 0.008332121
    %v3642 = vmul.f32 %v3639, %v3641
    %v3643 = vadd.f32 %v3642, -0.16666654
    %v3644 = vmul.f32 %v3639, %v3643
    %v3645 = vadd.f32 %v3644, 1.0
    %v3646 = vmul.f32 %v3645, %v3630
    %vm3647 = vweird.f32 %v120
    %v3648 = vadd.s32 %v3631, 3
    %v3649 = vand.u32 %v3648, 3
    %vm3650 = vcmp.lt.s32.totalorder %v3649, 2
    %vm3651 = vcmp.eq.s32.totalorder %v3649, 0
    %v3652 = vxor.u32 %v3646, 2147483648
    %v3653 = vsel %vm3651, %v3638, %v3652
    %vm3654 = vcmp.eq.s32.totalorder %v3649, 2
    %v3655 = vxor.u32 %v3638, 2147483648
    %v3656 = vsel %vm3654, %v3655, %v3646
    %v3657 = vsel %vm3650, %v3653, %v3656
    %v3658 = vsel %vm3647, nan, %v3657
    %v3659 = vand.u32 2147483647, %v121
    %vm3660 = vcmp.le.f32.partialorder %v3659, 0.7853982
    %vm3661 = vcmp.lt.s32.totalorder %v121, 0
    %v3662 = vand.u32 %v121, 2139095040
    %v3663 = vshrl.u32 %v3662, 23
    %v3664 = vsub.s32 %v3663, 127
    %v3665 = vand.u32 2147483647, %v121
    %v3666 = vand.u32 %v3665, 8388607
    %v3667 = vor.u32 %v3666, 8388608
    %v3668 = vsub.s32 0, %v3667
    %v3669 = vadd.s32 %v3664, 1
    %vm3670 = vcmp.gt.s32.totalorder %v3669, 0
    %v3671 = vsel %vm3670, %v3669, 0
    %v3672 = vshrl.u32 %v3671, 5
    %v3673 = vand.u32 %v3671, 31
    %v3674 = vsub.s32 32, %v3673
    %v3675 = vshrl.u32 683565275, %v3674
    %v3676 = vshll.u32 683565275, %v3673
    %v3677 = vshrl.u32 2475754826, %v3674
    %v3678 = vor.u32 %v3676, %v3677
    %v3679 = vshll.u32 2475754826, %v3673
    %v3680 = vshrl.u32 2131351028, %v3674
    %v3681 = vor.u32 %v3679, %v3680
    %v3682 = vshll.u32 2131351028, %v3673
    %v3683 = vshrl.u32 2102212464, %v3674
    %v3684 = vor.u32 %v3682, %v3683
    %v3685 = vshll.u32 2102212464, %v3673
    %v3686 = vshrl.u32 920167782, %v3674
    %v3687 = vor.u32 %v3685, %v3686
    %v3688 = vshll.u32 920167782, %v3673
    %v3689 = vshrl.u32 1326507024, %v3674
    %v3690 = vor.u32 %v3688, %v3689
    %vm3691 = vcmp.lt.s32.totalorder %v3672, 1
    %vm3692 = vcmp.lt.s32.totalorder %v3672, 2
    %vm3693 = vcmp.lt.s32.totalorder %v3672, 3
    %vm3694 = vcmp.lt.s32.totalorder %v3672, 4
    %v3695 = vsel %vm3691, %v3675, %v3678
    %v3696 = vsel %vm3694, %v3684, 2102212464
    %v3697 = vsel %vm3693, %v3681, %v3696
    %v3698 = vsel %vm3692, %v3695, %v3697
    %v3699 = vsel %vm3691, %v3678, %v3681
    %v3700 = vsel %vm3694, %v3687, 920167782
    %v3701 = vsel %vm3693, %v3684, %v3700
    %v3702 = vsel %vm3692, %v3699, %v3701
    %v3703 = vsel %vm3691, %v3681, %v3684
    %v3704 = vsel %vm3694, %v3690, 1326507024
    %v3705 = vsel %vm3693, %v3687, %v3704
    %v3706 = vsel %vm3692, %v3703, %v3705
    %v3707 = vshll.u32 %v3667, 8
    %v3708 = vand.u32 %v3707, 65535
    %v3709 = vshrl.u32 %v3707, 16
    %v3710 = vand.u32 %v3706, 65535
    %v3711 = vshrl.u32 %v3706, 16
    %v3712 = vmul.u32 %v3708, %v3710
    %v3713 = vmul.u32 %v3708, %v3711
    %v3714 = vmul.u32 %v3709, %v3710
    %v3715 = vmul.u32 %v3709, %v3711
    %v3716 = vshll.u32 %v3713, 16
    %v3717 = vshrl.u32 %v3713, 16
    %v3718 = vshll.u32 %v3714, 16
    %v3719 = vshrl.u32 %v3714, 16
    %vm3720 = vc.u32 %v3712, %v3716
    %v3721 = vsel %vm3720, 1, 0
    %v3722 = vadd.s32 %v3712, %v3716
    %v3723 = vadd.s32 %v3715, %v3721
    %vm3724 = vc.u32 %v3722, %v3718
    %v3725 = vsel %vm3724, 1, 0
    %v3726 = vadd.s32 %v3722, %v3718
    %v3727 = vadd.s32 %v3723, %v3725
    %v3728 = vadd.s32 %v3727, %v3717
    %v3729 = vadd.s32 %v3728, %v3719
    %v3730 = vand.u32 %v3707, 65535
    %v3731 = vshrl.u32 %v3707, 16
    %v3732 = vand.u32 %v3702, 65535
    %v3733 = vshrl.u32 %v3702, 16
    %v3734 = vmul.u32 %v3730, %v3732
    %v3735 = vmul.u32 %v3730, %v3733
    %v3736 = vmul.u32 %v3731, %v3732
    %v3737 = vmul.u32 %v3731, %v3733
    %v3738 = vshll.u32 %v3735, 16
    %v3739 = vshrl.u32 %v3735, 16
    %v3740 = vshll.u32 %v3736, 16
    %v3741 = vshrl.u32 %v3736, 16
    %vm3742 = vc.u32 %v3734, %v3738
    %v3743 = vsel %vm3742, 1, 0
    %v3744 = vadd.s32 %v3734, %v3738
    %v3745 = vadd.s32 %v3737, %v3743
    %vm3746 = vc.u32 %v3744, %v3740
    %v3747 = vsel %vm3746, 1, 0
    %v3748 = vadd.s32 %v3744, %v3740
    %v3749 = vadd.s32 %v3745, %v3747
    %v3750 = vadd.s32 %v3749, %v3739
    %v3751 = vadd.s32 %v3750, %v3741
    %v3752 = vmul.u32 %v3707, %v3698
    %v3753 = vadd.s32 %v3729, %v3748
    %vm3754 = vc.u32 %v3729, %v3748
    %v3755 = vadd.s32 %v3751, 1
    %v3756 = vsel %vm3754, %v3755, %v3751
    %v3757 = vadd.s32 %v3752, %v3756
    %v3758 = vadd.s32 %v3757, 536870912
    %v3759 = vshrl.u32 %v3758, 30
    %v3760 = vshll.u32 %v3759, 30
    %v3761 = vsub.s32 %v3757, %v3760
    %vm3762 = vcmp.lt.s32.totalorder %v3761, 0
    %v3763 = vsub.s32 0, %v3761
    %v3764 = vsel %vm3762, %v3763, %v3761
    %v3765 = vclz %v3764
    %v3766 = vsub.s32 %v3765, 2
    %vm3767 = vcmp.gt.s32.totalorder 0, %v3766
    %v3768 = vsel %vm3767, 0, %v3766
    %v3769 = vsub.s32 32, %v3768
    %v3770 = vshll.u32 %v3761, %v3768
    %v3771 = vshrl.u32 %v3753, %v3769
    %v3772 = vor.u32 %v3770, %v3771
    %v3773 = vsub.s32 4294967266, %v3768
    %v3774 = vadd.s32 %v3773, 127
    %v3775 = vshll.u32 %v3774, 23
    %v3776 = vor.u32 4788187, %v3775
    %v3777 = vand.u32 2147483647, %v3776
    %v3779 = vcvt.s32.f32 %v3772
    %v3780 = vmul.f32 %v3779, %v3777
    %v3781 = vxor.u32 %v3780, 2147483648
    %v3782 = vsel %vm3661, %v3781, %v3780
    %v3783 = vsub.s32 4, %v3759
    %v3784 = vsel %vm3661, %v3783, %v3759
    %v3785 = vsel %vm3660, %v121, %v3782
    %v3786 = vsel %vm3660, 0, %v3784
    %v3787 = vmul.f32 %v3785, %v3785
    %v3788 = vmul.f32 %v3787, -0.001358992
    %v3789 = vadd.f32 %v3788, 0.041655596
    %v3790 = vmul.f32 %v3787, %v3789
    %v3791 = vadd.f32 %v3790, -0.4999988
    %v3792 = vmul.f32 %v3787, %v3791
    %v3793 = vadd.f32 1.0, %v3792
    %v3794 = vmul.f32 %v3785, %v3785
    %v3795 = vmul.f32 %v3794, -0.00019511016
    %v3796 = vadd.f32 %v3795, 0.008332121
    %v3797 = vmul.f32 %v3794, %v3796
    %v3798 = vadd.f32 %v3797, -0.16666654
    %v3799 = vmul.f32 %v3794, %v3798
    %v3800 = vadd.f32 %v3799, 1.0
    %v3801 = vmul.f32 %v3800, %v3785
    %vm3802 = vweird.f32 %v121
    %v3803 = vadd.s32 %v3786, 3
    %v3804 = vand.u32 %v3803, 3
    %vm3805 = vcmp.lt.s32.totalorder %v3804, 2
    %vm3806 = vcmp.eq.s32.totalorder %v3804, 0
    %v3807 = vxor.u32 %v3801, 2147483648
    %v3808 = vsel %vm3806, %v3793, %v3807
    %vm3809 = vcmp.eq.s32.totalorder %v3804, 2
    %v3810 = vxor.u32 %v3793, 2147483648
    %v3811 = vsel %vm3809, %v3810, %v3801
    %v3812 = vsel %vm3805, %v3808, %v3811
    %v3813 = vsel %vm3802, nan, %v3812
    %v3814 = vand.u32 2147483647, %v122
    %vm3815 = vcmp.le.f32.partialorder %v3814, 0.7853982
    %vm3816 = vcmp.lt.s32.totalorder %v122, 0
    %v3817 = vand.u32 %v122, 2139095040
    %v3818 = vshrl.u32 %v3817, 23
    %v3819 = vsub.s32 %v3818, 127
    %v3820 = vand.u32 2147483647, %v122
    %v3821 = vand.u32 %v3820, 8388607
    %v3822 = vor.u32 %v3821, 8388608
    %v3823 = vsub.s32 0, %v3822
    %v3824 = vadd.s32 %v3819, 1
    %vm3825 = vcmp.gt.s32.totalorder %v3824, 0
    %v3826 = vsel %vm3825, %v3824, 0
    %v3827 = vshrl.u32 %v3826, 5
    %v3828 = vand.u32 %v3826, 31
    %v3829 = vsub.s32 32, %v3828
    %v3830 = vshrl.u32 683565275, %v3829
    %v3831 = vshll.u32 683565275, %v3828
    %v3832 = vshrl.u32 2475754826, %v3829
    %v3833 = vor.u32 %v3831, %v3832
    %v3834 = vshll.u32 2475754826, %v3828
    %v3835 = vshrl.u32 2131351028, %v3829
    %v3836 = vor.u32 %v3834, %v3835
    %v3837 = vshll.u32 2131351028, %v3828
    %v3838 = vshrl.u32 2102212464, %v3829
    %v3839 = vor.u32 %v3837, %v3838
    %v3840 = vshll.u32 2102212464, %v3828
    %v3841 = vshrl.u32 920167782, %v3829
    %v3842 = vor.u32 %v3840, %v3841
    %v3843 = vshll.u32 920167782, %v3828
    %v3844 = vshrl.u32 1326507024, %v3829
    %v3845 = vor.u32 %v3843, %v3844
    %vm3846 = vcmp.lt.s32.totalorder %v3827, 1
    %vm3847 = vcmp.lt.s32.totalorder %v3827, 2
    %vm3848 = vcmp.lt.s32.totalorder %v3827, 3
    %vm3849 = vcmp.lt.s32.totalorder %v3827, 4
    %v3850 = vsel %vm3846, %v3830, %v3833
    %v3851 = vsel %vm3849, %v3839, 2102212464
    %v3852 = vsel %vm3848, %v3836, %v3851
    %v3853 = vsel %vm3847, %v3850, %v3852
    %v3854 = vsel %vm3846, %v3833, %v3836
    %v3855 = vsel %vm3849, %v3842, 920167782
    %v3856 = vsel %vm3848, %v3839, %v3855
    %v3857 = vsel %vm3847, %v3854, %v3856
    %v3858 = vsel %vm3846, %v3836, %v3839
    %v3859 = vsel %vm3849, %v3845, 1326507024
    %v3860 = vsel %vm3848, %v3842, %v3859
    %v3861 = vsel %vm3847, %v3858, %v3860
    %v3862 = vshll.u32 %v3822, 8
    %v3863 = vand.u32 %v3862, 65535
    %v3864 = vshrl.u32 %v3862, 16
    %v3865 = vand.u32 %v3861, 65535
    %v3866 = vshrl.u32 %v3861, 16
    %v3867 = vmul.u32 %v3863, %v3865
    %v3868 = vmul.u32 %v3863, %v3866
    %v3869 = vmul.u32 %v3864, %v3865
    %v3870 = vmul.u32 %v3864, %v3866
    %v3871 = vshll.u32 %v3868, 16
    %v3872 = vshrl.u32 %v3868, 16
    %v3873 = vshll.u32 %v3869, 16
    %v3874 = vshrl.u32 %v3869, 16
    %vm3875 = vc.u32 %v3867, %v3871
    %v3876 = vsel %vm3875, 1, 0
    %v3877 = vadd.s32 %v3867, %v3871
    %v3878 = vadd.s32 %v3870, %v3876
    %vm3879 = vc.u32 %v3877, %v3873
    %v3880 = vsel %vm3879, 1, 0
    %v3881 = vadd.s32 %v3877, %v3873
    %v3882 = vadd.s32 %v3878, %v3880
    %v3883 = vadd.s32 %v3882, %v3872
    %v3884 = vadd.s32 %v3883, %v3874
    %v3885 = vand.u32 %v3862, 65535
    %v3886 = vshrl.u32 %v3862, 16
    %v3887 = vand.u32 %v3857, 65535
    %v3888 = vshrl.u32 %v3857, 16
    %v3889 = vmul.u32 %v3885, %v3887
    %v3890 = vmul.u32 %v3885, %v3888
    %v3891 = vmul.u32 %v3886, %v3887
    %v3892 = vmul.u32 %v3886, %v3888
    %v3893 = vshll.u32 %v3890, 16
    %v3894 = vshrl.u32 %v3890, 16
    %v3895 = vshll.u32 %v3891, 16
    %v3896 = vshrl.u32 %v3891, 16
    %vm3897 = vc.u32 %v3889, %v3893
    %v3898 = vsel %vm3897, 1, 0
    %v3899 = vadd.s32 %v3889, %v3893
    %v3900 = vadd.s32 %v3892, %v3898
    %vm3901 = vc.u32 %v3899, %v3895
    %v3902 = vsel %vm3901, 1, 0
    %v3903 = vadd.s32 %v3899, %v3895
    %v3904 = vadd.s32 %v3900, %v3902
    %v3905 = vadd.s32 %v3904, %v3894
    %v3906 = vadd.s32 %v3905, %v3896
    %v3907 = vmul.u32 %v3862, %v3853
    %v3908 = vadd.s32 %v3884, %v3903
    %vm3909 = vc.u32 %v3884, %v3903
    %v3910 = vadd.s32 %v3906, 1
    %v3911 = vsel %vm3909, %v3910, %v3906
    %v3912 = vadd.s32 %v3907, %v3911
    %v3913 = vadd.s32 %v3912, 536870912
    %v3914 = vshrl.u32 %v3913, 30
    %v3915 = vshll.u32 %v3914, 30
    %v3916 = vsub.s32 %v3912, %v3915
    %vm3917 = vcmp.lt.s32.totalorder %v3916, 0
    %v3918 = vsub.s32 0, %v3916
    %v3919 = vsel %vm3917, %v3918, %v3916
    %v3920 = vclz %v3919
    %v3921 = vsub.s32 %v3920, 2
    %vm3922 = vcmp.gt.s32.totalorder 0, %v3921
    %v3923 = vsel %vm3922, 0, %v3921
    %v3924 = vsub.s32 32, %v3923
    %v3925 = vshll.u32 %v3916, %v3923
    %v3926 = vshrl.u32 %v3908, %v3924
    %v3927 = vor.u32 %v3925, %v3926
    %v3928 = vsub.s32 4294967266, %v3923
    %v3929 = vadd.s32 %v3928, 127
    %v3930 = vshll.u32 %v3929, 23
    %v3931 = vor.u32 4788187, %v3930
    %v3932 = vand.u32 2147483647, %v3931
    %v3934 = vcvt.s32.f32 %v3927
    %v3935 = vmul.f32 %v3934, %v3932
    %v3936 = vxor.u32 %v3935, 2147483648
    %v3937 = vsel %vm3816, %v3936, %v3935
    %v3938 = vsub.s32 4, %v3914
    %v3939 = vsel %vm3816, %v3938, %v3914
    %v3940 = vsel %vm3815, %v122, %v3937
    %v3941 = vsel %vm3815, 0, %v3939
    %v3942 = vmul.f32 %v3940, %v3940
    %v3943 = vmul.f32 %v3942, -0.001358992
    %v3944 = vadd.f32 %v3943, 0.041655596
    %v3945 = vmul.f32 %v3942, %v3944
    %v3946 = vadd.f32 %v3945, -0.4999988
    %v3947 = vmul.f32 %v3942, %v3946
    %v3948 = vadd.f32 1.0, %v3947
    %v3949 = vmul.f32 %v3940, %v3940
    %v3950 = vmul.f32 %v3949, -0.00019511016
    %v3951 = vadd.f32 %v3950, 0.008332121
    %v3952 = vmul.f32 %v3949, %v3951
    %v3953 = vadd.f32 %v3952, -0.16666654
    %v3954 = vmul.f32 %v3949, %v3953
    %v3955 = vadd.f32 %v3954, 1.0
    %v3956 = vmul.f32 %v3955, %v3940
    %vm3957 = vweird.f32 %v122
    %v3958 = vadd.s32 %v3941, 3
    %v3959 = vand.u32 %v3958, 3
    %vm3960 = vcmp.lt.s32.totalorder %v3959, 2
    %vm3961 = vcmp.eq.s32.totalorder %v3959, 0
    %v3962 = vxor.u32 %v3956, 2147483648
    %v3963 = vsel %vm3961, %v3948, %v3962
    %vm3964 = vcmp.eq.s32.totalorder %v3959, 2
    %v3965 = vxor.u32 %v3948, 2147483648
    %v3966 = vsel %vm3964, %v3965, %v3956
    %v3967 = vsel %vm3960, %v3963, %v3966
    %v3968 = vsel %vm3957, nan, %v3967
    %v3969 = vand.u32 2147483647, %v123
    %vm3970 = vcmp.le.f32.partialorder %v3969, 0.7853982
    %vm3971 = vcmp.lt.s32.totalorder %v123, 0
    %v3972 = vand.u32 %v123, 2139095040
    %v3973 = vshrl.u32 %v3972, 23
    %v3974 = vsub.s32 %v3973, 127
    %v3975 = vand.u32 2147483647, %v123
    %v3976 = vand.u32 %v3975, 8388607
    %v3977 = vor.u32 %v3976, 8388608
    %v3978 = vsub.s32 0, %v3977
    %v3979 = vadd.s32 %v3974, 1
    %vm3980 = vcmp.gt.s32.totalorder %v3979, 0
    %v3981 = vsel %vm3980, %v3979, 0
    %v3982 = vshrl.u32 %v3981, 5
    %v3983 = vand.u32 %v3981, 31
    %v3984 = vsub.s32 32, %v3983
    %v3985 = vshrl.u32 683565275, %v3984
    %v3986 = vshll.u32 683565275, %v3983
    %v3987 = vshrl.u32 2475754826, %v3984
    %v3988 = vor.u32 %v3986, %v3987
    %v3989 = vshll.u32 2475754826, %v3983
    %v3990 = vshrl.u32 2131351028, %v3984
    %v3991 = vor.u32 %v3989, %v3990
    %v3992 = vshll.u32 2131351028, %v3983
    %v3993 = vshrl.u32 2102212464, %v3984
    %v3994 = vor.u32 %v3992, %v3993
    %v3995 = vshll.u32 2102212464, %v3983
    %v3996 = vshrl.u32 920167782, %v3984
    %v3997 = vor.u32 %v3995, %v3996
    %v3998 = vshll.u32 920167782, %v3983
    %v3999 = vshrl.u32 1326507024, %v3984
    %v4000 = vor.u32 %v3998, %v3999
    %vm4001 = vcmp.lt.s32.totalorder %v3982, 1
    %vm4002 = vcmp.lt.s32.totalorder %v3982, 2
    %vm4003 = vcmp.lt.s32.totalorder %v3982, 3
    %vm4004 = vcmp.lt.s32.totalorder %v3982, 4
    %v4005 = vsel %vm4001, %v3985, %v3988
    %v4006 = vsel %vm4004, %v3994, 2102212464
    %v4007 = vsel %vm4003, %v3991, %v4006
    %v4008 = vsel %vm4002, %v4005, %v4007
    %v4009 = vsel %vm4001, %v3988, %v3991
    %v4010 = vsel %vm4004, %v3997, 920167782
    %v4011 = vsel %vm4003, %v3994, %v4010
    %v4012 = vsel %vm4002, %v4009, %v4011
    %v4013 = vsel %vm4001, %v3991, %v3994
    %v4014 = vsel %vm4004, %v4000, 1326507024
    %v4015 = vsel %vm4003, %v3997, %v4014
    %v4016 = vsel %vm4002, %v4013, %v4015
    %v4017 = vshll.u32 %v3977, 8
    %v4018 = vand.u32 %v4017, 65535
    %v4019 = vshrl.u32 %v4017, 16
    %v4020 = vand.u32 %v4016, 65535
    %v4021 = vshrl.u32 %v4016, 16
    %v4022 = vmul.u32 %v4018, %v4020
    %v4023 = vmul.u32 %v4018, %v4021
    %v4024 = vmul.u32 %v4019, %v4020
    %v4025 = vmul.u32 %v4019, %v4021
    %v4026 = vshll.u32 %v4023, 16
    %v4027 = vshrl.u32 %v4023, 16
    %v4028 = vshll.u32 %v4024, 16
    %v4029 = vshrl.u32 %v4024, 16
    %vm4030 = vc.u32 %v4022, %v4026
    %v4031 = vsel %vm4030, 1, 0
    %v4032 = vadd.s32 %v4022, %v4026
    %v4033 = vadd.s32 %v4025, %v4031
    %vm4034 = vc.u32 %v4032, %v4028
    %v4035 = vsel %vm4034, 1, 0
    %v4036 = vadd.s32 %v4032, %v4028
    %v4037 = vadd.s32 %v4033, %v4035
    %v4038 = vadd.s32 %v4037, %v4027
    %v4039 = vadd.s32 %v4038, %v4029
    %v4040 = vand.u32 %v4017, 65535
    %v4041 = vshrl.u32 %v4017, 16
    %v4042 = vand.u32 %v4012, 65535
    %v4043 = vshrl.u32 %v4012, 16
    %v4044 = vmul.u32 %v4040, %v4042
    %v4045 = vmul.u32 %v4040, %v4043
    %v4046 = vmul.u32 %v4041, %v4042
    %v4047 = vmul.u32 %v4041, %v4043
    %v4048 = vshll.u32 %v4045, 16
    %v4049 = vshrl.u32 %v4045, 16
    %v4050 = vshll.u32 %v4046, 16
    %v4051 = vshrl.u32 %v4046, 16
    %vm4052 = vc.u32 %v4044, %v4048
    %v4053 = vsel %vm4052, 1, 0
    %v4054 = vadd.s32 %v4044, %v4048
    %v4055 = vadd.s32 %v4047, %v4053
    %vm4056 = vc.u32 %v4054, %v4050
    %v4057 = vsel %vm4056, 1, 0
    %v4058 = vadd.s32 %v4054, %v4050
    %v4059 = vadd.s32 %v4055, %v4057
    %v4060 = vadd.s32 %v4059, %v4049
    %v4061 = vadd.s32 %v4060, %v4051
    %v4062 = vmul.u32 %v4017, %v4008
    %v4063 = vadd.s32 %v4039, %v4058
    %vm4064 = vc.u32 %v4039, %v4058
    %v4065 = vadd.s32 %v4061, 1
    %v4066 = vsel %vm4064, %v4065, %v4061
    %v4067 = vadd.s32 %v4062, %v4066
    %v4068 = vadd.s32 %v4067, 536870912
    %v4069 = vshrl.u32 %v4068, 30
    %v4070 = vshll.u32 %v4069, 30
    %v4071 = vsub.s32 %v4067, %v4070
    %vm4072 = vcmp.lt.s32.totalorder %v4071, 0
    %v4073 = vsub.s32 0, %v4071
    %v4074 = vsel %vm4072, %v4073, %v4071
    %v4075 = vclz %v4074
    %v4076 = vsub.s32 %v4075, 2
    %vm4077 = vcmp.gt.s32.totalorder 0, %v4076
    %v4078 = vsel %vm4077, 0, %v4076
    %v4079 = vsub.s32 32, %v4078
    %v4080 = vshll.u32 %v4071, %v4078
    %v4081 = vshrl.u32 %v4063, %v4079
    %v4082 = vor.u32 %v4080, %v4081
    %v4083 = vsub.s32 4294967266, %v4078
    %v4084 = vadd.s32 %v4083, 127
    %v4085 = vshll.u32 %v4084, 23
    %v4086 = vor.u32 4788187, %v4085
    %v4087 = vand.u32 2147483647, %v4086
    %v4089 = vcvt.s32.f32 %v4082
    %v4090 = vmul.f32 %v4089, %v4087
    %v4091 = vxor.u32 %v4090, 2147483648
    %v4092 = vsel %vm3971, %v4091, %v4090
    %v4093 = vsub.s32 4, %v4069
    %v4094 = vsel %vm3971, %v4093, %v4069
    %v4095 = vsel %vm3970, %v123, %v4092
    %v4096 = vsel %vm3970, 0, %v4094
    %v4097 = vmul.f32 %v4095, %v4095
    %v4098 = vmul.f32 %v4097, -0.001358992
    %v4099 = vadd.f32 %v4098, 0.041655596
    %v4100 = vmul.f32 %v4097, %v4099
    %v4101 = vadd.f32 %v4100, -0.4999988
    %v4102 = vmul.f32 %v4097, %v4101
    %v4103 = vadd.f32 1.0, %v4102
    %v4104 = vmul.f32 %v4095, %v4095
    %v4105 = vmul.f32 %v4104, -0.00019511016
    %v4106 = vadd.f32 %v4105, 0.008332121
    %v4107 = vmul.f32 %v4104, %v4106
    %v4108 = vadd.f32 %v4107, -0.16666654
    %v4109 = vmul.f32 %v4104, %v4108
    %v4110 = vadd.f32 %v4109, 1.0
    %v4111 = vmul.f32 %v4110, %v4095
    %vm4112 = vweird.f32 %v123
    %v4113 = vadd.s32 %v4096, 3
    %v4114 = vand.u32 %v4113, 3
    %vm4115 = vcmp.lt.s32.totalorder %v4114, 2
    %vm4116 = vcmp.eq.s32.totalorder %v4114, 0
    %v4117 = vxor.u32 %v4111, 2147483648
    %v4118 = vsel %vm4116, %v4103, %v4117
    %vm4119 = vcmp.eq.s32.totalorder %v4114, 2
    %v4120 = vxor.u32 %v4103, 2147483648
    %v4121 = vsel %vm4119, %v4120, %v4111
    %v4122 = vsel %vm4115, %v4118, %v4121
    %v4123 = vsel %vm4112, nan, %v4122
    %v4124 = vand.u32 2147483647, %v124
    %vm4125 = vcmp.le.f32.partialorder %v4124, 0.7853982
    %vm4126 = vcmp.lt.s32.totalorder %v124, 0
    %v4127 = vand.u32 %v124, 2139095040
    %v4128 = vshrl.u32 %v4127, 23
    %v4129 = vsub.s32 %v4128, 127
    %v4130 = vand.u32 2147483647, %v124
    %v4131 = vand.u32 %v4130, 8388607
    %v4132 = vor.u32 %v4131, 8388608
    %v4133 = vsub.s32 0, %v4132
    %v4134 = vadd.s32 %v4129, 1
    %vm4135 = vcmp.gt.s32.totalorder %v4134, 0
    %v4136 = vsel %vm4135, %v4134, 0
    %v4137 = vshrl.u32 %v4136, 5
    %v4138 = vand.u32 %v4136, 31
    %v4139 = vsub.s32 32, %v4138
    %v4140 = vshrl.u32 683565275, %v4139
    %v4141 = vshll.u32 683565275, %v4138
    %v4142 = vshrl.u32 2475754826, %v4139
    %v4143 = vor.u32 %v4141, %v4142
    %v4144 = vshll.u32 2475754826, %v4138
    %v4145 = vshrl.u32 2131351028, %v4139
    %v4146 = vor.u32 %v4144, %v4145
    %v4147 = vshll.u32 2131351028, %v4138
    %v4148 = vshrl.u32 2102212464, %v4139
    %v4149 = vor.u32 %v4147, %v4148
    %v4150 = vshll.u32 2102212464, %v4138
    %v4151 = vshrl.u32 920167782, %v4139
    %v4152 = vor.u32 %v4150, %v4151
    %v4153 = vshll.u32 920167782, %v4138
    %v4154 = vshrl.u32 1326507024, %v4139
    %v4155 = vor.u32 %v4153, %v4154
    %vm4156 = vcmp.lt.s32.totalorder %v4137, 1
    %vm4157 = vcmp.lt.s32.totalorder %v4137, 2
    %vm4158 = vcmp.lt.s32.totalorder %v4137, 3
    %vm4159 = vcmp.lt.s32.totalorder %v4137, 4
    %v4160 = vsel %vm4156, %v4140, %v4143
    %v4161 = vsel %vm4159, %v4149, 2102212464
    %v4162 = vsel %vm4158, %v4146, %v4161
    %v4163 = vsel %vm4157, %v4160, %v4162
    %v4164 = vsel %vm4156, %v4143, %v4146
    %v4165 = vsel %vm4159, %v4152, 920167782
    %v4166 = vsel %vm4158, %v4149, %v4165
    %v4167 = vsel %vm4157, %v4164, %v4166
    %v4168 = vsel %vm4156, %v4146, %v4149
    %v4169 = vsel %vm4159, %v4155, 1326507024
    %v4170 = vsel %vm4158, %v4152, %v4169
    %v4171 = vsel %vm4157, %v4168, %v4170
    %v4172 = vshll.u32 %v4132, 8
    %v4173 = vand.u32 %v4172, 65535
    %v4174 = vshrl.u32 %v4172, 16
    %v4175 = vand.u32 %v4171, 65535
    %v4176 = vshrl.u32 %v4171, 16
    %v4177 = vmul.u32 %v4173, %v4175
    %v4178 = vmul.u32 %v4173, %v4176
    %v4179 = vmul.u32 %v4174, %v4175
    %v4180 = vmul.u32 %v4174, %v4176
    %v4181 = vshll.u32 %v4178, 16
    %v4182 = vshrl.u32 %v4178, 16
    %v4183 = vshll.u32 %v4179, 16
    %v4184 = vshrl.u32 %v4179, 16
    %vm4185 = vc.u32 %v4177, %v4181
    %v4186 = vsel %vm4185, 1, 0
    %v4187 = vadd.s32 %v4177, %v4181
    %v4188 = vadd.s32 %v4180, %v4186
    %vm4189 = vc.u32 %v4187, %v4183
    %v4190 = vsel %vm4189, 1, 0
    %v4191 = vadd.s32 %v4187, %v4183
    %v4192 = vadd.s32 %v4188, %v4190
    %v4193 = vadd.s32 %v4192, %v4182
    %v4194 = vadd.s32 %v4193, %v4184
    %v4195 = vand.u32 %v4172, 65535
    %v4196 = vshrl.u32 %v4172, 16
    %v4197 = vand.u32 %v4167, 65535
    %v4198 = vshrl.u32 %v4167, 16
    %v4199 = vmul.u32 %v4195, %v4197
    %v4200 = vmul.u32 %v4195, %v4198
    %v4201 = vmul.u32 %v4196, %v4197
    %v4202 = vmul.u32 %v4196, %v4198
    %v4203 = vshll.u32 %v4200, 16
    %v4204 = vshrl.u32 %v4200, 16
    %v4205 = vshll.u32 %v4201, 16
    %v4206 = vshrl.u32 %v4201, 16
    %vm4207 = vc.u32 %v4199, %v4203
    %v4208 = vsel %vm4207, 1, 0
    %v4209 = vadd.s32 %v4199, %v4203
    %v4210 = vadd.s32 %v4202, %v4208
    %vm4211 = vc.u32 %v4209, %v4205
    %v4212 = vsel %vm4211, 1, 0
    %v4213 = vadd.s32 %v4209, %v4205
    %v4214 = vadd.s32 %v4210, %v4212
    %v4215 = vadd.s32 %v4214, %v4204
    %v4216 = vadd.s32 %v4215, %v4206
    %v4217 = vmul.u32 %v4172, %v4163
    %v4218 = vadd.s32 %v4194, %v4213
    %vm4219 = vc.u32 %v4194, %v4213
    %v4220 = vadd.s32 %v4216, 1
    %v4221 = vsel %vm4219, %v4220, %v4216
    %v4222 = vadd.s32 %v4217, %v4221
    %v4223 = vadd.s32 %v4222, 536870912
    %v4224 = vshrl.u32 %v4223, 30
    %v4225 = vshll.u32 %v4224, 30
    %v4226 = vsub.s32 %v4222, %v4225
    %vm4227 = vcmp.lt.s32.totalorder %v4226, 0
    %v4228 = vsub.s32 0, %v4226
    %v4229 = vsel %vm4227, %v4228, %v4226
    %v4230 = vclz %v4229
    %v4231 = vsub.s32 %v4230, 2
    %vm4232 = vcmp.gt.s32.totalorder 0, %v4231
    %v4233 = vsel %vm4232, 0, %v4231
    %v4234 = vsub.s32 32, %v4233
    %v4235 = vshll.u32 %v4226, %v4233
    %v4236 = vshrl.u32 %v4218, %v4234
    %v4237 = vor.u32 %v4235, %v4236
    %v4238 = vsub.s32 4294967266, %v4233
    %v4239 = vadd.s32 %v4238, 127
    %v4240 = vshll.u32 %v4239, 23
    %v4241 = vor.u32 4788187, %v4240
    %v4242 = vand.u32 2147483647, %v4241
    %v4244 = vcvt.s32.f32 %v4237
    %v4245 = vmul.f32 %v4244, %v4242
    %v4246 = vxor.u32 %v4245, 2147483648
    %v4247 = vsel %vm4126, %v4246, %v4245
    %v4248 = vsub.s32 4, %v4224
    %v4249 = vsel %vm4126, %v4248, %v4224
    %v4250 = vsel %vm4125, %v124, %v4247
    %v4251 = vsel %vm4125, 0, %v4249
    %v4252 = vmul.f32 %v4250, %v4250
    %v4253 = vmul.f32 %v4252, -0.001358992
    %v4254 = vadd.f32 %v4253, 0.041655596
    %v4255 = vmul.f32 %v4252, %v4254
    %v4256 = vadd.f32 %v4255, -0.4999988
    %v4257 = vmul.f32 %v4252, %v4256
    %v4258 = vadd.f32 1.0, %v4257
    %v4259 = vmul.f32 %v4250, %v4250
    %v4260 = vmul.f32 %v4259, -0.00019511016
    %v4261 = vadd.f32 %v4260, 0.008332121
    %v4262 = vmul.f32 %v4259, %v4261
    %v4263 = vadd.f32 %v4262, -0.16666654
    %v4264 = vmul.f32 %v4259, %v4263
    %v4265 = vadd.f32 %v4264, 1.0
    %v4266 = vmul.f32 %v4265, %v4250
    %vm4267 = vweird.f32 %v124
    %v4268 = vadd.s32 %v4251, 3
    %v4269 = vand.u32 %v4268, 3
    %vm4270 = vcmp.lt.s32.totalorder %v4269, 2
    %vm4271 = vcmp.eq.s32.totalorder %v4269, 0
    %v4272 = vxor.u32 %v4266, 2147483648
    %v4273 = vsel %vm4271, %v4258, %v4272
    %vm4274 = vcmp.eq.s32.totalorder %v4269, 2
    %v4275 = vxor.u32 %v4258, 2147483648
    %v4276 = vsel %vm4274, %v4275, %v4266
    %v4277 = vsel %vm4270, %v4273, %v4276
    %v4278 = vsel %vm4267, nan, %v4277
    %v4279 = vand.u32 2147483647, %v125
    %vm4280 = vcmp.le.f32.partialorder %v4279, 0.7853982
    %vm4281 = vcmp.lt.s32.totalorder %v125, 0
    %v4282 = vand.u32 %v125, 2139095040
    %v4283 = vshrl.u32 %v4282, 23
    %v4284 = vsub.s32 %v4283, 127
    %v4285 = vand.u32 2147483647, %v125
    %v4286 = vand.u32 %v4285, 8388607
    %v4287 = vor.u32 %v4286, 8388608
    %v4288 = vsub.s32 0, %v4287
    %v4289 = vadd.s32 %v4284, 1
    %vm4290 = vcmp.gt.s32.totalorder %v4289, 0
    %v4291 = vsel %vm4290, %v4289, 0
    %v4292 = vshrl.u32 %v4291, 5
    %v4293 = vand.u32 %v4291, 31
    %v4294 = vsub.s32 32, %v4293
    %v4295 = vshrl.u32 683565275, %v4294
    %v4296 = vshll.u32 683565275, %v4293
    %v4297 = vshrl.u32 2475754826, %v4294
    %v4298 = vor.u32 %v4296, %v4297
    %v4299 = vshll.u32 2475754826, %v4293
    %v4300 = vshrl.u32 2131351028, %v4294
    %v4301 = vor.u32 %v4299, %v4300
    %v4302 = vshll.u32 2131351028, %v4293
    %v4303 = vshrl.u32 2102212464, %v4294
    %v4304 = vor.u32 %v4302, %v4303
    %v4305 = vshll.u32 2102212464, %v4293
    %v4306 = vshrl.u32 920167782, %v4294
    %v4307 = vor.u32 %v4305, %v4306
    %v4308 = vshll.u32 920167782, %v4293
    %v4309 = vshrl.u32 1326507024, %v4294
    %v4310 = vor.u32 %v4308, %v4309
    %vm4311 = vcmp.lt.s32.totalorder %v4292, 1
    %vm4312 = vcmp.lt.s32.totalorder %v4292, 2
    %vm4313 = vcmp.lt.s32.totalorder %v4292, 3
    %vm4314 = vcmp.lt.s32.totalorder %v4292, 4
    %v4315 = vsel %vm4311, %v4295, %v4298
    %v4316 = vsel %vm4314, %v4304, 2102212464
    %v4317 = vsel %vm4313, %v4301, %v4316
    %v4318 = vsel %vm4312, %v4315, %v4317
    %v4319 = vsel %vm4311, %v4298, %v4301
    %v4320 = vsel %vm4314, %v4307, 920167782
    %v4321 = vsel %vm4313, %v4304, %v4320
    %v4322 = vsel %vm4312, %v4319, %v4321
    %v4323 = vsel %vm4311, %v4301, %v4304
    %v4324 = vsel %vm4314, %v4310, 1326507024
    %v4325 = vsel %vm4313, %v4307, %v4324
    %v4326 = vsel %vm4312, %v4323, %v4325
    %v4327 = vshll.u32 %v4287, 8
    %v4328 = vand.u32 %v4327, 65535
    %v4329 = vshrl.u32 %v4327, 16
    %v4330 = vand.u32 %v4326, 65535
    %v4331 = vshrl.u32 %v4326, 16
    %v4332 = vmul.u32 %v4328, %v4330
    %v4333 = vmul.u32 %v4328, %v4331
    %v4334 = vmul.u32 %v4329, %v4330
    %v4335 = vmul.u32 %v4329, %v4331
    %v4336 = vshll.u32 %v4333, 16
    %v4337 = vshrl.u32 %v4333, 16
    %v4338 = vshll.u32 %v4334, 16
    %v4339 = vshrl.u32 %v4334, 16
    %vm4340 = vc.u32 %v4332, %v4336
    %v4341 = vsel %vm4340, 1, 0
    %v4342 = vadd.s32 %v4332, %v4336
    %v4343 = vadd.s32 %v4335, %v4341
    %vm4344 = vc.u32 %v4342, %v4338
    %v4345 = vsel %vm4344, 1, 0
    %v4346 = vadd.s32 %v4342, %v4338
    %v4347 = vadd.s32 %v4343, %v4345
    %v4348 = vadd.s32 %v4347, %v4337
    %v4349 = vadd.s32 %v4348, %v4339
    %v4350 = vand.u32 %v4327, 65535
    %v4351 = vshrl.u32 %v4327, 16
    %v4352 = vand.u32 %v4322, 65535
    %v4353 = vshrl.u32 %v4322, 16
    %v4354 = vmul.u32 %v4350, %v4352
    %v4355 = vmul.u32 %v4350, %v4353
    %v4356 = vmul.u32 %v4351, %v4352
    %v4357 = vmul.u32 %v4351, %v4353
    %v4358 = vshll.u32 %v4355, 16
    %v4359 = vshrl.u32 %v4355, 16
    %v4360 = vshll.u32 %v4356, 16
    %v4361 = vshrl.u32 %v4356, 16
    %vm4362 = vc.u32 %v4354, %v4358
    %v4363 = vsel %vm4362, 1, 0
    %v4364 = vadd.s32 %v4354, %v4358
    %v4365 = vadd.s32 %v4357, %v4363
    %vm4366 = vc.u32 %v4364, %v4360
    %v4367 = vsel %vm4366, 1, 0
    %v4368 = vadd.s32 %v4364, %v4360
    %v4369 = vadd.s32 %v4365, %v4367
    %v4370 = vadd.s32 %v4369, %v4359
    %v4371 = vadd.s32 %v4370, %v4361
    %v4372 = vmul.u32 %v4327, %v4318
    %v4373 = vadd.s32 %v4349, %v4368
    %vm4374 = vc.u32 %v4349, %v4368
    %v4375 = vadd.s32 %v4371, 1
    %v4376 = vsel %vm4374, %v4375, %v4371
    %v4377 = vadd.s32 %v4372, %v4376
    %v4378 = vadd.s32 %v4377, 536870912
    %v4379 = vshrl.u32 %v4378, 30
    %v4380 = vshll.u32 %v4379, 30
    %v4381 = vsub.s32 %v4377, %v4380
    %vm4382 = vcmp.lt.s32.totalorder %v4381, 0
    %v4383 = vsub.s32 0, %v4381
    %v4384 = vsel %vm4382, %v4383, %v4381
    %v4385 = vclz %v4384
    %v4386 = vsub.s32 %v4385, 2
    %vm4387 = vcmp.gt.s32.totalorder 0, %v4386
    %v4388 = vsel %vm4387, 0, %v4386
    %v4389 = vsub.s32 32, %v4388
    %v4390 = vshll.u32 %v4381, %v4388
    %v4391 = vshrl.u32 %v4373, %v4389
    %v4392 = vor.u32 %v4390, %v4391
    %v4393 = vsub.s32 4294967266, %v4388
    %v4394 = vadd.s32 %v4393, 127
    %v4395 = vshll.u32 %v4394, 23
    %v4396 = vor.u32 4788187, %v4395
    %v4397 = vand.u32 2147483647, %v4396
    %v4399 = vcvt.s32.f32 %v4392
    %v4400 = vmul.f32 %v4399, %v4397
    %v4401 = vxor.u32 %v4400, 2147483648
    %v4402 = vsel %vm4281, %v4401, %v4400
    %v4403 = vsub.s32 4, %v4379
    %v4404 = vsel %vm4281, %v4403, %v4379
    %v4405 = vsel %vm4280, %v125, %v4402
    %v4406 = vsel %vm4280, 0, %v4404
    %v4407 = vmul.f32 %v4405, %v4405
    %v4408 = vmul.f32 %v4407, -0.001358992
    %v4409 = vadd.f32 %v4408, 0.041655596
    %v4410 = vmul.f32 %v4407, %v4409
    %v4411 = vadd.f32 %v4410, -0.4999988
    %v4412 = vmul.f32 %v4407, %v4411
    %v4413 = vadd.f32 1.0, %v4412
    %v4414 = vmul.f32 %v4405, %v4405
    %v4415 = vmul.f32 %v4414, -0.00019511016
    %v4416 = vadd.f32 %v4415, 0.008332121
    %v4417 = vmul.f32 %v4414, %v4416
    %v4418 = vadd.f32 %v4417, -0.16666654
    %v4419 = vmul.f32 %v4414, %v4418
    %v4420 = vadd.f32 %v4419, 1.0
    %v4421 = vmul.f32 %v4420, %v4405
    %vm4422 = vweird.f32 %v125
    %v4423 = vadd.s32 %v4406, 3
    %v4424 = vand.u32 %v4423, 3
    %vm4425 = vcmp.lt.s32.totalorder %v4424, 2
    %vm4426 = vcmp.eq.s32.totalorder %v4424, 0
    %v4427 = vxor.u32 %v4421, 2147483648
    %v4428 = vsel %vm4426, %v4413, %v4427
    %vm4429 = vcmp.eq.s32.totalorder %v4424, 2
    %v4430 = vxor.u32 %v4413, 2147483648
    %v4431 = vsel %vm4429, %v4430, %v4421
    %v4432 = vsel %vm4425, %v4428, %v4431
    %v4433 = vsel %vm4422, nan, %v4432
    %v4434 = vand.u32 2147483647, %v126
    %vm4435 = vcmp.le.f32.partialorder %v4434, 0.7853982
    %vm4436 = vcmp.lt.s32.totalorder %v126, 0
    %v4437 = vand.u32 %v126, 2139095040
    %v4438 = vshrl.u32 %v4437, 23
    %v4439 = vsub.s32 %v4438, 127
    %v4440 = vand.u32 2147483647, %v126
    %v4441 = vand.u32 %v4440, 8388607
    %v4442 = vor.u32 %v4441, 8388608
    %v4443 = vsub.s32 0, %v4442
    %v4444 = vadd.s32 %v4439, 1
    %vm4445 = vcmp.gt.s32.totalorder %v4444, 0
    %v4446 = vsel %vm4445, %v4444, 0
    %v4447 = vshrl.u32 %v4446, 5
    %v4448 = vand.u32 %v4446, 31
    %v4449 = vsub.s32 32, %v4448
    %v4450 = vshrl.u32 683565275, %v4449
    %v4451 = vshll.u32 683565275, %v4448
    %v4452 = vshrl.u32 2475754826, %v4449
    %v4453 = vor.u32 %v4451, %v4452
    %v4454 = vshll.u32 2475754826, %v4448
    %v4455 = vshrl.u32 2131351028, %v4449
    %v4456 = vor.u32 %v4454, %v4455
    %v4457 = vshll.u32 2131351028, %v4448
    %v4458 = vshrl.u32 2102212464, %v4449
    %v4459 = vor.u32 %v4457, %v4458
    %v4460 = vshll.u32 2102212464, %v4448
    %v4461 = vshrl.u32 920167782, %v4449
    %v4462 = vor.u32 %v4460, %v4461
    %v4463 = vshll.u32 920167782, %v4448
    %v4464 = vshrl.u32 1326507024, %v4449
    %v4465 = vor.u32 %v4463, %v4464
    %vm4466 = vcmp.lt.s32.totalorder %v4447, 1
    %vm4467 = vcmp.lt.s32.totalorder %v4447, 2
    %vm4468 = vcmp.lt.s32.totalorder %v4447, 3
    %vm4469 = vcmp.lt.s32.totalorder %v4447, 4
    %v4470 = vsel %vm4466, %v4450, %v4453
    %v4471 = vsel %vm4469, %v4459, 2102212464
    %v4472 = vsel %vm4468, %v4456, %v4471
    %v4473 = vsel %vm4467, %v4470, %v4472
    %v4474 = vsel %vm4466, %v4453, %v4456
    %v4475 = vsel %vm4469, %v4462, 920167782
    %v4476 = vsel %vm4468, %v4459, %v4475
    %v4477 = vsel %vm4467, %v4474, %v4476
    %v4478 = vsel %vm4466, %v4456, %v4459
    %v4479 = vsel %vm4469, %v4465, 1326507024
    %v4480 = vsel %vm4468, %v4462, %v4479
    %v4481 = vsel %vm4467, %v4478, %v4480
    %v4482 = vshll.u32 %v4442, 8
    %v4483 = vand.u32 %v4482, 65535
    %v4484 = vshrl.u32 %v4482, 16
    %v4485 = vand.u32 %v4481, 65535
    %v4486 = vshrl.u32 %v4481, 16
    %v4487 = vmul.u32 %v4483, %v4485
    %v4488 = vmul.u32 %v4483, %v4486
    %v4489 = vmul.u32 %v4484, %v4485
    %v4490 = vmul.u32 %v4484, %v4486
    %v4491 = vshll.u32 %v4488, 16
    %v4492 = vshrl.u32 %v4488, 16
    %v4493 = vshll.u32 %v4489, 16
    %v4494 = vshrl.u32 %v4489, 16
    %vm4495 = vc.u32 %v4487, %v4491
    %v4496 = vsel %vm4495, 1, 0
    %v4497 = vadd.s32 %v4487, %v4491
    %v4498 = vadd.s32 %v4490, %v4496
    %vm4499 = vc.u32 %v4497, %v4493
    %v4500 = vsel %vm4499, 1, 0
    %v4501 = vadd.s32 %v4497, %v4493
    %v4502 = vadd.s32 %v4498, %v4500
    %v4503 = vadd.s32 %v4502, %v4492
    %v4504 = vadd.s32 %v4503, %v4494
    %v4505 = vand.u32 %v4482, 65535
    %v4506 = vshrl.u32 %v4482, 16
    %v4507 = vand.u32 %v4477, 65535
    %v4508 = vshrl.u32 %v4477, 16
    %v4509 = vmul.u32 %v4505, %v4507
    %v4510 = vmul.u32 %v4505, %v4508
    %v4511 = vmul.u32 %v4506, %v4507
    %v4512 = vmul.u32 %v4506, %v4508
    %v4513 = vshll.u32 %v4510, 16
    %v4514 = vshrl.u32 %v4510, 16
    %v4515 = vshll.u32 %v4511, 16
    %v4516 = vshrl.u32 %v4511, 16
    %vm4517 = vc.u32 %v4509, %v4513
    %v4518 = vsel %vm4517, 1, 0
    %v4519 = vadd.s32 %v4509, %v4513
    %v4520 = vadd.s32 %v4512, %v4518
    %vm4521 = vc.u32 %v4519, %v4515
    %v4522 = vsel %vm4521, 1, 0
    %v4523 = vadd.s32 %v4519, %v4515
    %v4524 = vadd.s32 %v4520, %v4522
    %v4525 = vadd.s32 %v4524, %v4514
    %v4526 = vadd.s32 %v4525, %v4516
    %v4527 = vmul.u32 %v4482, %v4473
    %v4528 = vadd.s32 %v4504, %v4523
    %vm4529 = vc.u32 %v4504, %v4523
    %v4530 = vadd.s32 %v4526, 1
    %v4531 = vsel %vm4529, %v4530, %v4526
    %v4532 = vadd.s32 %v4527, %v4531
    %v4533 = vadd.s32 %v4532, 536870912
    %v4534 = vshrl.u32 %v4533, 30
    %v4535 = vshll.u32 %v4534, 30
    %v4536 = vsub.s32 %v4532, %v4535
    %vm4537 = vcmp.lt.s32.totalorder %v4536, 0
    %v4538 = vsub.s32 0, %v4536
    %v4539 = vsel %vm4537, %v4538, %v4536
    %v4540 = vclz %v4539
    %v4541 = vsub.s32 %v4540, 2
    %vm4542 = vcmp.gt.s32.totalorder 0, %v4541
    %v4543 = vsel %vm4542, 0, %v4541
    %v4544 = vsub.s32 32, %v4543
    %v4545 = vshll.u32 %v4536, %v4543
    %v4546 = vshrl.u32 %v4528, %v4544
    %v4547 = vor.u32 %v4545, %v4546
    %v4548 = vsub.s32 4294967266, %v4543
    %v4549 = vadd.s32 %v4548, 127
    %v4550 = vshll.u32 %v4549, 23
    %v4551 = vor.u32 4788187, %v4550
    %v4552 = vand.u32 2147483647, %v4551
    %v4554 = vcvt.s32.f32 %v4547
    %v4555 = vmul.f32 %v4554, %v4552
    %v4556 = vxor.u32 %v4555, 2147483648
    %v4557 = vsel %vm4436, %v4556, %v4555
    %v4558 = vsub.s32 4, %v4534
    %v4559 = vsel %vm4436, %v4558, %v4534
    %v4560 = vsel %vm4435, %v126, %v4557
    %v4561 = vsel %vm4435, 0, %v4559
    %v4562 = vmul.f32 %v4560, %v4560
    %v4563 = vmul.f32 %v4562, -0.001358992
    %v4564 = vadd.f32 %v4563, 0.041655596
    %v4565 = vmul.f32 %v4562, %v4564
    %v4566 = vadd.f32 %v4565, -0.4999988
    %v4567 = vmul.f32 %v4562, %v4566
    %v4568 = vadd.f32 1.0, %v4567
    %v4569 = vmul.f32 %v4560, %v4560
    %v4570 = vmul.f32 %v4569, -0.00019511016
    %v4571 = vadd.f32 %v4570, 0.008332121
    %v4572 = vmul.f32 %v4569, %v4571
    %v4573 = vadd.f32 %v4572, -0.16666654
    %v4574 = vmul.f32 %v4569, %v4573
    %v4575 = vadd.f32 %v4574, 1.0
    %v4576 = vmul.f32 %v4575, %v4560
    %vm4577 = vweird.f32 %v126
    %v4578 = vadd.s32 %v4561, 3
    %v4579 = vand.u32 %v4578, 3
    %vm4580 = vcmp.lt.s32.totalorder %v4579, 2
    %vm4581 = vcmp.eq.s32.totalorder %v4579, 0
    %v4582 = vxor.u32 %v4576, 2147483648
    %v4583 = vsel %vm4581, %v4568, %v4582
    %vm4584 = vcmp.eq.s32.totalorder %v4579, 2
    %v4585 = vxor.u32 %v4568, 2147483648
    %v4586 = vsel %vm4584, %v4585, %v4576
    %v4587 = vsel %vm4580, %v4583, %v4586
    %v4588 = vsel %vm4577, nan, %v4587
    %v4589 = vand.u32 2147483647, %v127
    %vm4590 = vcmp.le.f32.partialorder %v4589, 0.7853982
    %vm4591 = vcmp.lt.s32.totalorder %v127, 0
    %v4592 = vand.u32 %v127, 2139095040
    %v4593 = vshrl.u32 %v4592, 23
    %v4594 = vsub.s32 %v4593, 127
    %v4595 = vand.u32 2147483647, %v127
    %v4596 = vand.u32 %v4595, 8388607
    %v4597 = vor.u32 %v4596, 8388608
    %v4598 = vsub.s32 0, %v4597
    %v4599 = vadd.s32 %v4594, 1
    %vm4600 = vcmp.gt.s32.totalorder %v4599, 0
    %v4601 = vsel %vm4600, %v4599, 0
    %v4602 = vshrl.u32 %v4601, 5
    %v4603 = vand.u32 %v4601, 31
    %v4604 = vsub.s32 32, %v4603
    %v4605 = vshrl.u32 683565275, %v4604
    %v4606 = vshll.u32 683565275, %v4603
    %v4607 = vshrl.u32 2475754826, %v4604
    %v4608 = vor.u32 %v4606, %v4607
    %v4609 = vshll.u32 2475754826, %v4603
    %v4610 = vshrl.u32 2131351028, %v4604
    %v4611 = vor.u32 %v4609, %v4610
    %v4612 = vshll.u32 2131351028, %v4603
    %v4613 = vshrl.u32 2102212464, %v4604
    %v4614 = vor.u32 %v4612, %v4613
    %v4615 = vshll.u32 2102212464, %v4603
    %v4616 = vshrl.u32 920167782, %v4604
    %v4617 = vor.u32 %v4615, %v4616
    %v4618 = vshll.u32 920167782, %v4603
    %v4619 = vshrl.u32 1326507024, %v4604
    %v4620 = vor.u32 %v4618, %v4619
    %vm4621 = vcmp.lt.s32.totalorder %v4602, 1
    %vm4622 = vcmp.lt.s32.totalorder %v4602, 2
    %vm4623 = vcmp.lt.s32.totalorder %v4602, 3
    %vm4624 = vcmp.lt.s32.totalorder %v4602, 4
    %v4625 = vsel %vm4621, %v4605, %v4608
    %v4626 = vsel %vm4624, %v4614, 2102212464
    %v4627 = vsel %vm4623, %v4611, %v4626
    %v4628 = vsel %vm4622, %v4625, %v4627
    %v4629 = vsel %vm4621, %v4608, %v4611
    %v4630 = vsel %vm4624, %v4617, 920167782
    %v4631 = vsel %vm4623, %v4614, %v4630
    %v4632 = vsel %vm4622, %v4629, %v4631
    %v4633 = vsel %vm4621, %v4611, %v4614
    %v4634 = vsel %vm4624, %v4620, 1326507024
    %v4635 = vsel %vm4623, %v4617, %v4634
    %v4636 = vsel %vm4622, %v4633, %v4635
    %v4637 = vshll.u32 %v4597, 8
    %v4638 = vand.u32 %v4637, 65535
    %v4639 = vshrl.u32 %v4637, 16
    %v4640 = vand.u32 %v4636, 65535
    %v4641 = vshrl.u32 %v4636, 16
    %v4642 = vmul.u32 %v4638, %v4640
    %v4643 = vmul.u32 %v4638, %v4641
    %v4644 = vmul.u32 %v4639, %v4640
    %v4645 = vmul.u32 %v4639, %v4641
    %v4646 = vshll.u32 %v4643, 16
    %v4647 = vshrl.u32 %v4643, 16
    %v4648 = vshll.u32 %v4644, 16
    %v4649 = vshrl.u32 %v4644, 16
    %vm4650 = vc.u32 %v4642, %v4646
    %v4651 = vsel %vm4650, 1, 0
    %v4652 = vadd.s32 %v4642, %v4646
    %v4653 = vadd.s32 %v4645, %v4651
    %vm4654 = vc.u32 %v4652, %v4648
    %v4655 = vsel %vm4654, 1, 0
    %v4656 = vadd.s32 %v4652, %v4648
    %v4657 = vadd.s32 %v4653, %v4655
    %v4658 = vadd.s32 %v4657, %v4647
    %v4659 = vadd.s32 %v4658, %v4649
    %v4660 = vand.u32 %v4637, 65535
    %v4661 = vshrl.u32 %v4637, 16
    %v4662 = vand.u32 %v4632, 65535
    %v4663 = vshrl.u32 %v4632, 16
    %v4664 = vmul.u32 %v4660, %v4662
    %v4665 = vmul.u32 %v4660, %v4663
    %v4666 = vmul.u32 %v4661, %v4662
    %v4667 = vmul.u32 %v4661, %v4663
    %v4668 = vshll.u32 %v4665, 16
    %v4669 = vshrl.u32 %v4665, 16
    %v4670 = vshll.u32 %v4666, 16
    %v4671 = vshrl.u32 %v4666, 16
    %vm4672 = vc.u32 %v4664, %v4668
    %v4673 = vsel %vm4672, 1, 0
    %v4674 = vadd.s32 %v4664, %v4668
    %v4675 = vadd.s32 %v4667, %v4673
    %vm4676 = vc.u32 %v4674, %v4670
    %v4677 = vsel %vm4676, 1, 0
    %v4678 = vadd.s32 %v4674, %v4670
    %v4679 = vadd.s32 %v4675, %v4677
    %v4680 = vadd.s32 %v4679, %v4669
    %v4681 = vadd.s32 %v4680, %v4671
    %v4682 = vmul.u32 %v4637, %v4628
    %v4683 = vadd.s32 %v4659, %v4678
    %vm4684 = vc.u32 %v4659, %v4678
    %v4685 = vadd.s32 %v4681, 1
    %v4686 = vsel %vm4684, %v4685, %v4681
    %v4687 = vadd.s32 %v4682, %v4686
    %v4688 = vadd.s32 %v4687, 536870912
    %v4689 = vshrl.u32 %v4688, 30
    %v4690 = vshll.u32 %v4689, 30
    %v4691 = vsub.s32 %v4687, %v4690
    %vm4692 = vcmp.lt.s32.totalorder %v4691, 0
    %v4693 = vsub.s32 0, %v4691
    %v4694 = vsel %vm4692, %v4693, %v4691
    %v4695 = vclz %v4694
    %v4696 = vsub.s32 %v4695, 2
    %vm4697 = vcmp.gt.s32.totalorder 0, %v4696
    %v4698 = vsel %vm4697, 0, %v4696
    %v4699 = vsub.s32 32, %v4698
    %v4700 = vshll.u32 %v4691, %v4698
    %v4701 = vshrl.u32 %v4683, %v4699
    %v4702 = vor.u32 %v4700, %v4701
    %v4703 = vsub.s32 4294967266, %v4698
    %v4704 = vadd.s32 %v4703, 127
    %v4705 = vshll.u32 %v4704, 23
    %v4706 = vor.u32 4788187, %v4705
    %v4707 = vand.u32 2147483647, %v4706
    %v4709 = vcvt.s32.f32 %v4702
    %v4710 = vmul.f32 %v4709, %v4707
    %v4711 = vxor.u32 %v4710, 2147483648
    %v4712 = vsel %vm4591, %v4711, %v4710
    %v4713 = vsub.s32 4, %v4689
    %v4714 = vsel %vm4591, %v4713, %v4689
    %v4715 = vsel %vm4590, %v127, %v4712
    %v4716 = vsel %vm4590, 0, %v4714
    %v4717 = vmul.f32 %v4715, %v4715
    %v4718 = vmul.f32 %v4717, -0.001358992
    %v4719 = vadd.f32 %v4718, 0.041655596
    %v4720 = vmul.f32 %v4717, %v4719
    %v4721 = vadd.f32 %v4720, -0.4999988
    %v4722 = vmul.f32 %v4717, %v4721
    %v4723 = vadd.f32 1.0, %v4722
    %v4724 = vmul.f32 %v4715, %v4715
    %v4725 = vmul.f32 %v4724, -0.00019511016
    %v4726 = vadd.f32 %v4725, 0.008332121
    %v4727 = vmul.f32 %v4724, %v4726
    %v4728 = vadd.f32 %v4727, -0.16666654
    %v4729 = vmul.f32 %v4724, %v4728
    %v4730 = vadd.f32 %v4729, 1.0
    %v4731 = vmul.f32 %v4730, %v4715
    %vm4732 = vweird.f32 %v127
    %v4733 = vadd.s32 %v4716, 3
    %v4734 = vand.u32 %v4733, 3
    %vm4735 = vcmp.lt.s32.totalorder %v4734, 2
    %vm4736 = vcmp.eq.s32.totalorder %v4734, 0
    %v4737 = vxor.u32 %v4731, 2147483648
    %v4738 = vsel %vm4736, %v4723, %v4737
    %vm4739 = vcmp.eq.s32.totalorder %v4734, 2
    %v4740 = vxor.u32 %v4723, 2147483648
    %v4741 = vsel %vm4739, %v4740, %v4731
    %v4742 = vsel %vm4735, %v4738, %v4741
    %v4743 = vsel %vm4732, nan, %v4742
    %v4744 = vand.u32 2147483647, %v128
    %vm4745 = vcmp.le.f32.partialorder %v4744, 0.7853982
    %vm4746 = vcmp.lt.s32.totalorder %v128, 0
    %v4747 = vand.u32 %v128, 2139095040
    %v4748 = vshrl.u32 %v4747, 23
    %v4749 = vsub.s32 %v4748, 127
    %v4750 = vand.u32 2147483647, %v128
    %v4751 = vand.u32 %v4750, 8388607
    %v4752 = vor.u32 %v4751, 8388608
    %v4753 = vsub.s32 0, %v4752
    %v4754 = vadd.s32 %v4749, 1
    %vm4755 = vcmp.gt.s32.totalorder %v4754, 0
    %v4756 = vsel %vm4755, %v4754, 0
    %v4757 = vshrl.u32 %v4756, 5
    %v4758 = vand.u32 %v4756, 31
    %v4759 = vsub.s32 32, %v4758
    %v4760 = vshrl.u32 683565275, %v4759
    %v4761 = vshll.u32 683565275, %v4758
    %v4762 = vshrl.u32 2475754826, %v4759
    %v4763 = vor.u32 %v4761, %v4762
    %v4764 = vshll.u32 2475754826, %v4758
    %v4765 = vshrl.u32 2131351028, %v4759
    %v4766 = vor.u32 %v4764, %v4765
    %v4767 = vshll.u32 2131351028, %v4758
    %v4768 = vshrl.u32 2102212464, %v4759
    %v4769 = vor.u32 %v4767, %v4768
    %v4770 = vshll.u32 2102212464, %v4758
    %v4771 = vshrl.u32 920167782, %v4759
    %v4772 = vor.u32 %v4770, %v4771
    %v4773 = vshll.u32 920167782, %v4758
    %v4774 = vshrl.u32 1326507024, %v4759
    %v4775 = vor.u32 %v4773, %v4774
    %vm4776 = vcmp.lt.s32.totalorder %v4757, 1
    %vm4777 = vcmp.lt.s32.totalorder %v4757, 2
    %vm4778 = vcmp.lt.s32.totalorder %v4757, 3
    %vm4779 = vcmp.lt.s32.totalorder %v4757, 4
    %v4780 = vsel %vm4776, %v4760, %v4763
    %v4781 = vsel %vm4779, %v4769, 2102212464
    %v4782 = vsel %vm4778, %v4766, %v4781
    %v4783 = vsel %vm4777, %v4780, %v4782
    %v4784 = vsel %vm4776, %v4763, %v4766
    %v4785 = vsel %vm4779, %v4772, 920167782
    %v4786 = vsel %vm4778, %v4769, %v4785
    %v4787 = vsel %vm4777, %v4784, %v4786
    %v4788 = vsel %vm4776, %v4766, %v4769
    %v4789 = vsel %vm4779, %v4775, 1326507024
    %v4790 = vsel %vm4778, %v4772, %v4789
    %v4791 = vsel %vm4777, %v4788, %v4790
    %v4792 = vshll.u32 %v4752, 8
    %v4793 = vand.u32 %v4792, 65535
    %v4794 = vshrl.u32 %v4792, 16
    %v4795 = vand.u32 %v4791, 65535
    %v4796 = vshrl.u32 %v4791, 16
    %v4797 = vmul.u32 %v4793, %v4795
    %v4798 = vmul.u32 %v4793, %v4796
    %v4799 = vmul.u32 %v4794, %v4795
    %v4800 = vmul.u32 %v4794, %v4796
    %v4801 = vshll.u32 %v4798, 16
    %v4802 = vshrl.u32 %v4798, 16
    %v4803 = vshll.u32 %v4799, 16
    %v4804 = vshrl.u32 %v4799, 16
    %vm4805 = vc.u32 %v4797, %v4801
    %v4806 = vsel %vm4805, 1, 0
    %v4807 = vadd.s32 %v4797, %v4801
    %v4808 = vadd.s32 %v4800, %v4806
    %vm4809 = vc.u32 %v4807, %v4803
    %v4810 = vsel %vm4809, 1, 0
    %v4811 = vadd.s32 %v4807, %v4803
    %v4812 = vadd.s32 %v4808, %v4810
    %v4813 = vadd.s32 %v4812, %v4802
    %v4814 = vadd.s32 %v4813, %v4804
    %v4815 = vand.u32 %v4792, 65535
    %v4816 = vshrl.u32 %v4792, 16
    %v4817 = vand.u32 %v4787, 65535
    %v4818 = vshrl.u32 %v4787, 16
    %v4819 = vmul.u32 %v4815, %v4817
    %v4820 = vmul.u32 %v4815, %v4818
    %v4821 = vmul.u32 %v4816, %v4817
    %v4822 = vmul.u32 %v4816, %v4818
    %v4823 = vshll.u32 %v4820, 16
    %v4824 = vshrl.u32 %v4820, 16
    %v4825 = vshll.u32 %v4821, 16
    %v4826 = vshrl.u32 %v4821, 16
    %vm4827 = vc.u32 %v4819, %v4823
    %v4828 = vsel %vm4827, 1, 0
    %v4829 = vadd.s32 %v4819, %v4823
    %v4830 = vadd.s32 %v4822, %v4828
    %vm4831 = vc.u32 %v4829, %v4825
    %v4832 = vsel %vm4831, 1, 0
    %v4833 = vadd.s32 %v4829, %v4825
    %v4834 = vadd.s32 %v4830, %v4832
    %v4835 = vadd.s32 %v4834, %v4824
    %v4836 = vadd.s32 %v4835, %v4826
    %v4837 = vmul.u32 %v4792, %v4783
    %v4838 = vadd.s32 %v4814, %v4833
    %vm4839 = vc.u32 %v4814, %v4833
    %v4840 = vadd.s32 %v4836, 1
    %v4841 = vsel %vm4839, %v4840, %v4836
    %v4842 = vadd.s32 %v4837, %v4841
    %v4843 = vadd.s32 %v4842, 536870912
    %v4844 = vshrl.u32 %v4843, 30
    %v4845 = vshll.u32 %v4844, 30
    %v4846 = vsub.s32 %v4842, %v4845
    %vm4847 = vcmp.lt.s32.totalorder %v4846, 0
    %v4848 = vsub.s32 0, %v4846
    %v4849 = vsel %vm4847, %v4848, %v4846
    %v4850 = vclz %v4849
    %v4851 = vsub.s32 %v4850, 2
    %vm4852 = vcmp.gt.s32.totalorder 0, %v4851
    %v4853 = vsel %vm4852, 0, %v4851
    %v4854 = vsub.s32 32, %v4853
    %v4855 = vshll.u32 %v4846, %v4853
    %v4856 = vshrl.u32 %v4838, %v4854
    %v4857 = vor.u32 %v4855, %v4856
    %v4858 = vsub.s32 4294967266, %v4853
    %v4859 = vadd.s32 %v4858, 127
    %v4860 = vshll.u32 %v4859, 23
    %v4861 = vor.u32 4788187, %v4860
    %v4862 = vand.u32 2147483647, %v4861
    %v4864 = vcvt.s32.f32 %v4857
    %v4865 = vmul.f32 %v4864, %v4862
    %v4866 = vxor.u32 %v4865, 2147483648
    %v4867 = vsel %vm4746, %v4866, %v4865
    %v4868 = vsub.s32 4, %v4844
    %v4869 = vsel %vm4746, %v4868, %v4844
    %v4870 = vsel %vm4745, %v128, %v4867
    %v4871 = vsel %vm4745, 0, %v4869
    %v4872 = vmul.f32 %v4870, %v4870
    %v4873 = vmul.f32 %v4872, -0.001358992
    %v4874 = vadd.f32 %v4873, 0.041655596
    %v4875 = vmul.f32 %v4872, %v4874
    %v4876 = vadd.f32 %v4875, -0.4999988
    %v4877 = vmul.f32 %v4872, %v4876
    %v4878 = vadd.f32 1.0, %v4877
    %v4879 = vmul.f32 %v4870, %v4870
    %v4880 = vmul.f32 %v4879, -0.00019511016
    %v4881 = vadd.f32 %v4880, 0.008332121
    %v4882 = vmul.f32 %v4879, %v4881
    %v4883 = vadd.f32 %v4882, -0.16666654
    %v4884 = vmul.f32 %v4879, %v4883
    %v4885 = vadd.f32 %v4884, 1.0
    %v4886 = vmul.f32 %v4885, %v4870
    %vm4887 = vweird.f32 %v128
    %v4888 = vadd.s32 %v4871, 3
    %v4889 = vand.u32 %v4888, 3
    %vm4890 = vcmp.lt.s32.totalorder %v4889, 2
    %vm4891 = vcmp.eq.s32.totalorder %v4889, 0
    %v4892 = vxor.u32 %v4886, 2147483648
    %v4893 = vsel %vm4891, %v4878, %v4892
    %vm4894 = vcmp.eq.s32.totalorder %v4889, 2
    %v4895 = vxor.u32 %v4878, 2147483648
    %v4896 = vsel %vm4894, %v4895, %v4886
    %v4897 = vsel %vm4890, %v4893, %v4896
    %v4898 = vsel %vm4887, nan, %v4897
    %v4899 = vand.u32 2147483647, %v129
    %vm4900 = vcmp.le.f32.partialorder %v4899, 0.7853982
    %vm4901 = vcmp.lt.s32.totalorder %v129, 0
    %v4902 = vand.u32 %v129, 2139095040
    %v4903 = vshrl.u32 %v4902, 23
    %v4904 = vsub.s32 %v4903, 127
    %v4905 = vand.u32 2147483647, %v129
    %v4906 = vand.u32 %v4905, 8388607
    %v4907 = vor.u32 %v4906, 8388608
    %v4908 = vsub.s32 0, %v4907
    %v4909 = vadd.s32 %v4904, 1
    %vm4910 = vcmp.gt.s32.totalorder %v4909, 0
    %v4911 = vsel %vm4910, %v4909, 0
    %v4912 = vshrl.u32 %v4911, 5
    %v4913 = vand.u32 %v4911, 31
    %v4914 = vsub.s32 32, %v4913
    %v4915 = vshrl.u32 683565275, %v4914
    %v4916 = vshll.u32 683565275, %v4913
    %v4917 = vshrl.u32 2475754826, %v4914
    %v4918 = vor.u32 %v4916, %v4917
    %v4919 = vshll.u32 2475754826, %v4913
    %v4920 = vshrl.u32 2131351028, %v4914
    %v4921 = vor.u32 %v4919, %v4920
    %v4922 = vshll.u32 2131351028, %v4913
    %v4923 = vshrl.u32 2102212464, %v4914
    %v4924 = vor.u32 %v4922, %v4923
    %v4925 = vshll.u32 2102212464, %v4913
    %v4926 = vshrl.u32 920167782, %v4914
    %v4927 = vor.u32 %v4925, %v4926
    %v4928 = vshll.u32 920167782, %v4913
    %v4929 = vshrl.u32 1326507024, %v4914
    %v4930 = vor.u32 %v4928, %v4929
    %vm4931 = vcmp.lt.s32.totalorder %v4912, 1
    %vm4932 = vcmp.lt.s32.totalorder %v4912, 2
    %vm4933 = vcmp.lt.s32.totalorder %v4912, 3
    %vm4934 = vcmp.lt.s32.totalorder %v4912, 4
    %v4935 = vsel %vm4931, %v4915, %v4918
    %v4936 = vsel %vm4934, %v4924, 2102212464
    %v4937 = vsel %vm4933, %v4921, %v4936
    %v4938 = vsel %vm4932, %v4935, %v4937
    %v4939 = vsel %vm4931, %v4918, %v4921
    %v4940 = vsel %vm4934, %v4927, 920167782
    %v4941 = vsel %vm4933, %v4924, %v4940
    %v4942 = vsel %vm4932, %v4939, %v4941
    %v4943 = vsel %vm4931, %v4921, %v4924
    %v4944 = vsel %vm4934, %v4930, 1326507024
    %v4945 = vsel %vm4933, %v4927, %v4944
    %v4946 = vsel %vm4932, %v4943, %v4945
    %v4947 = vshll.u32 %v4907, 8
    %v4948 = vand.u32 %v4947, 65535
    %v4949 = vshrl.u32 %v4947, 16
    %v4950 = vand.u32 %v4946, 65535
    %v4951 = vshrl.u32 %v4946, 16
    %v4952 = vmul.u32 %v4948, %v4950
    %v4953 = vmul.u32 %v4948, %v4951
    %v4954 = vmul.u32 %v4949, %v4950
    %v4955 = vmul.u32 %v4949, %v4951
    %v4956 = vshll.u32 %v4953, 16
    %v4957 = vshrl.u32 %v4953, 16
    %v4958 = vshll.u32 %v4954, 16
    %v4959 = vshrl.u32 %v4954, 16
    %vm4960 = vc.u32 %v4952, %v4956
    %v4961 = vsel %vm4960, 1, 0
    %v4962 = vadd.s32 %v4952, %v4956
    %v4963 = vadd.s32 %v4955, %v4961
    %vm4964 = vc.u32 %v4962, %v4958
    %v4965 = vsel %vm4964, 1, 0
    %v4966 = vadd.s32 %v4962, %v4958
    %v4967 = vadd.s32 %v4963, %v4965
    %v4968 = vadd.s32 %v4967, %v4957
    %v4969 = vadd.s32 %v4968, %v4959
    %v4970 = vand.u32 %v4947, 65535
    %v4971 = vshrl.u32 %v4947, 16
    %v4972 = vand.u32 %v4942, 65535
    %v4973 = vshrl.u32 %v4942, 16
    %v4974 = vmul.u32 %v4970, %v4972
    %v4975 = vmul.u32 %v4970, %v4973
    %v4976 = vmul.u32 %v4971, %v4972
    %v4977 = vmul.u32 %v4971, %v4973
    %v4978 = vshll.u32 %v4975, 16
    %v4979 = vshrl.u32 %v4975, 16
    %v4980 = vshll.u32 %v4976, 16
    %v4981 = vshrl.u32 %v4976, 16
    %vm4982 = vc.u32 %v4974, %v4978
    %v4983 = vsel %vm4982, 1, 0
    %v4984 = vadd.s32 %v4974, %v4978
    %v4985 = vadd.s32 %v4977, %v4983
    %vm4986 = vc.u32 %v4984, %v4980
    %v4987 = vsel %vm4986, 1, 0
    %v4988 = vadd.s32 %v4984, %v4980
    %v4989 = vadd.s32 %v4985, %v4987
    %v4990 = vadd.s32 %v4989, %v4979
    %v4991 = vadd.s32 %v4990, %v4981
    %v4992 = vmul.u32 %v4947, %v4938
    %v4993 = vadd.s32 %v4969, %v4988
    %vm4994 = vc.u32 %v4969, %v4988
    %v4995 = vadd.s32 %v4991, 1
    %v4996 = vsel %vm4994, %v4995, %v4991
    %v4997 = vadd.s32 %v4992, %v4996
    %v4998 = vadd.s32 %v4997, 536870912
    %v4999 = vshrl.u32 %v4998, 30
    %v5000 = vshll.u32 %v4999, 30
    %v5001 = vsub.s32 %v4997, %v5000
    %vm5002 = vcmp.lt.s32.totalorder %v5001, 0
    %v5003 = vsub.s32 0, %v5001
    %v5004 = vsel %vm5002, %v5003, %v5001
    %v5005 = vclz %v5004
    %v5006 = vsub.s32 %v5005, 2
    %vm5007 = vcmp.gt.s32.totalorder 0, %v5006
    %v5008 = vsel %vm5007, 0, %v5006
    %v5009 = vsub.s32 32, %v5008
    %v5010 = vshll.u32 %v5001, %v5008
    %v5011 = vshrl.u32 %v4993, %v5009
    %v5012 = vor.u32 %v5010, %v5011
    %v5013 = vsub.s32 4294967266, %v5008
    %v5014 = vadd.s32 %v5013, 127
    %v5015 = vshll.u32 %v5014, 23
    %v5016 = vor.u32 4788187, %v5015
    %v5017 = vand.u32 2147483647, %v5016
    %v5019 = vcvt.s32.f32 %v5012
    %v5020 = vmul.f32 %v5019, %v5017
    %v5021 = vxor.u32 %v5020, 2147483648
    %v5022 = vsel %vm4901, %v5021, %v5020
    %v5023 = vsub.s32 4, %v4999
    %v5024 = vsel %vm4901, %v5023, %v4999
    %v5025 = vsel %vm4900, %v129, %v5022
    %v5026 = vsel %vm4900, 0, %v5024
    %v5027 = vmul.f32 %v5025, %v5025
    %v5028 = vmul.f32 %v5027, -0.001358992
    %v5029 = vadd.f32 %v5028, 0.041655596
    %v5030 = vmul.f32 %v5027, %v5029
    %v5031 = vadd.f32 %v5030, -0.4999988
    %v5032 = vmul.f32 %v5027, %v5031
    %v5033 = vadd.f32 1.0, %v5032
    %v5034 = vmul.f32 %v5025, %v5025
    %v5035 = vmul.f32 %v5034, -0.00019511016
    %v5036 = vadd.f32 %v5035, 0.008332121
    %v5037 = vmul.f32 %v5034, %v5036
    %v5038 = vadd.f32 %v5037, -0.16666654
    %v5039 = vmul.f32 %v5034, %v5038
    %v5040 = vadd.f32 %v5039, 1.0
    %v5041 = vmul.f32 %v5040, %v5025
    %vm5042 = vweird.f32 %v129
    %v5043 = vadd.s32 %v5026, 3
    %v5044 = vand.u32 %v5043, 3
    %vm5045 = vcmp.lt.s32.totalorder %v5044, 2
    %vm5046 = vcmp.eq.s32.totalorder %v5044, 0
    %v5047 = vxor.u32 %v5041, 2147483648
    %v5048 = vsel %vm5046, %v5033, %v5047
    %vm5049 = vcmp.eq.s32.totalorder %v5044, 2
    %v5050 = vxor.u32 %v5033, 2147483648
    %v5051 = vsel %vm5049, %v5050, %v5041
    %v5052 = vsel %vm5045, %v5048, %v5051
    %v5053 = vsel %vm5042, nan, %v5052
    %v5054 = vand.u32 2147483647, %v130
    %vm5055 = vcmp.le.f32.partialorder %v5054, 0.7853982
    %vm5056 = vcmp.lt.s32.totalorder %v130, 0
    %v5057 = vand.u32 %v130, 2139095040
    %v5058 = vshrl.u32 %v5057, 23
    %v5059 = vsub.s32 %v5058, 127
    %v5060 = vand.u32 2147483647, %v130
    %v5061 = vand.u32 %v5060, 8388607
    %v5062 = vor.u32 %v5061, 8388608
    %v5063 = vsub.s32 0, %v5062
    %v5064 = vadd.s32 %v5059, 1
    %vm5065 = vcmp.gt.s32.totalorder %v5064, 0
    %v5066 = vsel %vm5065, %v5064, 0
    %v5067 = vshrl.u32 %v5066, 5
    %v5068 = vand.u32 %v5066, 31
    %v5069 = vsub.s32 32, %v5068
    %v5070 = vshrl.u32 683565275, %v5069
    %v5071 = vshll.u32 683565275, %v5068
    %v5072 = vshrl.u32 2475754826, %v5069
    %v5073 = vor.u32 %v5071, %v5072
    %v5074 = vshll.u32 2475754826, %v5068
    %v5075 = vshrl.u32 2131351028, %v5069
    %v5076 = vor.u32 %v5074, %v5075
    %v5077 = vshll.u32 2131351028, %v5068
    %v5078 = vshrl.u32 2102212464, %v5069
    %v5079 = vor.u32 %v5077, %v5078
    %v5080 = vshll.u32 2102212464, %v5068
    %v5081 = vshrl.u32 920167782, %v5069
    %v5082 = vor.u32 %v5080, %v5081
    %v5083 = vshll.u32 920167782, %v5068
    %v5084 = vshrl.u32 1326507024, %v5069
    %v5085 = vor.u32 %v5083, %v5084
    %vm5086 = vcmp.lt.s32.totalorder %v5067, 1
    %vm5087 = vcmp.lt.s32.totalorder %v5067, 2
    %vm5088 = vcmp.lt.s32.totalorder %v5067, 3
    %vm5089 = vcmp.lt.s32.totalorder %v5067, 4
    %v5090 = vsel %vm5086, %v5070, %v5073
    %v5091 = vsel %vm5089, %v5079, 2102212464
    %v5092 = vsel %vm5088, %v5076, %v5091
    %v5093 = vsel %vm5087, %v5090, %v5092
    %v5094 = vsel %vm5086, %v5073, %v5076
    %v5095 = vsel %vm5089, %v5082, 920167782
    %v5096 = vsel %vm5088, %v5079, %v5095
    %v5097 = vsel %vm5087, %v5094, %v5096
    %v5098 = vsel %vm5086, %v5076, %v5079
    %v5099 = vsel %vm5089, %v5085, 1326507024
    %v5100 = vsel %vm5088, %v5082, %v5099
    %v5101 = vsel %vm5087, %v5098, %v5100
    %v5102 = vshll.u32 %v5062, 8
    %v5103 = vand.u32 %v5102, 65535
    %v5104 = vshrl.u32 %v5102, 16
    %v5105 = vand.u32 %v5101, 65535
    %v5106 = vshrl.u32 %v5101, 16
    %v5107 = vmul.u32 %v5103, %v5105
    %v5108 = vmul.u32 %v5103, %v5106
    %v5109 = vmul.u32 %v5104, %v5105
    %v5110 = vmul.u32 %v5104, %v5106
    %v5111 = vshll.u32 %v5108, 16
    %v5112 = vshrl.u32 %v5108, 16
    %v5113 = vshll.u32 %v5109, 16
    %v5114 = vshrl.u32 %v5109, 16
    %vm5115 = vc.u32 %v5107, %v5111
    %v5116 = vsel %vm5115, 1, 0
    %v5117 = vadd.s32 %v5107, %v5111
    %v5118 = vadd.s32 %v5110, %v5116
    %vm5119 = vc.u32 %v5117, %v5113
    %v5120 = vsel %vm5119, 1, 0
    %v5121 = vadd.s32 %v5117, %v5113
    %v5122 = vadd.s32 %v5118, %v5120
    %v5123 = vadd.s32 %v5122, %v5112
    %v5124 = vadd.s32 %v5123, %v5114
    %v5125 = vand.u32 %v5102, 65535
    %v5126 = vshrl.u32 %v5102, 16
    %v5127 = vand.u32 %v5097, 65535
    %v5128 = vshrl.u32 %v5097, 16
    %v5129 = vmul.u32 %v5125, %v5127
    %v5130 = vmul.u32 %v5125, %v5128
    %v5131 = vmul.u32 %v5126, %v5127
    %v5132 = vmul.u32 %v5126, %v5128
    %v5133 = vshll.u32 %v5130, 16
    %v5134 = vshrl.u32 %v5130, 16
    %v5135 = vshll.u32 %v5131, 16
    %v5136 = vshrl.u32 %v5131, 16
    %vm5137 = vc.u32 %v5129, %v5133
    %v5138 = vsel %vm5137, 1, 0
    %v5139 = vadd.s32 %v5129, %v5133
    %v5140 = vadd.s32 %v5132, %v5138
    %vm5141 = vc.u32 %v5139, %v5135
    %v5142 = vsel %vm5141, 1, 0
    %v5143 = vadd.s32 %v5139, %v5135
    %v5144 = vadd.s32 %v5140, %v5142
    %v5145 = vadd.s32 %v5144, %v5134
    %v5146 = vadd.s32 %v5145, %v5136
    %v5147 = vmul.u32 %v5102, %v5093
    %v5148 = vadd.s32 %v5124, %v5143
    %vm5149 = vc.u32 %v5124, %v5143
    %v5150 = vadd.s32 %v5146, 1
    %v5151 = vsel %vm5149, %v5150, %v5146
    %v5152 = vadd.s32 %v5147, %v5151
    %v5153 = vadd.s32 %v5152, 536870912
    %v5154 = vshrl.u32 %v5153, 30
    %v5155 = vshll.u32 %v5154, 30
    %v5156 = vsub.s32 %v5152, %v5155
    %vm5157 = vcmp.lt.s32.totalorder %v5156, 0
    %v5158 = vsub.s32 0, %v5156
    %v5159 = vsel %vm5157, %v5158, %v5156
    %v5160 = vclz %v5159
    %v5161 = vsub.s32 %v5160, 2
    %vm5162 = vcmp.gt.s32.totalorder 0, %v5161
    %v5163 = vsel %vm5162, 0, %v5161
    %v5164 = vsub.s32 32, %v5163
    %v5165 = vshll.u32 %v5156, %v5163
    %v5166 = vshrl.u32 %v5148, %v5164
    %v5167 = vor.u32 %v5165, %v5166
    %v5168 = vsub.s32 4294967266, %v5163
    %v5169 = vadd.s32 %v5168, 127
    %v5170 = vshll.u32 %v5169, 23
    %v5171 = vor.u32 4788187, %v5170
    %v5172 = vand.u32 2147483647, %v5171
    %v5174 = vcvt.s32.f32 %v5167
    %v5175 = vmul.f32 %v5174, %v5172
    %v5176 = vxor.u32 %v5175, 2147483648
    %v5177 = vsel %vm5056, %v5176, %v5175
    %v5178 = vsub.s32 4, %v5154
    %v5179 = vsel %vm5056, %v5178, %v5154
    %v5180 = vsel %vm5055, %v130, %v5177
    %v5181 = vsel %vm5055, 0, %v5179
    %v5182 = vmul.f32 %v5180, %v5180
    %v5183 = vmul.f32 %v5182, -0.001358992
    %v5184 = vadd.f32 %v5183, 0.041655596
    %v5185 = vmul.f32 %v5182, %v5184
    %v5186 = vadd.f32 %v5185, -0.4999988
    %v5187 = vmul.f32 %v5182, %v5186
    %v5188 = vadd.f32 1.0, %v5187
    %v5189 = vmul.f32 %v5180, %v5180
    %v5190 = vmul.f32 %v5189, -0.00019511016
    %v5191 = vadd.f32 %v5190, 0.008332121
    %v5192 = vmul.f32 %v5189, %v5191
    %v5193 = vadd.f32 %v5192, -0.16666654
    %v5194 = vmul.f32 %v5189, %v5193
    %v5195 = vadd.f32 %v5194, 1.0
    %v5196 = vmul.f32 %v5195, %v5180
    %vm5197 = vweird.f32 %v130
    %v5198 = vadd.s32 %v5181, 3
    %v5199 = vand.u32 %v5198, 3
    %vm5200 = vcmp.lt.s32.totalorder %v5199, 2
    %vm5201 = vcmp.eq.s32.totalorder %v5199, 0
    %v5202 = vxor.u32 %v5196, 2147483648
    %v5203 = vsel %vm5201, %v5188, %v5202
    %vm5204 = vcmp.eq.s32.totalorder %v5199, 2
    %v5205 = vxor.u32 %v5188, 2147483648
    %v5206 = vsel %vm5204, %v5205, %v5196
    %v5207 = vsel %vm5200, %v5203, %v5206
    %v5208 = vsel %vm5197, nan, %v5207
    %v5209 = vsel %vm233, %v2883, 0.0
    %v5210 = vsel %vm234, %v3038, 0.0
    %v5211 = vsel %vm235, %v3193, 0.0
    %v5212 = vsel %vm236, %v3348, 0.0
    %v5213 = vsel %vm237, %v3503, 0.0
    %v5214 = vsel %vm238, %v3658, 0.0
    %v5215 = vsel %vm239, %v3813, 0.0
    %v5216 = vsel %vm240, %v3968, 0.0
    %v5217 = vsel %vm241, %v4123, 0.0
    %v5218 = vsel %vm242, %v4278, 0.0
    %v5219 = vsel %vm243, %v4433, 0.0
    %v5220 = vsel %vm244, %v4588, 0.0
    %v5221 = vsel %vm245, %v4743, 0.0
    %v5222 = vsel %vm246, %v4898, 0.0
    %v5223 = vsel %vm247, %v5053, 0.0
    %v5224 = vsel %vm248, %v5208, 0.0
    %v5225 = vld [vmem:[#allocation2] sm:$0xff]
    %v5226 = vld [vmem:[#allocation2 + $0x8] sm:$0xff]
    %v5227 = vld [vmem:[#allocation2 + $0x10] sm:$0xff]
    %v5228 = vld [vmem:[#allocation2 + $0x18] sm:$0xff]
    %v5229 = vld [vmem:[#allocation2 + $0x20] sm:$0xff]
    %v5230 = vld [vmem:[#allocation2 + $0x28] sm:$0xff]
    %v5231 = vld [vmem:[#allocation2 + $0x30] sm:$0xff]
    %v5232 = vld [vmem:[#allocation2 + $0x38] sm:$0xff]
    %v5233 = vld [vmem:[#allocation2 + $0x40] sm:$0xff]
    %v5234 = vld [vmem:[#allocation2 + $0x48] sm:$0xff]
    %v5235 = vld [vmem:[#allocation2 + $0x50] sm:$0xff]
    %v5236 = vld [vmem:[#allocation2 + $0x58] sm:$0xff]
    %v5237 = vld [vmem:[#allocation2 + $0x60] sm:$0xff]
    %v5238 = vld [vmem:[#allocation2 + $0x68] sm:$0xff]
    %v5239 = vld [vmem:[#allocation2 + $0x70] sm:$0xff]
    %v5240 = vld [vmem:[#allocation2 + $0x78] sm:$0xff]
    %v5241 = vld [vmem:[#allocation2 + $0x80] sm:$0xff]
    %v5242 = vld [vmem:[#allocation2 + $0x88] sm:$0xff]
    %v5243 = vld [vmem:[#allocation2 + $0x90] sm:$0xff]
    %v5244 = vld [vmem:[#allocation2 + $0x98] sm:$0xff]
    %v5245 = vld [vmem:[#allocation2 + $0xa0] sm:$0xff]
    %v5246 = vld [vmem:[#allocation2 + $0xa8] sm:$0xff]
    %v5247 = vld [vmem:[#allocation2 + $0xb0] sm:$0xff]
    %v5248 = vld [vmem:[#allocation2 + $0xb8] sm:$0xff]
    %v5249 = vld [vmem:[#allocation2 + $0xc0] sm:$0xff]
    %v5250 = vld [vmem:[#allocation2 + $0xc8] sm:$0xff]
    %v5251 = vld [vmem:[#allocation2 + $0xd0] sm:$0xff]
    %v5252 = vld [vmem:[#allocation2 + $0xd8] sm:$0xff]
    %v5253 = vld [vmem:[#allocation2 + $0xe0] sm:$0xff]
    %v5254 = vld [vmem:[#allocation2 + $0xe8] sm:$0xff]
    %v5255 = vld [vmem:[#allocation2 + $0xf0] sm:$0xff]
    %v5256 = vld [vmem:[#allocation2 + $0xf8] sm:$0xff]
    %v5257 = vld [vmem:[#allocation5] sm:$0xff]
    %v5258 = vld [vmem:[#allocation5 + $0x8] sm:$0xff]
    %v5259 = vld [vmem:[#allocation5 + $0x10] sm:$0xff]
    %v5260 = vld [vmem:[#allocation5 + $0x18] sm:$0xff]
    %v5261 = vld [vmem:[#allocation5 + $0x20] sm:$0xff]
    %v5262 = vld [vmem:[#allocation5 + $0x28] sm:$0xff]
    %v5263 = vld [vmem:[#allocation5 + $0x30] sm:$0xff]
    %v5264 = vld [vmem:[#allocation5 + $0x38] sm:$0xff]
    %v5265 = vld [vmem:[#allocation5 + $0x40] sm:$0xff]
    %v5266 = vld [vmem:[#allocation5 + $0x48] sm:$0xff]
    %v5267 = vld [vmem:[#allocation5 + $0x50] sm:$0xff]
    %v5268 = vld [vmem:[#allocation5 + $0x58] sm:$0xff]
    %v5269 = vld [vmem:[#allocation5 + $0x60] sm:$0xff]
    %v5270 = vld [vmem:[#allocation5 + $0x68] sm:$0xff]
    %v5271 = vld [vmem:[#allocation5 + $0x70] sm:$0xff]
    %v5272 = vld [vmem:[#allocation5 + $0x78] sm:$0xff]
    %v5273 = vld [vmem:[#allocation5 + $0x80] sm:$0xff]
    %v5274 = vld [vmem:[#allocation5 + $0x88] sm:$0xff]
    %v5275 = vld [vmem:[#allocation5 + $0x90] sm:$0xff]
    %v5276 = vld [vmem:[#allocation5 + $0x98] sm:$0xff]
    %v5277 = vld [vmem:[#allocation5 + $0xa0] sm:$0xff]
    %v5278 = vld [vmem:[#allocation5 + $0xa8] sm:$0xff]
    %v5279 = vld [vmem:[#allocation5 + $0xb0] sm:$0xff]
    %v5280 = vld [vmem:[#allocation5 + $0xb8] sm:$0xff]
    %v5281 = vld [vmem:[#allocation5 + $0xc0] sm:$0xff]
    %v5282 = vld [vmem:[#allocation5 + $0xc8] sm:$0xff]
    %v5283 = vld [vmem:[#allocation5 + $0xd0] sm:$0xff]
    %v5284 = vld [vmem:[#allocation5 + $0xd8] sm:$0xff]
    %v5285 = vld [vmem:[#allocation5 + $0xe0] sm:$0xff]
    %v5286 = vld [vmem:[#allocation5 + $0xe8] sm:$0xff]
    %v5287 = vld [vmem:[#allocation5 + $0xf0] sm:$0xff]
    %v5288 = vld [vmem:[#allocation5 + $0xf8] sm:$0xff]
    %v5289 = vmul.f32 %v5225, %v2713
    %v5290 = vmul.f32 %v5226, %v2714
    %v5291 = vmul.f32 %v5227, %v2715
    %v5292 = vmul.f32 %v5228, %v2716
    %v5293 = vmul.f32 %v5229, %v2717
    %v5294 = vmul.f32 %v5230, %v2718
    %v5295 = vmul.f32 %v5231, %v2719
    %v5296 = vmul.f32 %v5232, %v2720
    %v5297 = vmul.f32 %v5233, %v2721
    %v5298 = vmul.f32 %v5234, %v2722
    %v5299 = vmul.f32 %v5235, %v2723
    %v5300 = vmul.f32 %v5236, %v2724
    %v5301 = vmul.f32 %v5237, %v2725
    %v5302 = vmul.f32 %v5238, %v2726
    %v5303 = vmul.f32 %v5239, %v2727
    %v5304 = vmul.f32 %v5240, %v2728
    %v5305 = vmul.f32 %v5241, %v2713
    %v5306 = vmul.f32 %v5242, %v2714
    %v5307 = vmul.f32 %v5243, %v2715
    %v5308 = vmul.f32 %v5244, %v2716
    %v5309 = vmul.f32 %v5245, %v2717
    %v5310 = vmul.f32 %v5246, %v2718
    %v5311 = vmul.f32 %v5247, %v2719
    %v5312 = vmul.f32 %v5248, %v2720
    %v5313 = vmul.f32 %v5249, %v2721
    %v5314 = vmul.f32 %v5250, %v2722
    %v5315 = vmul.f32 %v5251, %v2723
    %v5316 = vmul.f32 %v5252, %v2724
    %v5317 = vmul.f32 %v5253, %v2725
    %v5318 = vmul.f32 %v5254, %v2726
    %v5319 = vmul.f32 %v5255, %v2727
    %v5320 = vmul.f32 %v5256, %v2728
    %v5321 = vmul.f32 %v5257, %v5209
    %v5322 = vmul.f32 %v5258, %v5210
    %v5323 = vmul.f32 %v5259, %v5211
    %v5324 = vmul.f32 %v5260, %v5212
    %v5325 = vmul.f32 %v5261, %v5213
    %v5326 = vmul.f32 %v5262, %v5214
    %v5327 = vmul.f32 %v5263, %v5215
    %v5328 = vmul.f32 %v5264, %v5216
    %v5329 = vmul.f32 %v5265, %v5217
    %v5330 = vmul.f32 %v5266, %v5218
    %v5331 = vmul.f32 %v5267, %v5219
    %v5332 = vmul.f32 %v5268, %v5220
    %v5333 = vmul.f32 %v5269, %v5221
    %v5334 = vmul.f32 %v5270, %v5222
    %v5335 = vmul.f32 %v5271, %v5223
    %v5336 = vmul.f32 %v5272, %v5224
    %v5337 = vmul.f32 %v5273, %v5209
    %v5338 = vmul.f32 %v5274, %v5210
    %v5339 = vmul.f32 %v5275, %v5211
    %v5340 = vmul.f32 %v5276, %v5212
    %v5341 = vmul.f32 %v5277, %v5213
    %v5342 = vmul.f32 %v5278, %v5214
    %v5343 = vmul.f32 %v5279, %v5215
    %v5344 = vmul.f32 %v5280, %v5216
    %v5345 = vmul.f32 %v5281, %v5217
    %v5346 = vmul.f32 %v5282, %v5218
    %v5347 = vmul.f32 %v5283, %v5219
    %v5348 = vmul.f32 %v5284, %v5220
    %v5349 = vmul.f32 %v5285, %v5221
    %v5350 = vmul.f32 %v5286, %v5222
    %v5351 = vmul.f32 %v5287, %v5223
    %v5352 = vmul.f32 %v5288, %v5224
    %v5353 = vsub.f32 %v5289, %v5321
    %v5354 = vsub.f32 %v5290, %v5322
    %v5355 = vsub.f32 %v5291, %v5323
    %v5356 = vsub.f32 %v5292, %v5324
    %v5357 = vsub.f32 %v5293, %v5325
    %v5358 = vsub.f32 %v5294, %v5326
    %v5359 = vsub.f32 %v5295, %v5327
    %v5360 = vsub.f32 %v5296, %v5328
    %v5361 = vsub.f32 %v5297, %v5329
    %v5362 = vsub.f32 %v5298, %v5330
    %v5363 = vsub.f32 %v5299, %v5331
    %v5364 = vsub.f32 %v5300, %v5332
    %v5365 = vsub.f32 %v5301, %v5333
    %v5366 = vsub.f32 %v5302, %v5334
    %v5367 = vsub.f32 %v5303, %v5335
    %v5368 = vsub.f32 %v5304, %v5336
    %v5369 = vsub.f32 %v5305, %v5337
    %v5370 = vsub.f32 %v5306, %v5338
    %v5371 = vsub.f32 %v5307, %v5339
    %v5372 = vsub.f32 %v5308, %v5340
    %v5373 = vsub.f32 %v5309, %v5341
    %v5374 = vsub.f32 %v5310, %v5342
    %v5375 = vsub.f32 %v5311, %v5343
    %v5376 = vsub.f32 %v5312, %v5344
    %v5377 = vsub.f32 %v5313, %v5345
    %v5378 = vsub.f32 %v5314, %v5346
    %v5379 = vsub.f32 %v5315, %v5347
    %v5380 = vsub.f32 %v5316, %v5348
    %v5381 = vsub.f32 %v5317, %v5349
    %v5382 = vsub.f32 %v5318, %v5350
    %v5383 = vsub.f32 %v5319, %v5351
    %v5384 = vsub.f32 %v5320, %v5352
    %5385 = vst [vmem:[#allocation7] sm:$0xff] %v5353
    %5386 = vst [vmem:[#allocation7 + $0x8] sm:$0xff] %v5354
    %5387 = vst [vmem:[#allocation7 + $0x10] sm:$0xff] %v5355
    %5388 = vst [vmem:[#allocation7 + $0x18] sm:$0xff] %v5356
    %5389 = vst [vmem:[#allocation7 + $0x20] sm:$0xff] %v5357
    %5390 = vst [vmem:[#allocation7 + $0x28] sm:$0xff] %v5358
    %5391 = vst [vmem:[#allocation7 + $0x30] sm:$0xff] %v5359
    %5392 = vst [vmem:[#allocation7 + $0x38] sm:$0xff] %v5360
    %5393 = vst [vmem:[#allocation7 + $0x40] sm:$0xff] %v5361
    %5394 = vst [vmem:[#allocation7 + $0x48] sm:$0xff] %v5362
    %5395 = vst [vmem:[#allocation7 + $0x50] sm:$0xff] %v5363
    %5396 = vst [vmem:[#allocation7 + $0x58] sm:$0xff] %v5364
    %5397 = vst [vmem:[#allocation7 + $0x60] sm:$0xff] %v5365
    %5398 = vst [vmem:[#allocation7 + $0x68] sm:$0xff] %v5366
    %5399 = vst [vmem:[#allocation7 + $0x70] sm:$0xff] %v5367
    %5400 = vst [vmem:[#allocation7 + $0x78] sm:$0xff] %v5368
    %5401 = vst [vmem:[#allocation7 + $0x80] sm:$0xff] %v5369
    %5402 = vst [vmem:[#allocation7 + $0x88] sm:$0xff] %v5370
    %5403 = vst [vmem:[#allocation7 + $0x90] sm:$0xff] %v5371
    %5404 = vst [vmem:[#allocation7 + $0x98] sm:$0xff] %v5372
    %5405 = vst [vmem:[#allocation7 + $0xa0] sm:$0xff] %v5373
    %5406 = vst [vmem:[#allocation7 + $0xa8] sm:$0xff] %v5374
    %5407 = vst [vmem:[#allocation7 + $0xb0] sm:$0xff] %v5375
    %5408 = vst [vmem:[#allocation7 + $0xb8] sm:$0xff] %v5376
    %5409 = vst [vmem:[#allocation7 + $0xc0] sm:$0xff] %v5377
    %5410 = vst [vmem:[#allocation7 + $0xc8] sm:$0xff] %v5378
    %5411 = vst [vmem:[#allocation7 + $0xd0] sm:$0xff] %v5379
    %5412 = vst [vmem:[#allocation7 + $0xd8] sm:$0xff] %v5380
    %5413 = vst [vmem:[#allocation7 + $0xe0] sm:$0xff] %v5381
    %5414 = vst [vmem:[#allocation7 + $0xe8] sm:$0xff] %v5382
    %5415 = vst [vmem:[#allocation7 + $0xf0] sm:$0xff] %v5383
    %5416 = vst [vmem:[#allocation7 + $0xf8] sm:$0xff] %v5384
    %v5417 = vmul.f32 %v5225, %v5209
    %v5418 = vmul.f32 %v5226, %v5210
    %v5419 = vmul.f32 %v5227, %v5211
    %v5420 = vmul.f32 %v5228, %v5212
    %v5421 = vmul.f32 %v5229, %v5213
    %v5422 = vmul.f32 %v5230, %v5214
    %v5423 = vmul.f32 %v5231, %v5215
    %v5424 = vmul.f32 %v5232, %v5216
    %v5425 = vmul.f32 %v5233, %v5217
    %v5426 = vmul.f32 %v5234, %v5218
    %v5427 = vmul.f32 %v5235, %v5219
    %v5428 = vmul.f32 %v5236, %v5220
    %v5429 = vmul.f32 %v5237, %v5221
    %v5430 = vmul.f32 %v5238, %v5222
    %v5431 = vmul.f32 %v5239, %v5223
    %v5432 = vmul.f32 %v5240, %v5224
    %v5433 = vmul.f32 %v5241, %v5209
    %v5434 = vmul.f32 %v5242, %v5210
    %v5435 = vmul.f32 %v5243, %v5211
    %v5436 = vmul.f32 %v5244, %v5212
    %v5437 = vmul.f32 %v5245, %v5213
    %v5438 = vmul.f32 %v5246, %v5214
    %v5439 = vmul.f32 %v5247, %v5215
    %v5440 = vmul.f32 %v5248, %v5216
    %v5441 = vmul.f32 %v5249, %v5217
    %v5442 = vmul.f32 %v5250, %v5218
    %v5443 = vmul.f32 %v5251, %v5219
    %v5444 = vmul.f32 %v5252, %v5220
    %v5445 = vmul.f32 %v5253, %v5221
    %v5446 = vmul.f32 %v5254, %v5222
    %v5447 = vmul.f32 %v5255, %v5223
    %v5448 = vmul.f32 %v5256, %v5224
    %v5449 = vmul.f32 %v5257, %v2713
    %v5450 = vmul.f32 %v5258, %v2714
    %v5451 = vmul.f32 %v5259, %v2715
    %v5452 = vmul.f32 %v5260, %v2716
    %v5453 = vmul.f32 %v5261, %v2717
    %v5454 = vmul.f32 %v5262, %v2718
    %v5455 = vmul.f32 %v5263, %v2719
    %v5456 = vmul.f32 %v5264, %v2720
    %v5457 = vmul.f32 %v5265, %v2721
    %v5458 = vmul.f32 %v5266, %v2722
    %v5459 = vmul.f32 %v5267, %v2723
    %v5460 = vmul.f32 %v5268, %v2724
    %v5461 = vmul.f32 %v5269, %v2725
    %v5462 = vmul.f32 %v5270, %v2726
    %v5463 = vmul.f32 %v5271, %v2727
    %v5464 = vmul.f32 %v5272, %v2728
    %v5465 = vmul.f32 %v5273, %v2713
    %v5466 = vmul.f32 %v5274, %v2714
    %v5467 = vmul.f32 %v5275, %v2715
    %v5468 = vmul.f32 %v5276, %v2716
    %v5469 = vmul.f32 %v5277, %v2717
    %v5470 = vmul.f32 %v5278, %v2718
    %v5471 = vmul.f32 %v5279, %v2719
    %v5472 = vmul.f32 %v5280, %v2720
    %v5473 = vmul.f32 %v5281, %v2721
    %v5474 = vmul.f32 %v5282, %v2722
    %v5475 = vmul.f32 %v5283, %v2723
    %v5476 = vmul.f32 %v5284, %v2724
    %v5477 = vmul.f32 %v5285, %v2725
    %v5478 = vmul.f32 %v5286, %v2726
    %v5479 = vmul.f32 %v5287, %v2727
    %v5480 = vmul.f32 %v5288, %v2728
    %v5481 = vadd.f32 %v5417, %v5449
    %v5482 = vadd.f32 %v5418, %v5450
    %v5483 = vadd.f32 %v5419, %v5451
    %v5484 = vadd.f32 %v5420, %v5452
    %v5485 = vadd.f32 %v5421, %v5453
    %v5486 = vadd.f32 %v5422, %v5454
    %v5487 = vadd.f32 %v5423, %v5455
    %v5488 = vadd.f32 %v5424, %v5456
    %v5489 = vadd.f32 %v5425, %v5457
    %v5490 = vadd.f32 %v5426, %v5458
    %v5491 = vadd.f32 %v5427, %v5459
    %v5492 = vadd.f32 %v5428, %v5460
    %v5493 = vadd.f32 %v5429, %v5461
    %v5494 = vadd.f32 %v5430, %v5462
    %v5495 = vadd.f32 %v5431, %v5463
    %v5496 = vadd.f32 %v5432, %v5464
    %v5497 = vadd.f32 %v5433, %v5465
    %v5498 = vadd.f32 %v5434, %v5466
    %v5499 = vadd.f32 %v5435, %v5467
    %v5500 = vadd.f32 %v5436, %v5468
    %v5501 = vadd.f32 %v5437, %v5469
    %v5502 = vadd.f32 %v5438, %v5470
    %v5503 = vadd.f32 %v5439, %v5471
    %v5504 = vadd.f32 %v5440, %v5472
    %v5505 = vadd.f32 %v5441, %v5473
    %v5506 = vadd.f32 %v5442, %v5474
    %v5507 = vadd.f32 %v5443, %v5475
    %v5508 = vadd.f32 %v5444, %v5476
    %v5509 = vadd.f32 %v5445, %v5477
    %v5510 = vadd.f32 %v5446, %v5478
    %v5511 = vadd.f32 %v5447, %v5479
    %v5512 = vadd.f32 %v5448, %v5480
    %5513 = vst [vmem:[#allocation8] sm:$0xff] %v5481
    %5514 = vst [vmem:[#allocation8 + $0x8] sm:$0xff] %v5482
    %5515 = vst [vmem:[#allocation8 + $0x10] sm:$0xff] %v5483
    %5516 = vst [vmem:[#allocation8 + $0x18] sm:$0xff] %v5484
    %5517 = vst [vmem:[#allocation8 + $0x20] sm:$0xff] %v5485
    %5518 = vst [vmem:[#allocation8 + $0x28] sm:$0xff] %v5486
    %5519 = vst [vmem:[#allocation8 + $0x30] sm:$0xff] %v5487
    %5520 = vst [vmem:[#allocation8 + $0x38] sm:$0xff] %v5488
    %5521 = vst [vmem:[#allocation8 + $0x40] sm:$0xff] %v5489
    %5522 = vst [vmem:[#allocation8 + $0x48] sm:$0xff] %v5490
    %5523 = vst [vmem:[#allocation8 + $0x50] sm:$0xff] %v5491
    %5524 = vst [vmem:[#allocation8 + $0x58] sm:$0xff] %v5492
    %5525 = vst [vmem:[#allocation8 + $0x60] sm:$0xff] %v5493
    %5526 = vst [vmem:[#allocation8 + $0x68] sm:$0xff] %v5494
    %5527 = vst [vmem:[#allocation8 + $0x70] sm:$0xff] %v5495
    %5528 = vst [vmem:[#allocation8 + $0x78] sm:$0xff] %v5496
    %5529 = vst [vmem:[#allocation8 + $0x80] sm:$0xff] %v5497
    %5530 = vst [vmem:[#allocation8 + $0x88] sm:$0xff] %v5498
    %5531 = vst [vmem:[#allocation8 + $0x90] sm:$0xff] %v5499
    %5532 = vst [vmem:[#allocation8 + $0x98] sm:$0xff] %v5500
    %5533 = vst [vmem:[#allocation8 + $0xa0] sm:$0xff] %v5501
    %5534 = vst [vmem:[#allocation8 + $0xa8] sm:$0xff] %v5502
    %5535 = vst [vmem:[#allocation8 + $0xb0] sm:$0xff] %v5503
    %5536 = vst [vmem:[#allocation8 + $0xb8] sm:$0xff] %v5504
    %5537 = vst [vmem:[#allocation8 + $0xc0] sm:$0xff] %v5505
    %5538 = vst [vmem:[#allocation8 + $0xc8] sm:$0xff] %v5506
    %5539 = vst [vmem:[#allocation8 + $0xd0] sm:$0xff] %v5507
    %5540 = vst [vmem:[#allocation8 + $0xd8] sm:$0xff] %v5508
    %5541 = vst [vmem:[#allocation8 + $0xe0] sm:$0xff] %v5509
    %5542 = vst [vmem:[#allocation8 + $0xe8] sm:$0xff] %v5510
    %5543 = vst [vmem:[#allocation8 + $0xf0] sm:$0xff] %v5511
    %5544 = vst [vmem:[#allocation8 + $0xf8] sm:$0xff] %v5512
    // Predicated region
    $region22: #{phase_mask_planar.1} parent=1 // pred_check
      _
    $region23: #{phase_mask_planar.1} parent=1 // pred_check_branch
      %5546 = sbr.rel (0) target = $region25
    $region24: #{phase_mask_planar.1} parent=1 // pred_region
      %5548 = vsyncadd [#allocation4], 0
      %s5549 = sshll.u32 [#allocation7], 4
      %s5550 = int_to_ptr.vmem [resolvable:$true] %s5549
      %s5551 = sshll.u32 %s3, 4
      %s5552 = int_to_ptr.hbm [resolvable:$true] %s5551
      %5557 = dma.vmem_to_hbm [thread:$0]  %s5550, 4096, %s5552, [#allocation4], 128, 128, 8
    $region25: #{phase_mask_planar.1} parent=1 // pred_fallthru
      _
    // Predicated region
    $region26: #{phase_mask_planar.1} parent=1 // pred_check
      _
    $region27: #{phase_mask_planar.1} parent=1 // pred_check_branch
      %5559 = sbr.rel (0) target = $region29
    $region28: #{phase_mask_planar.1} parent=1 // pred_region
      %5561 = vsyncadd [#allocation9], 0
      %s5562 = sshll.u32 [#allocation8], 4
      %s5563 = int_to_ptr.vmem [resolvable:$true] %s5562
      %s5564 = sshll.u32 %s4, 4
      %s5565 = int_to_ptr.hbm [resolvable:$true] %s5564
      %5570 = dma.vmem_to_hbm [thread:$0]  %s5563, 4096, %s5565, [#allocation9], 128, 128, 8
    $region29: #{phase_mask_planar.1} parent=1 // pred_fallthru
      _
    // Predicated region
    $region30: #{phase_mask_planar.1} parent=1 // pred_check
      _
    $region31: #{phase_mask_planar.1} parent=1 // pred_check_branch
      %5572 = sbr.rel (0) target = $region33
    $region32: #{phase_mask_planar.1} parent=1 // pred_region
      %5574 = dma.done [#allocation4], 4096
    $region33: #{phase_mask_planar.1} parent=1 // pred_fallthru
      _
    // Predicated region
    $region34: #{phase_mask_planar.1} parent=1 // pred_check
      _
    $region35: #{phase_mask_planar.1} parent=1 // pred_check_branch
      %5576 = sbr.rel (0) target = $region37
    $region36: #{phase_mask_planar.1} parent=1 // pred_region
      %5578 = dma.done [#allocation9], 4096
    $region37: #{phase_mask_planar.1} parent=1 // pred_fallthru
      _
    %5579 = vsyncpa [#allocation3], 1
    %5580 = vsyncpa [#allocation6], 1
    %5581 = vsyncpa [#allocation4], 1
    %5582 = vsyncpa [#allocation9], 1

</llo_original>
